<compile_context>
chip_gen: v6e
topology: v6e:2x2x1
jax: 0.10.0
libtpu: 0.0.40
codegen_flags: <defaults>
</compile_context>

<pallas_src>
import numpy as np
import jax
import jax.numpy as jnp
from jax.experimental import pallas as pl
from jax.experimental.pallas import tpu as pltpu

HIDDEN = 128                 # self.hidden in the PyTorch module
N_BRANCH = 5                 # s, b, e, a, v
HEAD_DIMS = (5, 5, 3, 1, 1)  # slope, block, env, angle, block_v head widths
HEAD_PAD = 8                 # each head padded to 8 output lanes in the fused dot
OUT_W = 32                   # packed lane-dense output width (19 useful columns)
N_PACKED = 19                # 1+1+1+5+5+3+1+1+1 useful output columns


def _swish(x):
    # x * sigmoid(x) using a single EUP transcendental (tanh) per element.
    return x * (0.5 * jnp.tanh(0.5 * x) + 0.5)


def _softmax_lastdim(x):
    m = jnp.max(x, axis=-1, keepdims=True)
    e = jnp.exp(x - m)
    return e * pl.reciprocal(jnp.sum(e, axis=-1, keepdims=True), approx=True)


def force_decoder_kernel(
    # inputs
    z_ref,                                   # (TB, L) f32
    w1_ref, b1_ref,                          # fused layer-1: (L, 5H) bf16, (1, 5H) f32
    w2_ref, b2_ref, w3_ref, b3_ref,          # stacked layers 2/3: (5,H,H) bf16, (5,H) f32
    wh_ref, bh_ref,                          # block-diag heads: (5H, 40) bf16, (1, 40) f32
    fric_ref, dens_ref, grav_ref,            # learned params (1,5),(1,5),(1,3) f32
    # output
    out_ref,                                 # (TB, OUT_W) f32 packed slab
    # scratch
    h3_ref,                                  # (TB, 5H) bf16: per-branch layer-3 activations
):
    f32 = jnp.float32
    bf16 = jnp.bfloat16
    H = HIDDEN

    z = z_ref[...].astype(bf16)                                        # (TB, L)

    # Fused layer-1 for all five branches: one lane-wide matmul.
    h1 = _swish(jnp.dot(z, w1_ref[...], preferred_element_type=f32)
                + b1_ref[...])                                          # (TB, 5H)

    # Per-branch layers 2 & 3 (kept 128x128 -> good on v5e's native MXU),
    # each result written into its 128-lane-aligned slot of the bf16 scratch.
    for i in range(N_BRANCH):
        h = _swish(jnp.dot(h1[:, i * H:(i + 1) * H].astype(bf16), w2_ref[i],
                           preferred_element_type=f32) + b2_ref[i])
        h = _swish(jnp.dot(h.astype(bf16), w3_ref[i],
                           preferred_element_type=f32) + b3_ref[i])
        h3_ref[:, i * H:(i + 1) * H] = h.astype(bf16)

    # One fused head projection against the block-diagonal stacked head weight:
    # branch i's (padded) head occupies lanes [8i, 8i+8) of the result.
    heads = jnp.dot(h3_ref[...], wh_ref[...],
                    preferred_element_type=f32) + bh_ref[...]           # (TB, 40)

    slope_material = _softmax_lastdim(heads[:, 0:5])                    # (TB, 5)
    block_material = _softmax_lastdim(heads[:, 8:13])                   # (TB, 5)
    env            = _softmax_lastdim(heads[:, 16:19])                  # (TB, 3)
    angle          = heads[:, 24:25]                                    # (TB, 1)
    block_v        = heads[:, 32:33]                                    # (TB, 1)

    friction_coeff = jnp.sum(slope_material * fric_ref[...], axis=-1, keepdims=True)
    density        = jnp.sum(block_material * dens_ref[...], axis=-1, keepdims=True)
    gravity        = jnp.sum(env * grav_ref[...], axis=-1, keepdims=True)

    force = (jnp.sin(angle) - friction_coeff * jnp.cos(angle)) * gravity * block_v * density

    # Epilogue: zero-fill the output block, then direct static slice stores
    # (no 10-way lane concatenate, no materialized zero temp).
    out_ref[...] = jnp.zeros_like(out_ref)
    out_ref[:, 0:1]   = force
    out_ref[:, 1:2]   = angle
    out_ref[:, 2:3]   = block_v
    out_ref[:, 3:8]   = slope_material
    out_ref[:, 8:13]  = block_material
    out_ref[:, 13:16] = env
    out_ref[:, 16:17] = friction_coeff
    out_ref[:, 17:18] = density
    out_ref[:, 18:19] = gravity


def _round_up(x, m):
    return ((x + m - 1) // m) * m


def force_decoder(z, params, tile_b=None):
    """z: (B, n_latents) f32.  params: tuple of 11 arrays (see init_params)."""
    B, L = z.shape
    H = HIDDEN
    if tile_b is None:
        if B <= 8:
            tile_b = B                       # single tile, block == full batch dim
        else:
            # >= 2 grid steps so the "parallel" axis shards across both v7x TCs;
            # tiles up to 2048 rows amortize per-step overhead (footprint << 32 MiB).
            tile_b = min(2048, _round_up(pl.cdiv(B, 2), 8))
    TB = tile_b
    grid = (pl.cdiv(B, TB),)

    (W1c, B1c, W2s, B2s, W3s, B3s, WHbd, BHbd, fric, dens, grav) = params

    def const_spec(shape):
        nd = len(shape)
        return pl.BlockSpec(shape, lambda i, _nd=nd: (0,) * _nd)

    in_specs = [
        pl.BlockSpec((TB, L), lambda i: (i, 0)),       # z: batch-tiled
        const_spec(W1c.shape), const_spec(B1c.shape),  # weights stay resident
        const_spec(W2s.shape), const_spec(B2s.shape),
        const_spec(W3s.shape), const_spec(B3s.shape),
        const_spec(WHbd.shape), const_spec(BHbd.shape),
        const_spec(fric.shape), const_spec(dens.shape), const_spec(grav.shape),
    ]
    out_spec = pl.BlockSpec((TB, OUT_W), lambda i: (i, 0))

    # Advisory cost estimate (per full call).
    flops = B * (2 * L * (N_BRANCH * H)
                 + N_BRANCH * 2 * (2 * H * H)
                 + 2 * (N_BRANCH * H) * (N_BRANCH * HEAD_PAD))
    transcendentals = B * (3 * N_BRANCH * H + 32)   # swish tanh + tiny softmax/sin/cos
    bytes_accessed = int(z.size * 4 + B * OUT_W * 4
                         + sum(int(np.prod(p.shape)) * p.dtype.itemsize for p in params))

    packed = pl.pallas_call(
        force_decoder_kernel,
        out_shape=jax.ShapeDtypeStruct((B, OUT_W), jnp.float32),
        grid=grid,
        in_specs=in_specs,
        out_specs=out_spec,
        scratch_shapes=[pltpu.VMEM((TB, N_BRANCH * H), jnp.bfloat16)],
        compiler_params=pltpu.CompilerParams(
            dimension_semantics=("parallel",),
            vmem_limit_bytes=32 * 1024 * 1024),
        cost_estimate=pl.CostEstimate(
            flops=flops, transcendentals=transcendentals,
            bytes_accessed=bytes_accessed),
    )(z, *params)

    force          = packed[:, 0:1]
    angle          = packed[:, 1:2]
    block_v        = packed[:, 2:3]
    slope_material = packed[:, 3:8]
    block_material = packed[:, 8:13]
    env            = packed[:, 13:16]
    friction_coeff = packed[:, 16:17]
    density        = packed[:, 17:18]
    gravity        = packed[:, 18:19]
    return (force, angle, block_v, slope_material, block_material, env,
            friction_coeff, density, gravity)


def init_params(key, n_latents):
    """Deterministic synthetic parameters matching the PyTorch module's shapes,
    packed for the kernel (fused layer-1, stacked layers 2/3, block-diag heads)."""
    H = HIDDEN
    keys = jax.random.split(key, 16)

    def lin(k, fan_in, fan_out):
        # uniform(-1/sqrt(fan_in), 1/sqrt(fan_in)) like torch.nn.Linear default;
        # stored as (in, out).
        bound = float(1.0 / np.sqrt(fan_in))
        kw, kb = jax.random.split(k)
        w = jax.random.uniform(kw, (fan_in, fan_out), jnp.float32, -bound, bound)
        b = jax.random.uniform(kb, (fan_out,), jnp.float32, -bound, bound)
        return w, b

    # 5 branches (s, b, e, a, v), 3 layers each.
    w1s, b1s, w2s, b2s, w3s, b3s = [], [], [], [], [], []
    for i in range(N_BRANCH):
        k1, k2, k3 = jax.random.split(keys[i], 3)
        w1, b1 = lin(k1, n_latents, H)
        w2, b2 = lin(k2, H, H)
        w3, b3 = lin(k3, H, H)
        w1s.append(w1); b1s.append(b1)
        w2s.append(w2); b2s.append(b2)
        w3s.append(w3); b3s.append(b3)

    W1c = jnp.concatenate(w1s, axis=1).astype(jnp.bfloat16)   # (L, 5H)
    B1c = jnp.concatenate(b1s)[None, :]                       # (1, 5H) f32
    W2s = jnp.stack(w2s).astype(jnp.bfloat16)                 # (5, H, H)
    B2s = jnp.stack(b2s)                                      # (5, H) f32
    W3s = jnp.stack(w3s).astype(jnp.bfloat16)                 # (5, H, H)
    B3s = jnp.stack(b3s)                                      # (5, H) f32

    # Heads stacked block-diagonally: branch i occupies rows [iH,(i+1)H) and
    # lanes [8i, 8i+d) (padded to 8 lanes per branch).
    WHbd = jnp.zeros((N_BRANCH * H, N_BRANCH * HEAD_PAD), jnp.float32)
    BHbd = jnp.zeros((1, N_BRANCH * HEAD_PAD), jnp.float32)
    for i, (k, d) in enumerate(zip(keys[5:10], HEAD_DIMS)):
        w, b = lin(k, H, d)
        WHbd = WHbd.at[i * H:(i + 1) * H, i * HEAD_PAD:i * HEAD_PAD + d].set(w)
        BHbd = BHbd.at[0, i * HEAD_PAD:i * HEAD_PAD + d].set(b)
    WHbd = WHbd.astype(jnp.bfloat16)                          # (5H, 40)

    friction_coeff = jnp.full((1, 5), 0.5, jnp.float32)
    density = jnp.full((1, 5), 0.5, jnp.float32)
    gravity = jnp.full((1, 3), 0.5, jnp.float32)

    return (W1c, B1c, W2s, B2s, W3s, B3s, WHbd, BHbd,
            friction_coeff, density, gravity)


def force_decoder_ref(z, params):
    """Pure-JAX reference (mirrors the PyTorch forward, with the same bf16
    weight storage / bf16 operand casts as the kernel for a tight comparison)."""
    (W1c, B1c, W2s, B2s, W3s, B3s, WHbd, BHbd, fric, dens_p, grav_p) = params
    f32, bf16 = jnp.float32, jnp.bfloat16
    H = HIDDEN

    def swish(x):
        return x * jax.nn.sigmoid(x)

    def dot(a, w):
        return jnp.dot(a.astype(bf16), w, preferred_element_type=f32)

    h1 = swish(dot(z, W1c) + B1c)
    h3s = []
    for i in range(N_BRANCH):
        h = swish(dot(h1[:, i * H:(i + 1) * H], W2s[i]) + B2s[i])
        h = swish(dot(h, W3s[i]) + B3s[i])
        h3s.append(h.astype(bf16))
    h3_all = jnp.concatenate(h3s, axis=-1)                      # (B, 5H)
    heads = jnp.dot(h3_all, WHbd, preferred_element_type=f32) + BHbd

    slope = jax.nn.softmax(heads[:, 0:5], axis=-1)
    block = jax.nn.softmax(heads[:, 8:13], axis=-1)
    env = jax.nn.softmax(heads[:, 16:19], axis=-1)
    angle = heads[:, 24:25]
    block_v = heads[:, 32:33]
    fcoef = jnp.sum(slope * fric, -1, keepdims=True)
    density = jnp.sum(block * dens_p, -1, keepdims=True)
    gravity = jnp.sum(env * grav_p, -1, keepdims=True)
    force = (jnp.sin(angle) - fcoef * jnp.cos(angle)) * gravity * block_v * density
    return force, angle, block_v, slope, block, env, fcoef, density, gravity


if __name__ == "__main__":
    B = 16          # batch (small demo; default heuristic gives tile_b=8 -> 2-step grid)
    n_latents = 32  # latent dimension

    key = jax.random.PRNGKey(0)
    k_z, k_p = jax.random.split(key)
    z = jax.random.normal(k_z, (B, n_latents), jnp.float32)
    params = init_params(k_p, n_latents)

    outs = force_decoder(z, params)
    outs = jax.block_until_ready(outs)

    refs = force_decoder_ref(z, params)
    for o, r in zip(outs, refs):
        np.testing.assert_allclose(np.asarray(o), np.asarray(r), rtol=2e-2, atol=2e-2)

    print("KERNEL_OK")
</pallas_src>

<mosaic_0001>
module attributes {stable_mosaic.version = 11 : i64} {
  func.func @force_decoder_kernel(%arg0: i32, %arg1: memref<8x32xf32, #tpu.memory_space<vmem>>, %arg2: memref<32x640xbf16, #tpu.memory_space<vmem>>, %arg3: memref<1x640xf32, #tpu.memory_space<vmem>>, %arg4: memref<5x128x128xbf16, #tpu.memory_space<vmem>>, %arg5: memref<5x128xf32, #tpu.memory_space<vmem>>, %arg6: memref<5x128x128xbf16, #tpu.memory_space<vmem>>, %arg7: memref<5x128xf32, #tpu.memory_space<vmem>>, %arg8: memref<640x40xbf16, #tpu.memory_space<vmem>>, %arg9: memref<1x40xf32, #tpu.memory_space<vmem>>, %arg10: memref<1x5xf32, #tpu.memory_space<vmem>>, %arg11: memref<1x5xf32, #tpu.memory_space<vmem>>, %arg12: memref<1x3xf32, #tpu.memory_space<vmem>>, %arg13: memref<8x32xf32, #tpu.memory_space<vmem>>, %arg14: memref<8x640xbf16, #tpu.memory_space<vmem>>) attributes {dimension_semantics = [#tpu.dimension_semantics<parallel>], iteration_bounds = array<i64: 2>, scalar_prefetch = 0 : i64, scratch_operands = 1 : i64, tpu.core_type = #tpu.core_type<tc>, window_params = [{transform_indices = @transform_0, window_bounds = array<i64: 8, 32>}, {pipeline_mode = #tpu.pipeline_mode<synchronous>, transform_indices = @transform_1, window_bounds = array<i64: 32, 640>}, {pipeline_mode = #tpu.pipeline_mode<synchronous>, transform_indices = @transform_2, window_bounds = array<i64: 1, 640>}, {pipeline_mode = #tpu.pipeline_mode<synchronous>, transform_indices = @transform_3, window_bounds = array<i64: 5, 128, 128>}, {pipeline_mode = #tpu.pipeline_mode<synchronous>, transform_indices = @transform_4, window_bounds = array<i64: 5, 128>}, {pipeline_mode = #tpu.pipeline_mode<synchronous>, transform_indices = @transform_5, window_bounds = array<i64: 5, 128, 128>}, {pipeline_mode = #tpu.pipeline_mode<synchronous>, transform_indices = @transform_6, window_bounds = array<i64: 5, 128>}, {pipeline_mode = #tpu.pipeline_mode<synchronous>, transform_indices = @transform_7, window_bounds = array<i64: 640, 40>}, {pipeline_mode = #tpu.pipeline_mode<synchronous>, transform_indices = @transform_8, window_bounds = array<i64: 1, 40>}, {pipeline_mode = #tpu.pipeline_mode<synchronous>, transform_indices = @transform_9, window_bounds = array<i64: 1, 5>}, {pipeline_mode = #tpu.pipeline_mode<synchronous>, transform_indices = @transform_10, window_bounds = array<i64: 1, 5>}, {pipeline_mode = #tpu.pipeline_mode<synchronous>, transform_indices = @transform_11, window_bounds = array<i64: 1, 3>}, {transform_indices = @transform_12, window_bounds = array<i64: 8, 32>}]} {
    %c0 = arith.constant 0 : index
    %c0_0 = arith.constant 0 : index
    %0 = vector.load %arg1[%c0, %c0_0] : memref<8x32xf32, #tpu.memory_space<vmem>>, vector<8x32xf32>
    %1 = arith.truncf %0 : vector<8x32xf32> to vector<8x32xbf16>
    %c0_1 = arith.constant 0 : index
    %c0_2 = arith.constant 0 : index
    %2 = vector.load %arg2[%c0_1, %c0_2] : memref<32x640xbf16, #tpu.memory_space<vmem>>, vector<32x640xbf16>
    %cst = arith.constant dense<0.000000e+00> : vector<8x640xf32>
    %3 = tpu.matmul %1, %2, %cst {dimension_numbers = #tpu.dot_dimension_numbers<[1], [0], [0], [1], [0, 0, 1, 1], [], []>} : vector<8x32xbf16>, vector<32x640xbf16>, vector<8x640xf32> -> vector<8x640xf32>
    %c0_3 = arith.constant 0 : index
    %c0_4 = arith.constant 0 : index
    %4 = vector.load %arg3[%c0_3, %c0_4] : memref<1x640xf32, #tpu.memory_space<vmem>>, vector<1x640xf32>
    %5 = vector.broadcast %4 : vector<1x640xf32> to vector<8x640xf32>
    %6 = arith.addf %3, %5 : vector<8x640xf32>
    %cst_5 = arith.constant 5.000000e-01 : f32
    %7 = vector.broadcast %cst_5 : f32 to vector<8x640xf32>
    %8 = arith.mulf %7, %6 : vector<8x640xf32>
    %9 = math.tanh %8 : vector<8x640xf32>
    %cst_6 = arith.constant 5.000000e-01 : f32
    %10 = vector.broadcast %cst_6 : f32 to vector<8x640xf32>
    %11 = arith.mulf %10, %9 : vector<8x640xf32>
    %cst_7 = arith.constant 5.000000e-01 : f32
    %12 = vector.broadcast %cst_7 : f32 to vector<8x640xf32>
    %13 = arith.addf %11, %12 : vector<8x640xf32>
    %14 = arith.mulf %6, %13 : vector<8x640xf32>
    %15 = vector.extract_strided_slice %14 {offsets = [0, 0], sizes = [8, 128], strides = [1, 1]} : vector<8x640xf32> to vector<8x128xf32>
    %16 = arith.truncf %15 : vector<8x128xf32> to vector<8x128xbf16>
    %c0_8 = arith.constant 0 : index
    %c0_9 = arith.constant 0 : index
    %c0_10 = arith.constant 0 : index
    %17 = vector.load %arg4[%c0_8, %c0_9, %c0_10] : memref<5x128x128xbf16, #tpu.memory_space<vmem>>, vector<1x128x128xbf16>
    %18 = vector.shape_cast %17 : vector<1x128x128xbf16> to vector<128x128xbf16>
    %cst_11 = arith.constant dense<0.000000e+00> : vector<8x128xf32>
    %19 = tpu.matmul %16, %18, %cst_11 {dimension_numbers = #tpu.dot_dimension_numbers<[1], [0], [0], [1], [0, 0, 1, 1], [], []>} : vector<8x128xbf16>, vector<128x128xbf16>, vector<8x128xf32> -> vector<8x128xf32>
    %c0_12 = arith.constant 0 : index
    %c0_13 = arith.constant 0 : index
    %20 = vector.load %arg5[%c0_12, %c0_13] : memref<5x128xf32, #tpu.memory_space<vmem>>, vector<1x128xf32>
    %21 = vector.shape_cast %20 : vector<1x128xf32> to vector<128xf32>
    %22 = vector.shape_cast %21 : vector<128xf32> to vector<1x128xf32>
    %23 = vector.broadcast %22 : vector<1x128xf32> to vector<8x128xf32>
    %24 = arith.addf %19, %23 : vector<8x128xf32>
    %cst_14 = arith.constant 5.000000e-01 : f32
    %25 = vector.broadcast %cst_14 : f32 to vector<8x128xf32>
    %26 = arith.mulf %25, %24 : vector<8x128xf32>
    %27 = math.tanh %26 : vector<8x128xf32>
    %cst_15 = arith.constant 5.000000e-01 : f32
    %28 = vector.broadcast %cst_15 : f32 to vector<8x128xf32>
    %29 = arith.mulf %28, %27 : vector<8x128xf32>
    %cst_16 = arith.constant 5.000000e-01 : f32
    %30 = vector.broadcast %cst_16 : f32 to vector<8x128xf32>
    %31 = arith.addf %29, %30 : vector<8x128xf32>
    %32 = arith.mulf %24, %31 : vector<8x128xf32>
    %33 = arith.truncf %32 : vector<8x128xf32> to vector<8x128xbf16>
    %c0_17 = arith.constant 0 : index
    %c0_18 = arith.constant 0 : index
    %c0_19 = arith.constant 0 : index
    %34 = vector.load %arg6[%c0_17, %c0_18, %c0_19] : memref<5x128x128xbf16, #tpu.memory_space<vmem>>, vector<1x128x128xbf16>
    %35 = vector.shape_cast %34 : vector<1x128x128xbf16> to vector<128x128xbf16>
    %cst_20 = arith.constant dense<0.000000e+00> : vector<8x128xf32>
    %36 = tpu.matmul %33, %35, %cst_20 {dimension_numbers = #tpu.dot_dimension_numbers<[1], [0], [0], [1], [0, 0, 1, 1], [], []>} : vector<8x128xbf16>, vector<128x128xbf16>, vector<8x128xf32> -> vector<8x128xf32>
    %c0_21 = arith.constant 0 : index
    %c0_22 = arith.constant 0 : index
    %37 = vector.load %arg7[%c0_21, %c0_22] : memref<5x128xf32, #tpu.memory_space<vmem>>, vector<1x128xf32>
    %38 = vector.shape_cast %37 : vector<1x128xf32> to vector<128xf32>
    %39 = vector.shape_cast %38 : vector<128xf32> to vector<1x128xf32>
    %40 = vector.broadcast %39 : vector<1x128xf32> to vector<8x128xf32>
    %41 = arith.addf %36, %40 : vector<8x128xf32>
    %cst_23 = arith.constant 5.000000e-01 : f32
    %42 = vector.broadcast %cst_23 : f32 to vector<8x128xf32>
    %43 = arith.mulf %42, %41 : vector<8x128xf32>
    %44 = math.tanh %43 : vector<8x128xf32>
    %cst_24 = arith.constant 5.000000e-01 : f32
    %45 = vector.broadcast %cst_24 : f32 to vector<8x128xf32>
    %46 = arith.mulf %45, %44 : vector<8x128xf32>
    %cst_25 = arith.constant 5.000000e-01 : f32
    %47 = vector.broadcast %cst_25 : f32 to vector<8x128xf32>
    %48 = arith.addf %46, %47 : vector<8x128xf32>
    %49 = arith.mulf %41, %48 : vector<8x128xf32>
    %50 = arith.truncf %49 : vector<8x128xf32> to vector<8x128xbf16>
    %c0_26 = arith.constant 0 : index
    %c0_27 = arith.constant 0 : index
    %51 = vector.load %arg14[%c0_26, %c0_27] : memref<8x640xbf16, #tpu.memory_space<vmem>>, vector<8x128xbf16>
    tpu.vector_store %arg14[%c0_26, %c0_27], %50 {strides = array<i32>} : memref<8x640xbf16, #tpu.memory_space<vmem>>, vector<8x128xbf16>,
    %52 = vector.extract_strided_slice %14 {offsets = [0, 128], sizes = [8, 128], strides = [1, 1]} : vector<8x640xf32> to vector<8x128xf32>
    %53 = arith.truncf %52 : vector<8x128xf32> to vector<8x128xbf16>
    %c1 = arith.constant 1 : index
    %c0_28 = arith.constant 0 : index
    %c0_29 = arith.constant 0 : index
    %54 = vector.load %arg4[%c1, %c0_28, %c0_29] : memref<5x128x128xbf16, #tpu.memory_space<vmem>>, vector<1x128x128xbf16>
    %55 = vector.shape_cast %54 : vector<1x128x128xbf16> to vector<128x128xbf16>
    %cst_30 = arith.constant dense<0.000000e+00> : vector<8x128xf32>
    %56 = tpu.matmul %53, %55, %cst_30 {dimension_numbers = #tpu.dot_dimension_numbers<[1], [0], [0], [1], [0, 0, 1, 1], [], []>} : vector<8x128xbf16>, vector<128x128xbf16>, vector<8x128xf32> -> vector<8x128xf32>
    %c1_31 = arith.constant 1 : index
    %c0_32 = arith.constant 0 : index
    %57 = vector.load %arg5[%c1_31, %c0_32] : memref<5x128xf32, #tpu.memory_space<vmem>>, vector<1x128xf32>
    %58 = vector.shape_cast %57 : vector<1x128xf32> to vector<128xf32>
    %59 = vector.shape_cast %58 : vector<128xf32> to vector<1x128xf32>
    %60 = vector.broadcast %59 : vector<1x128xf32> to vector<8x128xf32>
    %61 = arith.addf %56, %60 : vector<8x128xf32>
    %cst_33 = arith.constant 5.000000e-01 : f32
    %62 = vector.broadcast %cst_33 : f32 to vector<8x128xf32>
    %63 = arith.mulf %62, %61 : vector<8x128xf32>
    %64 = math.tanh %63 : vector<8x128xf32>
    %cst_34 = arith.constant 5.000000e-01 : f32
    %65 = vector.broadcast %cst_34 : f32 to vector<8x128xf32>
    %66 = arith.mulf %65, %64 : vector<8x128xf32>
    %cst_35 = arith.constant 5.000000e-01 : f32
    %67 = vector.broadcast %cst_35 : f32 to vector<8x128xf32>
    %68 = arith.addf %66, %67 : vector<8x128xf32>
    %69 = arith.mulf %61, %68 : vector<8x128xf32>
    %70 = arith.truncf %69 : vector<8x128xf32> to vector<8x128xbf16>
    %c1_36 = arith.constant 1 : index
    %c0_37 = arith.constant 0 : index
    %c0_38 = arith.constant 0 : index
    %71 = vector.load %arg6[%c1_36, %c0_37, %c0_38] : memref<5x128x128xbf16, #tpu.memory_space<vmem>>, vector<1x128x128xbf16>
    %72 = vector.shape_cast %71 : vector<1x128x128xbf16> to vector<128x128xbf16>
    %cst_39 = arith.constant dense<0.000000e+00> : vector<8x128xf32>
    %73 = tpu.matmul %70, %72, %cst_39 {dimension_numbers = #tpu.dot_dimension_numbers<[1], [0], [0], [1], [0, 0, 1, 1], [], []>} : vector<8x128xbf16>, vector<128x128xbf16>, vector<8x128xf32> -> vector<8x128xf32>
    %c1_40 = arith.constant 1 : index
    %c0_41 = arith.constant 0 : index
    %74 = vector.load %arg7[%c1_40, %c0_41] : memref<5x128xf32, #tpu.memory_space<vmem>>, vector<1x128xf32>
    %75 = vector.shape_cast %74 : vector<1x128xf32> to vector<128xf32>
    %76 = vector.shape_cast %75 : vector<128xf32> to vector<1x128xf32>
    %77 = vector.broadcast %76 : vector<1x128xf32> to vector<8x128xf32>
    %78 = arith.addf %73, %77 : vector<8x128xf32>
    %cst_42 = arith.constant 5.000000e-01 : f32
    %79 = vector.broadcast %cst_42 : f32 to vector<8x128xf32>
    %80 = arith.mulf %79, %78 : vector<8x128xf32>
    %81 = math.tanh %80 : vector<8x128xf32>
    %cst_43 = arith.constant 5.000000e-01 : f32
    %82 = vector.broadcast %cst_43 : f32 to vector<8x128xf32>
    %83 = arith.mulf %82, %81 : vector<8x128xf32>
    %cst_44 = arith.constant 5.000000e-01 : f32
    %84 = vector.broadcast %cst_44 : f32 to vector<8x128xf32>
    %85 = arith.addf %83, %84 : vector<8x128xf32>
    %86 = arith.mulf %78, %85 : vector<8x128xf32>
    %87 = arith.truncf %86 : vector<8x128xf32> to vector<8x128xbf16>
    %c0_45 = arith.constant 0 : index
    %c128 = arith.constant 128 : index
    %88 = vector.load %arg14[%c0_45, %c128] : memref<8x640xbf16, #tpu.memory_space<vmem>>, vector<8x128xbf16>
    tpu.vector_store %arg14[%c0_45, %c128], %87 {strides = array<i32>} : memref<8x640xbf16, #tpu.memory_space<vmem>>, vector<8x128xbf16>,
    %89 = vector.extract_strided_slice %14 {offsets = [0, 256], sizes = [8, 128], strides = [1, 1]} : vector<8x640xf32> to vector<8x128xf32>
    %90 = arith.truncf %89 : vector<8x128xf32> to vector<8x128xbf16>
    %c2 = arith.constant 2 : index
    %c0_46 = arith.constant 0 : index
    %c0_47 = arith.constant 0 : index
    %91 = vector.load %arg4[%c2, %c0_46, %c0_47] : memref<5x128x128xbf16, #tpu.memory_space<vmem>>, vector<1x128x128xbf16>
    %92 = vector.shape_cast %91 : vector<1x128x128xbf16> to vector<128x128xbf16>
    %cst_48 = arith.constant dense<0.000000e+00> : vector<8x128xf32>
    %93 = tpu.matmul %90, %92, %cst_48 {dimension_numbers = #tpu.dot_dimension_numbers<[1], [0], [0], [1], [0, 0, 1, 1], [], []>} : vector<8x128xbf16>, vector<128x128xbf16>, vector<8x128xf32> -> vector<8x128xf32>
    %c2_49 = arith.constant 2 : index
    %c0_50 = arith.constant 0 : index
    %94 = vector.load %arg5[%c2_49, %c0_50] : memref<5x128xf32, #tpu.memory_space<vmem>>, vector<1x128xf32>
    %95 = vector.shape_cast %94 : vector<1x128xf32> to vector<128xf32>
    %96 = vector.shape_cast %95 : vector<128xf32> to vector<1x128xf32>
    %97 = vector.broadcast %96 : vector<1x128xf32> to vector<8x128xf32>
    %98 = arith.addf %93, %97 : vector<8x128xf32>
    %cst_51 = arith.constant 5.000000e-01 : f32
    %99 = vector.broadcast %cst_51 : f32 to vector<8x128xf32>
    %100 = arith.mulf %99, %98 : vector<8x128xf32>
    %101 = math.tanh %100 : vector<8x128xf32>
    %cst_52 = arith.constant 5.000000e-01 : f32
    %102 = vector.broadcast %cst_52 : f32 to vector<8x128xf32>
    %103 = arith.mulf %102, %101 : vector<8x128xf32>
    %cst_53 = arith.constant 5.000000e-01 : f32
    %104 = vector.broadcast %cst_53 : f32 to vector<8x128xf32>
    %105 = arith.addf %103, %104 : vector<8x128xf32>
    %106 = arith.mulf %98, %105 : vector<8x128xf32>
    %107 = arith.truncf %106 : vector<8x128xf32> to vector<8x128xbf16>
    %c2_54 = arith.constant 2 : index
    %c0_55 = arith.constant 0 : index
    %c0_56 = arith.constant 0 : index
    %108 = vector.load %arg6[%c2_54, %c0_55, %c0_56] : memref<5x128x128xbf16, #tpu.memory_space<vmem>>, vector<1x128x128xbf16>
    %109 = vector.shape_cast %108 : vector<1x128x128xbf16> to vector<128x128xbf16>
    %cst_57 = arith.constant dense<0.000000e+00> : vector<8x128xf32>
    %110 = tpu.matmul %107, %109, %cst_57 {dimension_numbers = #tpu.dot_dimension_numbers<[1], [0], [0], [1], [0, 0, 1, 1], [], []>} : vector<8x128xbf16>, vector<128x128xbf16>, vector<8x128xf32> -> vector<8x128xf32>
    %c2_58 = arith.constant 2 : index
    %c0_59 = arith.constant 0 : index
    %111 = vector.load %arg7[%c2_58, %c0_59] : memref<5x128xf32, #tpu.memory_space<vmem>>, vector<1x128xf32>
    %112 = vector.shape_cast %111 : vector<1x128xf32> to vector<128xf32>
    %113 = vector.shape_cast %112 : vector<128xf32> to vector<1x128xf32>
    %114 = vector.broadcast %113 : vector<1x128xf32> to vector<8x128xf32>
    %115 = arith.addf %110, %114 : vector<8x128xf32>
    %cst_60 = arith.constant 5.000000e-01 : f32
    %116 = vector.broadcast %cst_60 : f32 to vector<8x128xf32>
    %117 = arith.mulf %116, %115 : vector<8x128xf32>
    %118 = math.tanh %117 : vector<8x128xf32>
    %cst_61 = arith.constant 5.000000e-01 : f32
    %119 = vector.broadcast %cst_61 : f32 to vector<8x128xf32>
    %120 = arith.mulf %119, %118 : vector<8x128xf32>
    %cst_62 = arith.constant 5.000000e-01 : f32
    %121 = vector.broadcast %cst_62 : f32 to vector<8x128xf32>
    %122 = arith.addf %120, %121 : vector<8x128xf32>
    %123 = arith.mulf %115, %122 : vector<8x128xf32>
    %124 = arith.truncf %123 : vector<8x128xf32> to vector<8x128xbf16>
    %c0_63 = arith.constant 0 : index
    %c256 = arith.constant 256 : index
    %125 = vector.load %arg14[%c0_63, %c256] : memref<8x640xbf16, #tpu.memory_space<vmem>>, vector<8x128xbf16>
    tpu.vector_store %arg14[%c0_63, %c256], %124 {strides = array<i32>} : memref<8x640xbf16, #tpu.memory_space<vmem>>, vector<8x128xbf16>,
    %126 = vector.extract_strided_slice %14 {offsets = [0, 384], sizes = [8, 128], strides = [1, 1]} : vector<8x640xf32> to vector<8x128xf32>
    %127 = arith.truncf %126 : vector<8x128xf32> to vector<8x128xbf16>
    %c3 = arith.constant 3 : index
    %c0_64 = arith.constant 0 : index
    %c0_65 = arith.constant 0 : index
    %128 = vector.load %arg4[%c3, %c0_64, %c0_65] : memref<5x128x128xbf16, #tpu.memory_space<vmem>>, vector<1x128x128xbf16>
    %129 = vector.shape_cast %128 : vector<1x128x128xbf16> to vector<128x128xbf16>
    %cst_66 = arith.constant dense<0.000000e+00> : vector<8x128xf32>
    %130 = tpu.matmul %127, %129, %cst_66 {dimension_numbers = #tpu.dot_dimension_numbers<[1], [0], [0], [1], [0, 0, 1, 1], [], []>} : vector<8x128xbf16>, vector<128x128xbf16>, vector<8x128xf32> -> vector<8x128xf32>
    %c3_67 = arith.constant 3 : index
    %c0_68 = arith.constant 0 : index
    %131 = vector.load %arg5[%c3_67, %c0_68] : memref<5x128xf32, #tpu.memory_space<vmem>>, vector<1x128xf32>
    %132 = vector.shape_cast %131 : vector<1x128xf32> to vector<128xf32>
    %133 = vector.shape_cast %132 : vector<128xf32> to vector<1x128xf32>
    %134 = vector.broadcast %133 : vector<1x128xf32> to vector<8x128xf32>
    %135 = arith.addf %130, %134 : vector<8x128xf32>
    %cst_69 = arith.constant 5.000000e-01 : f32
    %136 = vector.broadcast %cst_69 : f32 to vector<8x128xf32>
    %137 = arith.mulf %136, %135 : vector<8x128xf32>
    %138 = math.tanh %137 : vector<8x128xf32>
    %cst_70 = arith.constant 5.000000e-01 : f32
    %139 = vector.broadcast %cst_70 : f32 to vector<8x128xf32>
    %140 = arith.mulf %139, %138 : vector<8x128xf32>
    %cst_71 = arith.constant 5.000000e-01 : f32
    %141 = vector.broadcast %cst_71 : f32 to vector<8x128xf32>
    %142 = arith.addf %140, %141 : vector<8x128xf32>
    %143 = arith.mulf %135, %142 : vector<8x128xf32>
    %144 = arith.truncf %143 : vector<8x128xf32> to vector<8x128xbf16>
    %c3_72 = arith.constant 3 : index
    %c0_73 = arith.constant 0 : index
    %c0_74 = arith.constant 0 : index
    %145 = vector.load %arg6[%c3_72, %c0_73, %c0_74] : memref<5x128x128xbf16, #tpu.memory_space<vmem>>, vector<1x128x128xbf16>
    %146 = vector.shape_cast %145 : vector<1x128x128xbf16> to vector<128x128xbf16>
    %cst_75 = arith.constant dense<0.000000e+00> : vector<8x128xf32>
    %147 = tpu.matmul %144, %146, %cst_75 {dimension_numbers = #tpu.dot_dimension_numbers<[1], [0], [0], [1], [0, 0, 1, 1], [], []>} : vector<8x128xbf16>, vector<128x128xbf16>, vector<8x128xf32> -> vector<8x128xf32>
    %c3_76 = arith.constant 3 : index
    %c0_77 = arith.constant 0 : index
    %148 = vector.load %arg7[%c3_76, %c0_77] : memref<5x128xf32, #tpu.memory_space<vmem>>, vector<1x128xf32>
    %149 = vector.shape_cast %148 : vector<1x128xf32> to vector<128xf32>
    %150 = vector.shape_cast %149 : vector<128xf32> to vector<1x128xf32>
    %151 = vector.broadcast %150 : vector<1x128xf32> to vector<8x128xf32>
    %152 = arith.addf %147, %151 : vector<8x128xf32>
    %cst_78 = arith.constant 5.000000e-01 : f32
    %153 = vector.broadcast %cst_78 : f32 to vector<8x128xf32>
    %154 = arith.mulf %153, %152 : vector<8x128xf32>
    %155 = math.tanh %154 : vector<8x128xf32>
    %cst_79 = arith.constant 5.000000e-01 : f32
    %156 = vector.broadcast %cst_79 : f32 to vector<8x128xf32>
    %157 = arith.mulf %156, %155 : vector<8x128xf32>
    %cst_80 = arith.constant 5.000000e-01 : f32
    %158 = vector.broadcast %cst_80 : f32 to vector<8x128xf32>
    %159 = arith.addf %157, %158 : vector<8x128xf32>
    %160 = arith.mulf %152, %159 : vector<8x128xf32>
    %161 = arith.truncf %160 : vector<8x128xf32> to vector<8x128xbf16>
    %c0_81 = arith.constant 0 : index
    %c384 = arith.constant 384 : index
    %162 = vector.load %arg14[%c0_81, %c384] : memref<8x640xbf16, #tpu.memory_space<vmem>>, vector<8x128xbf16>
    tpu.vector_store %arg14[%c0_81, %c384], %161 {strides = array<i32>} : memref<8x640xbf16, #tpu.memory_space<vmem>>, vector<8x128xbf16>,
    %163 = vector.extract_strided_slice %14 {offsets = [0, 512], sizes = [8, 128], strides = [1, 1]} : vector<8x640xf32> to vector<8x128xf32>
    %164 = arith.truncf %163 : vector<8x128xf32> to vector<8x128xbf16>
    %c4 = arith.constant 4 : index
    %c0_82 = arith.constant 0 : index
    %c0_83 = arith.constant 0 : index
    %165 = vector.load %arg4[%c4, %c0_82, %c0_83] : memref<5x128x128xbf16, #tpu.memory_space<vmem>>, vector<1x128x128xbf16>
    %166 = vector.shape_cast %165 : vector<1x128x128xbf16> to vector<128x128xbf16>
    %cst_84 = arith.constant dense<0.000000e+00> : vector<8x128xf32>
    %167 = tpu.matmul %164, %166, %cst_84 {dimension_numbers = #tpu.dot_dimension_numbers<[1], [0], [0], [1], [0, 0, 1, 1], [], []>} : vector<8x128xbf16>, vector<128x128xbf16>, vector<8x128xf32> -> vector<8x128xf32>
    %c4_85 = arith.constant 4 : index
    %c0_86 = arith.constant 0 : index
    %168 = vector.load %arg5[%c4_85, %c0_86] : memref<5x128xf32, #tpu.memory_space<vmem>>, vector<1x128xf32>
    %169 = vector.shape_cast %168 : vector<1x128xf32> to vector<128xf32>
    %170 = vector.shape_cast %169 : vector<128xf32> to vector<1x128xf32>
    %171 = vector.broadcast %170 : vector<1x128xf32> to vector<8x128xf32>
    %172 = arith.addf %167, %171 : vector<8x128xf32>
    %cst_87 = arith.constant 5.000000e-01 : f32
    %173 = vector.broadcast %cst_87 : f32 to vector<8x128xf32>
    %174 = arith.mulf %173, %172 : vector<8x128xf32>
    %175 = math.tanh %174 : vector<8x128xf32>
    %cst_88 = arith.constant 5.000000e-01 : f32
    %176 = vector.broadcast %cst_88 : f32 to vector<8x128xf32>
    %177 = arith.mulf %176, %175 : vector<8x128xf32>
    %cst_89 = arith.constant 5.000000e-01 : f32
    %178 = vector.broadcast %cst_89 : f32 to vector<8x128xf32>
    %179 = arith.addf %177, %178 : vector<8x128xf32>
    %180 = arith.mulf %172, %179 : vector<8x128xf32>
    %181 = arith.truncf %180 : vector<8x128xf32> to vector<8x128xbf16>
    %c4_90 = arith.constant 4 : index
    %c0_91 = arith.constant 0 : index
    %c0_92 = arith.constant 0 : index
    %182 = vector.load %arg6[%c4_90, %c0_91, %c0_92] : memref<5x128x128xbf16, #tpu.memory_space<vmem>>, vector<1x128x128xbf16>
    %183 = vector.shape_cast %182 : vector<1x128x128xbf16> to vector<128x128xbf16>
    %cst_93 = arith.constant dense<0.000000e+00> : vector<8x128xf32>
    %184 = tpu.matmul %181, %183, %cst_93 {dimension_numbers = #tpu.dot_dimension_numbers<[1], [0], [0], [1], [0, 0, 1, 1], [], []>} : vector<8x128xbf16>, vector<128x128xbf16>, vector<8x128xf32> -> vector<8x128xf32>
    %c4_94 = arith.constant 4 : index
    %c0_95 = arith.constant 0 : index
    %185 = vector.load %arg7[%c4_94, %c0_95] : memref<5x128xf32, #tpu.memory_space<vmem>>, vector<1x128xf32>
    %186 = vector.shape_cast %185 : vector<1x128xf32> to vector<128xf32>
    %187 = vector.shape_cast %186 : vector<128xf32> to vector<1x128xf32>
    %188 = vector.broadcast %187 : vector<1x128xf32> to vector<8x128xf32>
    %189 = arith.addf %184, %188 : vector<8x128xf32>
    %cst_96 = arith.constant 5.000000e-01 : f32
    %190 = vector.broadcast %cst_96 : f32 to vector<8x128xf32>
    %191 = arith.mulf %190, %189 : vector<8x128xf32>
    %192 = math.tanh %191 : vector<8x128xf32>
    %cst_97 = arith.constant 5.000000e-01 : f32
    %193 = vector.broadcast %cst_97 : f32 to vector<8x128xf32>
    %194 = arith.mulf %193, %192 : vector<8x128xf32>
    %cst_98 = arith.constant 5.000000e-01 : f32
    %195 = vector.broadcast %cst_98 : f32 to vector<8x128xf32>
    %196 = arith.addf %194, %195 : vector<8x128xf32>
    %197 = arith.mulf %189, %196 : vector<8x128xf32>
    %198 = arith.truncf %197 : vector<8x128xf32> to vector<8x128xbf16>
    %c0_99 = arith.constant 0 : index
    %c512 = arith.constant 512 : index
    %199 = vector.load %arg14[%c0_99, %c512] : memref<8x640xbf16, #tpu.memory_space<vmem>>, vector<8x128xbf16>
    tpu.vector_store %arg14[%c0_99, %c512], %198 {strides = array<i32>} : memref<8x640xbf16, #tpu.memory_space<vmem>>, vector<8x128xbf16>,
    %c0_100 = arith.constant 0 : index
    %c0_101 = arith.constant 0 : index
    %200 = vector.load %arg14[%c0_100, %c0_101] : memref<8x640xbf16, #tpu.memory_space<vmem>>, vector<8x640xbf16>
    %c0_102 = arith.constant 0 : index
    %c0_103 = arith.constant 0 : index
    %201 = vector.load %arg8[%c0_102, %c0_103] : memref<640x40xbf16, #tpu.memory_space<vmem>>, vector<640x40xbf16>
    %cst_104 = arith.constant dense<0.000000e+00> : vector<8x40xf32>
    %202 = tpu.matmul %200, %201, %cst_104 {dimension_numbers = #tpu.dot_dimension_numbers<[1], [0], [0], [1], [0, 0, 1, 1], [], []>} : vector<8x640xbf16>, vector<640x40xbf16>, vector<8x40xf32> -> vector<8x40xf32>
    %c0_105 = arith.constant 0 : index
    %c0_106 = arith.constant 0 : index
    %203 = vector.load %arg9[%c0_105, %c0_106] : memref<1x40xf32, #tpu.memory_space<vmem>>, vector<1x40xf32>
    %204 = vector.broadcast %203 : vector<1x40xf32> to vector<8x40xf32>
    %205 = arith.addf %202, %204 : vector<8x40xf32>
    %206 = vector.extract_strided_slice %205 {offsets = [0, 0], sizes = [8, 5], strides = [1, 1]} : vector<8x40xf32> to vector<8x5xf32>
    %cst_107 = arith.constant dense<0xFF800000> : vector<8xf32>
    %207 = vector.multi_reduction <maximumf>, %206, %cst_107 [1] : vector<8x5xf32> to vector<8xf32>
    %208 = vector.shape_cast %207 : vector<8xf32> to vector<8x1xf32>
    %209 = vector.broadcast %208 : vector<8x1xf32> to vector<8x5xf32>
    %210 = arith.subf %206, %209 : vector<8x5xf32>
    %211 = math.exp %210 : vector<8x5xf32>
    %cst_108 = arith.constant dense<0.000000e+00> : vector<8xf32>
    %212 = vector.multi_reduction <add>, %211, %cst_108 [1] : vector<8x5xf32> to vector<8xf32>
    %213 = vector.shape_cast %212 : vector<8xf32> to vector<8x1xf32>
    %214 = tpu.reciprocal %213 {approx = true} : vector<8x1xf32> -> vector<8x1xf32>
    %215 = vector.broadcast %214 : vector<8x1xf32> to vector<8x5xf32>
    %216 = arith.mulf %211, %215 : vector<8x5xf32>
    %217 = vector.extract_strided_slice %205 {offsets = [0, 8], sizes = [8, 5], strides = [1, 1]} : vector<8x40xf32> to vector<8x5xf32>
    %cst_109 = arith.constant dense<0xFF800000> : vector<8xf32>
    %218 = vector.multi_reduction <maximumf>, %217, %cst_109 [1] : vector<8x5xf32> to vector<8xf32>
    %219 = vector.shape_cast %218 : vector<8xf32> to vector<8x1xf32>
    %220 = vector.broadcast %219 : vector<8x1xf32> to vector<8x5xf32>
    %221 = arith.subf %217, %220 : vector<8x5xf32>
    %222 = math.exp %221 : vector<8x5xf32>
    %cst_110 = arith.constant dense<0.000000e+00> : vector<8xf32>
    %223 = vector.multi_reduction <add>, %222, %cst_110 [1] : vector<8x5xf32> to vector<8xf32>
    %224 = vector.shape_cast %223 : vector<8xf32> to vector<8x1xf32>
    %225 = tpu.reciprocal %224 {approx = true} : vector<8x1xf32> -> vector<8x1xf32>
    %226 = vector.broadcast %225 : vector<8x1xf32> to vector<8x5xf32>
    %227 = arith.mulf %222, %226 : vector<8x5xf32>
    %228 = vector.extract_strided_slice %205 {offsets = [0, 16], sizes = [8, 3], strides = [1, 1]} : vector<8x40xf32> to vector<8x3xf32>
    %cst_111 = arith.constant dense<0xFF800000> : vector<8xf32>
    %229 = vector.multi_reduction <maximumf>, %228, %cst_111 [1] : vector<8x3xf32> to vector<8xf32>
    %230 = vector.shape_cast %229 : vector<8xf32> to vector<8x1xf32>
    %231 = vector.broadcast %230 : vector<8x1xf32> to vector<8x3xf32>
    %232 = arith.subf %228, %231 : vector<8x3xf32>
    %233 = math.exp %232 : vector<8x3xf32>
    %cst_112 = arith.constant dense<0.000000e+00> : vector<8xf32>
    %234 = vector.multi_reduction <add>, %233, %cst_112 [1] : vector<8x3xf32> to vector<8xf32>
    %235 = vector.shape_cast %234 : vector<8xf32> to vector<8x1xf32>
    %236 = tpu.reciprocal %235 {approx = true} : vector<8x1xf32> -> vector<8x1xf32>
    %237 = vector.broadcast %236 : vector<8x1xf32> to vector<8x3xf32>
    %238 = arith.mulf %233, %237 : vector<8x3xf32>
    %239 = vector.extract_strided_slice %205 {offsets = [0, 24], sizes = [8, 1], strides = [1, 1]} : vector<8x40xf32> to vector<8x1xf32>
    %240 = vector.extract_strided_slice %205 {offsets = [0, 32], sizes = [8, 1], strides = [1, 1]} : vector<8x40xf32> to vector<8x1xf32>
    %c0_113 = arith.constant 0 : index
    %c0_114 = arith.constant 0 : index
    %241 = vector.load %arg10[%c0_113, %c0_114] : memref<1x5xf32, #tpu.memory_space<vmem>>, vector<1x5xf32>
    %242 = vector.broadcast %241 : vector<1x5xf32> to vector<8x5xf32>
    %243 = arith.mulf %216, %242 : vector<8x5xf32>
    %cst_115 = arith.constant dense<0.000000e+00> : vector<8xf32>
    %244 = vector.multi_reduction <add>, %243, %cst_115 [1] : vector<8x5xf32> to vector<8xf32>
    %245 = vector.shape_cast %244 : vector<8xf32> to vector<8x1xf32>
    %c0_116 = arith.constant 0 : index
    %c0_117 = arith.constant 0 : index
    %246 = vector.load %arg11[%c0_116, %c0_117] : memref<1x5xf32, #tpu.memory_space<vmem>>, vector<1x5xf32>
    %247 = vector.broadcast %246 : vector<1x5xf32> to vector<8x5xf32>
    %248 = arith.mulf %227, %247 : vector<8x5xf32>
    %cst_118 = arith.constant dense<0.000000e+00> : vector<8xf32>
    %249 = vector.multi_reduction <add>, %248, %cst_118 [1] : vector<8x5xf32> to vector<8xf32>
    %250 = vector.shape_cast %249 : vector<8xf32> to vector<8x1xf32>
    %c0_119 = arith.constant 0 : index
    %c0_120 = arith.constant 0 : index
    %251 = vector.load %arg12[%c0_119, %c0_120] : memref<1x3xf32, #tpu.memory_space<vmem>>, vector<1x3xf32>
    %252 = vector.broadcast %251 : vector<1x3xf32> to vector<8x3xf32>
    %253 = arith.mulf %238, %252 : vector<8x3xf32>
    %cst_121 = arith.constant dense<0.000000e+00> : vector<8xf32>
    %254 = vector.multi_reduction <add>, %253, %cst_121 [1] : vector<8x3xf32> to vector<8xf32>
    %255 = vector.shape_cast %254 : vector<8xf32> to vector<8x1xf32>
    %256 = math.sin %239 : vector<8x1xf32>
    %257 = math.cos %239 : vector<8x1xf32>
    %258 = arith.mulf %245, %257 : vector<8x1xf32>
    %259 = arith.subf %256, %258 : vector<8x1xf32>
    %260 = arith.mulf %259, %255 : vector<8x1xf32>
    %261 = arith.mulf %260, %240 : vector<8x1xf32>
    %262 = arith.mulf %261, %250 : vector<8x1xf32>
    %cst_122 = arith.constant 0.000000e+00 : f32
    %263 = vector.broadcast %cst_122 : f32 to vector<8x32xf32>
    %c0_123 = arith.constant 0 : index
    %c0_124 = arith.constant 0 : index
    %264 = vector.load %arg13[%c0_123, %c0_124] : memref<8x32xf32, #tpu.memory_space<vmem>>, vector<8x32xf32>
    tpu.vector_store %arg13[%c0_123, %c0_124], %263 {strides = array<i32>} : memref<8x32xf32, #tpu.memory_space<vmem>>, vector<8x32xf32>,
    %c0_125 = arith.constant 0 : index
    %c0_126 = arith.constant 0 : index
    %265 = vector.load %arg13[%c0_125, %c0_126] : memref<8x32xf32, #tpu.memory_space<vmem>>, vector<8x1xf32>
    tpu.vector_store %arg13[%c0_125, %c0_126], %262 {strides = array<i32>} : memref<8x32xf32, #tpu.memory_space<vmem>>, vector<8x1xf32>,
    %c0_127 = arith.constant 0 : index
    %c1_128 = arith.constant 1 : index
    %266 = vector.load %arg13[%c0_127, %c1_128] : memref<8x32xf32, #tpu.memory_space<vmem>>, vector<8x1xf32>
    tpu.vector_store %arg13[%c0_127, %c1_128], %239 {strides = array<i32>} : memref<8x32xf32, #tpu.memory_space<vmem>>, vector<8x1xf32>,
    %c0_129 = arith.constant 0 : index
    %c2_130 = arith.constant 2 : index
    %267 = vector.load %arg13[%c0_129, %c2_130] : memref<8x32xf32, #tpu.memory_space<vmem>>, vector<8x1xf32>
    tpu.vector_store %arg13[%c0_129, %c2_130], %240 {strides = array<i32>} : memref<8x32xf32, #tpu.memory_space<vmem>>, vector<8x1xf32>,
    %c0_131 = arith.constant 0 : index
    %c3_132 = arith.constant 3 : index
    %268 = vector.load %arg13[%c0_131, %c3_132] : memref<8x32xf32, #tpu.memory_space<vmem>>, vector<8x5xf32>
    tpu.vector_store %arg13[%c0_131, %c3_132], %216 {strides = array<i32>} : memref<8x32xf32, #tpu.memory_space<vmem>>, vector<8x5xf32>,
    %c0_133 = arith.constant 0 : index
    %c8 = arith.constant 8 : index
    %269 = vector.load %arg13[%c0_133, %c8] : memref<8x32xf32, #tpu.memory_space<vmem>>, vector<8x5xf32>
    tpu.vector_store %arg13[%c0_133, %c8], %227 {strides = array<i32>} : memref<8x32xf32, #tpu.memory_space<vmem>>, vector<8x5xf32>,
    %c0_134 = arith.constant 0 : index
    %c13 = arith.constant 13 : index
    %270 = vector.load %arg13[%c0_134, %c13] : memref<8x32xf32, #tpu.memory_space<vmem>>, vector<8x3xf32>
    tpu.vector_store %arg13[%c0_134, %c13], %238 {strides = array<i32>} : memref<8x32xf32, #tpu.memory_space<vmem>>, vector<8x3xf32>,
    %c0_135 = arith.constant 0 : index
    %c16 = arith.constant 16 : index
    %271 = vector.load %arg13[%c0_135, %c16] : memref<8x32xf32, #tpu.memory_space<vmem>>, vector<8x1xf32>
    tpu.vector_store %arg13[%c0_135, %c16], %245 {strides = array<i32>} : memref<8x32xf32, #tpu.memory_space<vmem>>, vector<8x1xf32>,
    %c0_136 = arith.constant 0 : index
    %c17 = arith.constant 17 : index
    %272 = vector.load %arg13[%c0_136, %c17] : memref<8x32xf32, #tpu.memory_space<vmem>>, vector<8x1xf32>
    tpu.vector_store %arg13[%c0_136, %c17], %250 {strides = array<i32>} : memref<8x32xf32, #tpu.memory_space<vmem>>, vector<8x1xf32>,
    %c0_137 = arith.constant 0 : index
    %c18 = arith.constant 18 : index
    %273 = vector.load %arg13[%c0_137, %c18] : memref<8x32xf32, #tpu.memory_space<vmem>>, vector<8x1xf32>
    tpu.vector_store %arg13[%c0_137, %c18], %255 {strides = array<i32>} : memref<8x32xf32, #tpu.memory_space<vmem>>, vector<8x1xf32>,
    return
  }
  func.func @transform_0(%arg0: i32) -> (i32, i32) {
    %c0_i32 = arith.constant 0 : i32
    %c0_i32_0 = arith.constant 0 : i32
    return %arg0, %c0_i32 : i32, i32
  }
  func.func @transform_1(%arg0: i32) -> (i32, i32) {
    %c0_i32 = arith.constant 0 : i32
    %c0_i32_0 = arith.constant 0 : i32
    %c0_i32_1 = arith.constant 0 : i32
    return %c0_i32, %c0_i32_0 : i32, i32
  }
  func.func @transform_2(%arg0: i32) -> (i32, i32) {
    %c0_i32 = arith.constant 0 : i32
    %c0_i32_0 = arith.constant 0 : i32
    %c0_i32_1 = arith.constant 0 : i32
    return %c0_i32, %c0_i32_0 : i32, i32
  }
  func.func @transform_3(%arg0: i32) -> (i32, i32, i32) {
    %c0_i32 = arith.constant 0 : i32
    %c0_i32_0 = arith.constant 0 : i32
    %c0_i32_1 = arith.constant 0 : i32
    %c0_i32_2 = arith.constant 0 : i32
    return %c0_i32, %c0_i32_0, %c0_i32_1 : i32, i32, i32
  }
  func.func @transform_4(%arg0: i32) -> (i32, i32) {
    %c0_i32 = arith.constant 0 : i32
    %c0_i32_0 = arith.constant 0 : i32
    %c0_i32_1 = arith.constant 0 : i32
    return %c0_i32, %c0_i32_0 : i32, i32
  }
  func.func @transform_5(%arg0: i32) -> (i32, i32, i32) {
    %c0_i32 = arith.constant 0 : i32
    %c0_i32_0 = arith.constant 0 : i32
    %c0_i32_1 = arith.constant 0 : i32
    %c0_i32_2 = arith.constant 0 : i32
    return %c0_i32, %c0_i32_0, %c0_i32_1 : i32, i32, i32
  }
  func.func @transform_6(%arg0: i32) -> (i32, i32) {
    %c0_i32 = arith.constant 0 : i32
    %c0_i32_0 = arith.constant 0 : i32
    %c0_i32_1 = arith.constant 0 : i32
    return %c0_i32, %c0_i32_0 : i32, i32
  }
  func.func @transform_7(%arg0: i32) -> (i32, i32) {
    %c0_i32 = arith.constant 0 : i32
    %c0_i32_0 = arith.constant 0 : i32
    %c0_i32_1 = arith.constant 0 : i32
    return %c0_i32, %c0_i32_0 : i32, i32
  }
  func.func @transform_8(%arg0: i32) -> (i32, i32) {
    %c0_i32 = arith.constant 0 : i32
    %c0_i32_0 = arith.constant 0 : i32
    %c0_i32_1 = arith.constant 0 : i32
    return %c0_i32, %c0_i32_0 : i32, i32
  }
  func.func @transform_9(%arg0: i32) -> (i32, i32) {
    %c0_i32 = arith.constant 0 : i32
    %c0_i32_0 = arith.constant 0 : i32
    %c0_i32_1 = arith.constant 0 : i32
    return %c0_i32, %c0_i32_0 : i32, i32
  }
  func.func @transform_10(%arg0: i32) -> (i32, i32) {
    %c0_i32 = arith.constant 0 : i32
    %c0_i32_0 = arith.constant 0 : i32
    %c0_i32_1 = arith.constant 0 : i32
    return %c0_i32, %c0_i32_0 : i32, i32
  }
  func.func @transform_11(%arg0: i32) -> (i32, i32) {
    %c0_i32 = arith.constant 0 : i32
    %c0_i32_0 = arith.constant 0 : i32
    %c0_i32_1 = arith.constant 0 : i32
    return %c0_i32, %c0_i32_0 : i32, i32
  }
  func.func @transform_12(%arg0: i32) -> (i32, i32) {
    %c0_i32 = arith.constant 0 : i32
    %c0_i32_0 = arith.constant 0 : i32
    return %arg0, %c0_i32 : i32, i32
  }
}

</mosaic_0001>

<llo_original>
// kernel: tpu_custom_call.1
$region0: #{tpu_custom_call.1}
  #allocation0 [shape = 'u32[]', space=smem, size = 0x4, offset = 0x4, fixed_abs, tag = 'smem constant byte address 0x4 - core index']
  #allocation1 [shape = 'u32[144,128]{1,0:T(1,128)}', space=vmem, size = 0x12000, scoped, tag = 'internal scratch']
  #allocation2 [shape = 'bf16[8,640]{1,0:T(8,128)(2,1)}', space=vmem, size = 0x2800, scoped, tag = 'scratch operand']
  %s0 = inlined_call_operand.vmem [shape: f32[16,32], index: 0, kind: input, shape index: {}]
  %s1 = inlined_call_operand.vmem [shape: bf16[32,640], index: 1, kind: input, shape index: {}]
  %s2 = inlined_call_operand.hbm [shape: f32[1,640], index: 2, kind: input, shape index: {}]
  %s3 = inlined_call_operand.vmem [shape: bf16[5,128,128], index: 3, kind: input, shape index: {}]
  %s4 = inlined_call_operand.vmem [shape: f32[5,128], index: 4, kind: input, shape index: {}]
  %s5 = inlined_call_operand.hbm [shape: bf16[5,128,128], index: 5, kind: input, shape index: {}]
  %s6 = inlined_call_operand.hbm [shape: f32[5,128], index: 6, kind: input, shape index: {}]
  %s7 = inlined_call_operand.vmem [shape: bf16[640,40], index: 7, kind: input, shape index: {}]
  %s8 = inlined_call_operand.vmem [shape: f32[1,40], index: 8, kind: input, shape index: {}]
  %s9 = inlined_call_operand.vmem [shape: f32[1,5], index: 9, kind: input, shape index: {}]
  %s10 = inlined_call_operand.vmem [shape: f32[1,5], index: 10, kind: input, shape index: {}]
  %s11 = inlined_call_operand.vmem [shape: f32[1,3], index: 11, kind: input, shape index: {}]
  %s12 = inlined_call_operand.hbm [shape: f32[16,32], index: 12, kind: output, shape index: {}]
  %s13 = sld [smem:[#allocation0]]
  $region93: #{tpu_custom_call.1} parent=0
    _
  %s15 = ssub.s32 1, %s13
  %s16 = scalar_select 0, %s15, %s13
  $region1: #{tpu_custom_call.1} parent=0
    #allocation3 [shape = 'u8[2560]{0}', space=vmem, size = 0xc00, scoped, tag = 'input window, operand 2, single buffered']
    #allocation4 [shape = 's32[2]{0}', space=sflag, size = 0x8, scoped, tag = 'scoped memory for tpu_custom_call.1']
    #allocation5 [shape = 's32[2]{0}', space=sflag, size = 0x8, scoped, tag = 'scoped memory for tpu_custom_call.1']
    #allocation6 [shape = 'u8[163840]{0}', space=vmem, size = 0x28000, scoped, tag = 'input window, operand 5, single buffered']
    #allocation7 [shape = 's32[1]{0}', space=sflag, size = 0x4, scoped, tag = 'scoped memory for tpu_custom_call.1']
    #allocation8 [shape = 'u8[4096]{0}', space=vmem, size = 0x1000, scoped, tag = 'input window, operand 6, single buffered']
    #allocation9 [shape = 'u8[8192]{0}', space=vmem, size = 0x2000, scoped, tag = 'output window, operand 0']
    %17 = vsyncpa [#allocation4], 0
    %18 = vsyncpa [#allocation7], 0
    %19 = vsyncpa [#allocation5], 0
    %s20 = scalar_lea.sflag [#allocation5], 1
    %21 = vsyncpa %s20, 0
    loop: start=0, step=1, limit=4
    $region2: #{tpu_custom_call.1} parent=1 // loop_pre_header
      _
    $region3: #{tpu_custom_call.1} parent=1 // loop_header
      %s23 = sphi 0, %s27
      %p24 = scmp.ge.s32.totalorder %s23, 4
      %s33 = sphi 0, %s35
      %s36 = sphi 0, %s33
      %s37 = sphi 0, %s36
      %s53 = sphi 0, %s37
      %s57 = sphi 0, %s57
      %s59 = sphi 0, %s57
      %s60 = sphi 0, %s59
      %s74 = sphi 0, %s60
      %s78 = sphi 0, %s78
      %s80 = sphi 0, %s78
      %s81 = sphi 0, %s80
      %s95 = sphi 0, %s81
      %s99 = sphi 0, %s99
      %s101 = sphi 0, %s99
      %s102 = sphi 0, %s101
      %s116 = sphi 0, %s102
      %s120 = sphi 0, %s120
      %s122 = sphi 0, %s120
      %s123 = sphi 0, %s122
      %s137 = sphi 0, %s123
      %s141 = sphi 0, %s141
      %s143 = sphi 0, %s141
      %s144 = sphi 0, %s143
      %s158 = sphi 0, %s144
      %s162 = sphi 0, %s162
      %s164 = sphi 0, %s162
      %s165 = sphi 0, %s164
      %s179 = sphi 0, %s165
      %s183 = sphi 0, %s183
      %s185 = sphi 0, %s183
      %s186 = sphi 0, %s185
      %s200 = sphi 0, %s186
      %s204 = sphi 0, %s204
      %s206 = sphi 0, %s204
      %s207 = sphi 0, %s206
      %s221 = sphi 0, %s207
      %s225 = sphi 0, %s225
      %s227 = sphi 0, %s225
      %s228 = sphi 0, %s227
      %s242 = sphi 0, %s228
      %s246 = sphi 0, %s246
      %s248 = sphi 0, %s246
      %s249 = sphi 0, %s248
      %s263 = sphi 0, %s249
      %s267 = sphi 0, %s267
      %s269 = sphi 0, %s267
      %s270 = sphi 0, %s269
      %s284 = sphi 0, %s270
      %s290 = sphi 0, %s292
      %s293 = sphi 0, %s290
      %s294 = sphi 0, %s293
      %s310 = sphi 0, %s294
    $region4: #{tpu_custom_call.1} parent=1 // loop_header_branch
      %26 = sbr.rel (%p24) target = $region8
    $region5: #{tpu_custom_call.1} parent=1 // loop_body
      %s28 = ssub.s32 %s23, 1
      %s29 = ssub.s32 %s23, 2
      %s30 = sadd.s32 %s23, 1
      %s31 = ssub.s32 %s23, %s30
      %p32 = scmp.eq.s32.totalorder %s31, 0
      %s34 = sadd.s32 %s33, 1
      %s35 = scalar_select %p32, %s33, %s34
      %p38 = pneg %p32
      %p39 = scmp.eq.s32.totalorder %s23, 1
      %p40 = por %p38, %p39
      %p41 = scmp.ne.s32.totalorder %s33, %s36
      %p42 = scmp.eq.s32.totalorder %s23, 0
      %p43 = por %p41, %p42
      %p44 = scmp.ne.s32.totalorder %s33, %s36
      %p45 = scmp.eq.s32.totalorder %s28, 1
      %p46 = por %p44, %p45
      %p47 = scmp.ne.s32.totalorder %s36, %s37
      %p48 = scmp.eq.s32.totalorder %s28, 0
      %p49 = por %p47, %p48
      %p50 = scmp.ne.s32.totalorder %s36, %s37
      %p51 = scmp.eq.s32.totalorder %s29, 1
      %p52 = por %p50, %p51
      %p54 = scmp.ne.s32.totalorder %s37, %s53
      %p55 = scmp.eq.s32.totalorder %s29, 0
      %p56 = por %p54, %p55
      %s58 = sadd.s32 %s57, 1
      %p61 = scmp.eq.s32.totalorder %s23, 1
      %p62 = scmp.ne.s32.totalorder %s57, %s59
      %p63 = scmp.eq.s32.totalorder %s23, 0
      %p64 = por %p62, %p63
      %p65 = scmp.ne.s32.totalorder %s57, %s59
      %p66 = scmp.eq.s32.totalorder %s28, 1
      %p67 = por %p65, %p66
      %p68 = scmp.ne.s32.totalorder %s59, %s60
      %p69 = scmp.eq.s32.totalorder %s28, 0
      %p70 = por %p68, %p69
      %p71 = scmp.ne.s32.totalorder %s59, %s60
      %p72 = scmp.eq.s32.totalorder %s29, 1
      %p73 = por %p71, %p72
      %p75 = scmp.ne.s32.totalorder %s60, %s74
      %p76 = scmp.eq.s32.totalorder %s29, 0
      %p77 = por %p75, %p76
      %s79 = sadd.s32 %s78, 1
      %p82 = scmp.eq.s32.totalorder %s23, 1
      %p83 = scmp.ne.s32.totalorder %s78, %s80
      %p84 = scmp.eq.s32.totalorder %s23, 0
      %p85 = por %p83, %p84
      %p86 = scmp.ne.s32.totalorder %s78, %s80
      %p87 = scmp.eq.s32.totalorder %s28, 1
      %p88 = por %p86, %p87
      %p89 = scmp.ne.s32.totalorder %s80, %s81
      %p90 = scmp.eq.s32.totalorder %s28, 0
      %p91 = por %p89, %p90
      %p92 = scmp.ne.s32.totalorder %s80, %s81
      %p93 = scmp.eq.s32.totalorder %s29, 1
      %p94 = por %p92, %p93
      %p96 = scmp.ne.s32.totalorder %s81, %s95
      %p97 = scmp.eq.s32.totalorder %s29, 0
      %p98 = por %p96, %p97
      %s100 = sadd.s32 %s99, 1
      %p103 = scmp.eq.s32.totalorder %s23, 1
      %p104 = scmp.ne.s32.totalorder %s99, %s101
      %p105 = scmp.eq.s32.totalorder %s23, 0
      %p106 = por %p104, %p105
      %p107 = scmp.ne.s32.totalorder %s99, %s101
      %p108 = scmp.eq.s32.totalorder %s28, 1
      %p109 = por %p107, %p108
      %p110 = scmp.ne.s32.totalorder %s101, %s102
      %p111 = scmp.eq.s32.totalorder %s28, 0
      %p112 = por %p110, %p111
      %p113 = scmp.ne.s32.totalorder %s101, %s102
      %p114 = scmp.eq.s32.totalorder %s29, 1
      %p115 = por %p113, %p114
      %p117 = scmp.ne.s32.totalorder %s102, %s116
      %p118 = scmp.eq.s32.totalorder %s29, 0
      %p119 = por %p117, %p118
      %s121 = sadd.s32 %s120, 1
      %p124 = scmp.eq.s32.totalorder %s23, 1
      %p125 = scmp.ne.s32.totalorder %s120, %s122
      %p126 = scmp.eq.s32.totalorder %s23, 0
      %p127 = por %p125, %p126
      %p128 = scmp.ne.s32.totalorder %s120, %s122
      %p129 = scmp.eq.s32.totalorder %s28, 1
      %p130 = por %p128, %p129
      %p131 = scmp.ne.s32.totalorder %s122, %s123
      %p132 = scmp.eq.s32.totalorder %s28, 0
      %p133 = por %p131, %p132
      %p134 = scmp.ne.s32.totalorder %s122, %s123
      %p135 = scmp.eq.s32.totalorder %s29, 1
      %p136 = por %p134, %p135
      %p138 = scmp.ne.s32.totalorder %s123, %s137
      %p139 = scmp.eq.s32.totalorder %s29, 0
      %p140 = por %p138, %p139
      %s142 = sadd.s32 %s141, 1
      %p145 = scmp.eq.s32.totalorder %s23, 1
      %p146 = scmp.ne.s32.totalorder %s141, %s143
      %p147 = scmp.eq.s32.totalorder %s23, 0
      %p148 = por %p146, %p147
      %p149 = scmp.ne.s32.totalorder %s141, %s143
      %p150 = scmp.eq.s32.totalorder %s28, 1
      %p151 = por %p149, %p150
      %p152 = scmp.ne.s32.totalorder %s143, %s144
      %p153 = scmp.eq.s32.totalorder %s28, 0
      %p154 = por %p152, %p153
      %p155 = scmp.ne.s32.totalorder %s143, %s144
      %p156 = scmp.eq.s32.totalorder %s29, 1
      %p157 = por %p155, %p156
      %p159 = scmp.ne.s32.totalorder %s144, %s158
      %p160 = scmp.eq.s32.totalorder %s29, 0
      %p161 = por %p159, %p160
      %s163 = sadd.s32 %s162, 1
      %p166 = scmp.eq.s32.totalorder %s23, 1
      %p167 = scmp.ne.s32.totalorder %s162, %s164
      %p168 = scmp.eq.s32.totalorder %s23, 0
      %p169 = por %p167, %p168
      %p170 = scmp.ne.s32.totalorder %s162, %s164
      %p171 = scmp.eq.s32.totalorder %s28, 1
      %p172 = por %p170, %p171
      %p173 = scmp.ne.s32.totalorder %s164, %s165
      %p174 = scmp.eq.s32.totalorder %s28, 0
      %p175 = por %p173, %p174
      %p176 = scmp.ne.s32.totalorder %s164, %s165
      %p177 = scmp.eq.s32.totalorder %s29, 1
      %p178 = por %p176, %p177
      %p180 = scmp.ne.s32.totalorder %s165, %s179
      %p181 = scmp.eq.s32.totalorder %s29, 0
      %p182 = por %p180, %p181
      %s184 = sadd.s32 %s183, 1
      %p187 = scmp.eq.s32.totalorder %s23, 1
      %p188 = scmp.ne.s32.totalorder %s183, %s185
      %p189 = scmp.eq.s32.totalorder %s23, 0
      %p190 = por %p188, %p189
      %p191 = scmp.ne.s32.totalorder %s183, %s185
      %p192 = scmp.eq.s32.totalorder %s28, 1
      %p193 = por %p191, %p192
      %p194 = scmp.ne.s32.totalorder %s185, %s186
      %p195 = scmp.eq.s32.totalorder %s28, 0
      %p196 = por %p194, %p195
      %p197 = scmp.ne.s32.totalorder %s185, %s186
      %p198 = scmp.eq.s32.totalorder %s29, 1
      %p199 = por %p197, %p198
      %p201 = scmp.ne.s32.totalorder %s186, %s200
      %p202 = scmp.eq.s32.totalorder %s29, 0
      %p203 = por %p201, %p202
      %s205 = sadd.s32 %s204, 1
      %p208 = scmp.eq.s32.totalorder %s23, 1
      %p209 = scmp.ne.s32.totalorder %s204, %s206
      %p210 = scmp.eq.s32.totalorder %s23, 0
      %p211 = por %p209, %p210
      %p212 = scmp.ne.s32.totalorder %s204, %s206
      %p213 = scmp.eq.s32.totalorder %s28, 1
      %p214 = por %p212, %p213
      %p215 = scmp.ne.s32.totalorder %s206, %s207
      %p216 = scmp.eq.s32.totalorder %s28, 0
      %p217 = por %p215, %p216
      %p218 = scmp.ne.s32.totalorder %s206, %s207
      %p219 = scmp.eq.s32.totalorder %s29, 1
      %p220 = por %p218, %p219
      %p222 = scmp.ne.s32.totalorder %s207, %s221
      %p223 = scmp.eq.s32.totalorder %s29, 0
      %p224 = por %p222, %p223
      %s226 = sadd.s32 %s225, 1
      %p229 = scmp.eq.s32.totalorder %s23, 1
      %p230 = scmp.ne.s32.totalorder %s225, %s227
      %p231 = scmp.eq.s32.totalorder %s23, 0
      %p232 = por %p230, %p231
      %p233 = scmp.ne.s32.totalorder %s225, %s227
      %p234 = scmp.eq.s32.totalorder %s28, 1
      %p235 = por %p233, %p234
      %p236 = scmp.ne.s32.totalorder %s227, %s228
      %p237 = scmp.eq.s32.totalorder %s28, 0
      %p238 = por %p236, %p237
      %p239 = scmp.ne.s32.totalorder %s227, %s228
      %p240 = scmp.eq.s32.totalorder %s29, 1
      %p241 = por %p239, %p240
      %p243 = scmp.ne.s32.totalorder %s228, %s242
      %p244 = scmp.eq.s32.totalorder %s29, 0
      %p245 = por %p243, %p244
      %s247 = sadd.s32 %s246, 1
      %p250 = scmp.eq.s32.totalorder %s23, 1
      %p251 = scmp.ne.s32.totalorder %s246, %s248
      %p252 = scmp.eq.s32.totalorder %s23, 0
      %p253 = por %p251, %p252
      %p254 = scmp.ne.s32.totalorder %s246, %s248
      %p255 = scmp.eq.s32.totalorder %s28, 1
      %p256 = por %p254, %p255
      %p257 = scmp.ne.s32.totalorder %s248, %s249
      %p258 = scmp.eq.s32.totalorder %s28, 0
      %p259 = por %p257, %p258
      %p260 = scmp.ne.s32.totalorder %s248, %s249
      %p261 = scmp.eq.s32.totalorder %s29, 1
      %p262 = por %p260, %p261
      %p264 = scmp.ne.s32.totalorder %s249, %s263
      %p265 = scmp.eq.s32.totalorder %s29, 0
      %p266 = por %p264, %p265
      %s268 = sadd.s32 %s267, 1
      %p271 = scmp.eq.s32.totalorder %s23, 1
      %p272 = scmp.ne.s32.totalorder %s267, %s269
      %p273 = scmp.eq.s32.totalorder %s23, 0
      %p274 = por %p272, %p273
      %p275 = scmp.ne.s32.totalorder %s267, %s269
      %p276 = scmp.eq.s32.totalorder %s28, 1
      %p277 = por %p275, %p276
      %p278 = scmp.ne.s32.totalorder %s269, %s270
      %p279 = scmp.eq.s32.totalorder %s28, 0
      %p280 = por %p278, %p279
      %p281 = scmp.ne.s32.totalorder %s269, %s270
      %p282 = scmp.eq.s32.totalorder %s29, 1
      %p283 = por %p281, %p282
      %p285 = scmp.ne.s32.totalorder %s270, %s284
      %p286 = scmp.eq.s32.totalorder %s29, 0
      %p287 = por %p285, %p286
      %s288 = ssub.s32 %s23, %s30
      %p289 = scmp.eq.s32.totalorder %s288, 0
      %s291 = sadd.s32 %s290, 1
      %s292 = scalar_select %p289, %s290, %s291
      %p295 = pneg %p289
      %p296 = scmp.eq.s32.totalorder %s23, 1
      %p297 = por %p295, %p296
      %p298 = scmp.ne.s32.totalorder %s290, %s293
      %p299 = scmp.eq.s32.totalorder %s23, 0
      %p300 = por %p298, %p299
      %p301 = scmp.ne.s32.totalorder %s290, %s293
      %p302 = scmp.eq.s32.totalorder %s28, 1
      %p303 = por %p301, %p302
      %p304 = scmp.ne.s32.totalorder %s293, %s294
      %p305 = scmp.eq.s32.totalorder %s28, 0
      %p306 = por %p304, %p305
      %p307 = scmp.ne.s32.totalorder %s293, %s294
      %p308 = scmp.eq.s32.totalorder %s29, 1
      %p309 = por %p307, %p308
      %p311 = scmp.ne.s32.totalorder %s294, %s310
      %p312 = scmp.eq.s32.totalorder %s29, 0
      %p313 = por %p311, %p312
      %p314 = scmp.le.s32.totalorder 1, %s23
      %p315 = scmp.lt.s32.totalorder %s23, 3
      %p316 = pnand %p314, %p315
      %p317 = pneg %p316
      // Predicated region
      $region9: #{tpu_custom_call.1} parent=5 // pred_check
        _
      $region10: #{tpu_custom_call.1} parent=5 // pred_check_branch
        %319 = sbr.rel (%p316) target = $region12
      $region11: #{tpu_custom_call.1} parent=5 // pred_region
        %s320 = ssub.s32 %s23, 1
        // Predicated region
        $region13: #{tpu_custom_call.1} parent=11 // pred_check
          %p321 = pneg %p70
        $region14: #{tpu_custom_call.1} parent=11 // pred_check_branch
          %323 = sbr.rel (%p321) target = $region16
        $region15: #{tpu_custom_call.1} parent=11 // pred_region
          _
        $region16: #{tpu_custom_call.1} parent=11 // pred_fallthru
          _
        // Predicated region
        $region17: #{tpu_custom_call.1} parent=11 // pred_check
          %p324 = pneg %p91
        $region18: #{tpu_custom_call.1} parent=11 // pred_check_branch
          %326 = sbr.rel (%p324) target = $region20
        $region19: #{tpu_custom_call.1} parent=11 // pred_region
          %s328 = ssub.s32 80, 80
          %329 = vsyncadd [#allocation4], %s328
          %s331 = sshll.u32 [#allocation3], 4
          %s332 = int_to_ptr.vmem [resolvable:$true] %s331
          %334 = dma.hbm_to_vmem [thread:$0]  %s2, 80, %s332, [#allocation4]
        $region20: #{tpu_custom_call.1} parent=11 // pred_fallthru
          _
        // Predicated region
        $region21: #{tpu_custom_call.1} parent=11 // pred_check
          %p335 = pneg %p112
        $region22: #{tpu_custom_call.1} parent=11 // pred_check_branch
          %337 = sbr.rel (%p335) target = $region24
        $region23: #{tpu_custom_call.1} parent=11 // pred_region
          _
        $region24: #{tpu_custom_call.1} parent=11 // pred_fallthru
          _
        // Predicated region
        $region25: #{tpu_custom_call.1} parent=11 // pred_check
          %p338 = pneg %p133
        $region26: #{tpu_custom_call.1} parent=11 // pred_check_branch
          %340 = sbr.rel (%p338) target = $region28
        $region27: #{tpu_custom_call.1} parent=11 // pred_region
          _
        $region28: #{tpu_custom_call.1} parent=11 // pred_fallthru
          _
        // Predicated region
        $region29: #{tpu_custom_call.1} parent=11 // pred_check
          %p341 = pneg %p154
        $region30: #{tpu_custom_call.1} parent=11 // pred_check_branch
          %343 = sbr.rel (%p341) target = $region32
        $region31: #{tpu_custom_call.1} parent=11 // pred_region
          %s345 = ssub.s32 5120, 5120
          %346 = vsyncadd [#allocation7], %s345
          %s347 = sshll.u32 [#allocation6], 4
          %s348 = int_to_ptr.vmem [resolvable:$true] %s347
          %353 = dma.hbm_to_vmem [thread:$0]  %s5, 5120, %s348, [#allocation7], 64, 64, 4
        $region32: #{tpu_custom_call.1} parent=11 // pred_fallthru
          _
        // Predicated region
        $region33: #{tpu_custom_call.1} parent=11 // pred_check
          %p354 = pneg %p175
        $region34: #{tpu_custom_call.1} parent=11 // pred_check_branch
          %356 = sbr.rel (%p354) target = $region36
        $region35: #{tpu_custom_call.1} parent=11 // pred_region
          %s358 = ssub.s32 128, 128
          %359 = vsyncadd [#allocation7], %s358
          %s361 = sshll.u32 [#allocation8], 4
          %s362 = int_to_ptr.vmem [resolvable:$true] %s361
          %364 = dma.hbm_to_vmem [thread:$0]  %s6, 128, %s362, [#allocation7]
        $region36: #{tpu_custom_call.1} parent=11 // pred_fallthru
          _
        // Predicated region
        $region37: #{tpu_custom_call.1} parent=11 // pred_check
          %p365 = pneg %p196
        $region38: #{tpu_custom_call.1} parent=11 // pred_check_branch
          %367 = sbr.rel (%p365) target = $region40
        $region39: #{tpu_custom_call.1} parent=11 // pred_region
          _
        $region40: #{tpu_custom_call.1} parent=11 // pred_fallthru
          _
        // Predicated region
        $region41: #{tpu_custom_call.1} parent=11 // pred_check
          %p368 = pneg %p217
        $region42: #{tpu_custom_call.1} parent=11 // pred_check_branch
          %370 = sbr.rel (%p368) target = $region44
        $region43: #{tpu_custom_call.1} parent=11 // pred_region
          _
        $region44: #{tpu_custom_call.1} parent=11 // pred_fallthru
          _
        // Predicated region
        $region45: #{tpu_custom_call.1} parent=11 // pred_check
          %p371 = pneg %p238
        $region46: #{tpu_custom_call.1} parent=11 // pred_check_branch
          %373 = sbr.rel (%p371) target = $region48
        $region47: #{tpu_custom_call.1} parent=11 // pred_region
          _
        $region48: #{tpu_custom_call.1} parent=11 // pred_fallthru
          _
        // Predicated region
        $region49: #{tpu_custom_call.1} parent=11 // pred_check
          %p374 = pneg %p259
        $region50: #{tpu_custom_call.1} parent=11 // pred_check_branch
          %376 = sbr.rel (%p374) target = $region52
        $region51: #{tpu_custom_call.1} parent=11 // pred_region
          _
        $region52: #{tpu_custom_call.1} parent=11 // pred_fallthru
          _
        // Predicated region
        $region53: #{tpu_custom_call.1} parent=11 // pred_check
          %p377 = pneg %p280
        $region54: #{tpu_custom_call.1} parent=11 // pred_check_branch
          %379 = sbr.rel (%p377) target = $region56
        $region55: #{tpu_custom_call.1} parent=11 // pred_region
          _
        $region56: #{tpu_custom_call.1} parent=11 // pred_fallthru
          _
      $region12: #{tpu_custom_call.1} parent=5 // pred_fallthru
        _
      %p380 = scmp.lt.s32.totalorder %s23, 2
      // Predicated region
      $region57: #{tpu_custom_call.1} parent=5 // pred_check
        %p381 = pneg %p380
      $region58: #{tpu_custom_call.1} parent=5 // pred_check_branch
        %383 = sbr.rel (%p381) target = $region60
      $region59: #{tpu_custom_call.1} parent=5 // pred_region
        // Predicated region
        $region61: #{tpu_custom_call.1} parent=59 // pred_check
          %p384 = pneg %p43
        $region62: #{tpu_custom_call.1} parent=59 // pred_check_branch
          %386 = sbr.rel (%p384) target = $region64
        $region63: #{tpu_custom_call.1} parent=59 // pred_region
          %p387 = scmp.lt.s32.totalorder %s23, 1
          %s388 = scalar_select %p387, %s23, 1
          %s389 = smul.addr %s388, 8
          %s390 = scalar_lea.vmem %s0, %s389
        $region64: #{tpu_custom_call.1} parent=59 // pred_fallthru
          _
      $region60: #{tpu_custom_call.1} parent=5 // pred_fallthru
        _
      %p391 = scmp.le.s32.totalorder 1, %s23
      %p392 = scmp.lt.s32.totalorder %s23, 3
      %p393 = pnand %p391, %p392
      %p394 = pneg %p393
      // Predicated region
      $region65: #{tpu_custom_call.1} parent=5 // pred_check
        _
      $region66: #{tpu_custom_call.1} parent=5 // pred_check_branch
        %396 = sbr.rel (%p393) target = $region68
      $region67: #{tpu_custom_call.1} parent=5 // pred_region
        %s397 = ssub.s32 %s23, 1
        // Predicated region
        $region69: #{tpu_custom_call.1} parent=67 // pred_check
          %p398 = pneg %p91
        $region70: #{tpu_custom_call.1} parent=67 // pred_check_branch
          %400 = sbr.rel (%p398) target = $region72
        $region71: #{tpu_custom_call.1} parent=67 // pred_region
          %401 = dma.done [#allocation4], 80
        $region72: #{tpu_custom_call.1} parent=67 // pred_fallthru
          _
        // Predicated region
        $region73: #{tpu_custom_call.1} parent=67 // pred_check
          %p402 = pneg %p154
        $region74: #{tpu_custom_call.1} parent=67 // pred_check_branch
          %404 = sbr.rel (%p402) target = $region76
        $region75: #{tpu_custom_call.1} parent=67 // pred_region
          %405 = dma.done [#allocation7], 5120
        $region76: #{tpu_custom_call.1} parent=67 // pred_fallthru
          _
        // Predicated region
        $region77: #{tpu_custom_call.1} parent=67 // pred_check
          %p406 = pneg %p175
        $region78: #{tpu_custom_call.1} parent=67 // pred_check_branch
          %408 = sbr.rel (%p406) target = $region80
        $region79: #{tpu_custom_call.1} parent=67 // pred_region
          %409 = dma.done [#allocation7], 128
        $region80: #{tpu_custom_call.1} parent=67 // pred_fallthru
          _
        %p410 = scmp.lt.s32.totalorder %s28, 1
        %s411 = scalar_select %p410, %s28, 1
        %s412 = smul.addr %s411, 8
        %s413 = scalar_lea.vmem %s0, %s412
        %p414 = pneg %p49
        %p415 = pneg %p46
        %p416 = pneg %p70
        %p417 = pneg %p67
        %p418 = pneg %p91
        %p419 = pneg %p88
        %p420 = pneg %p112
        %p421 = pneg %p109
        %p422 = pneg %p133
        %p423 = pneg %p130
        %p424 = pneg %p154
        %p425 = pneg %p151
        %p426 = pneg %p175
        %p427 = pneg %p172
        %p428 = pneg %p196
        %p429 = pneg %p193
        %p430 = pneg %p217
        %p431 = pneg %p214
        %p432 = pneg %p238
        %p433 = pneg %p235
        %p434 = pneg %p259
        %p435 = pneg %p256
        %p436 = pneg %p280
        %p437 = pneg %p277
        %p438 = pneg %p306
        %p439 = pneg %p303
        %s440 = sand.u32 %s293, 1
        %s441 = scalar_lea.sflag [#allocation5], %s440
        %s442 = sand.u32 %s293, 1
        %s443 = smul.addr %s442, 8
        %s444 = scalar_lea.vmem [#allocation9], %s443
        %p445 = scmp.lt.s32.totalorder %s28, 1
        %s446 = scalar_select %p445, %s28, 1
        %s447 = smul.addr %s446, 8
        %s448 = scalar_lea.vmem %s0, %s447
        %v450 = vld [vmem:[%s448] sm:$0xff]
        %v451 = vpack.c.bf16 %v450, %v450
        %v452 = vld [vmem:[%s1] sm:$0xff]
        %v453 = vld [vmem:[%s1 + $0x8] sm:$0xff]
        %v454 = vld [vmem:[%s1 + $0x10] sm:$0xf]
        %v455 = vld [vmem:[%s1 + $0x14] sm:$0xff]
        %v456 = vld [vmem:[%s1 + $0x1c] sm:$0xff]
        %v457 = vld [vmem:[%s1 + $0x24] sm:$0xf]
        %v458 = vld [vmem:[%s1 + $0x28] sm:$0xff]
        %v459 = vld [vmem:[%s1 + $0x30] sm:$0xff]
        %v460 = vld [vmem:[%s1 + $0x38] sm:$0xf]
        %v461 = vld [vmem:[%s1 + $0x3c] sm:$0xff]
        %v462 = vld [vmem:[%s1 + $0x44] sm:$0xff]
        %v463 = vld [vmem:[%s1 + $0x4c] sm:$0xf]
        %v464 = vld [vmem:[#allocation3] sm:$0x1f]
        %v466 = vlaneseq
        %v467 = vshrl.u32 %v466, 7
        %v468 = vsub.s32 0, %v467
        %v469 = vrot.slane %v464, %v468
        %v470 = vlaneseq
        %v471 = vshrl.u32 %v470, 7
        %v472 = vsub.s32 1, %v471
        %v473 = vrot.slane %v464, %v472
        %v474 = vlaneseq
        %v475 = vshrl.u32 %v474, 7
        %v476 = vsub.s32 2, %v475
        %v477 = vrot.slane %v464, %v476
        %v478 = vlaneseq
        %v479 = vshrl.u32 %v478, 7
        %v480 = vsub.s32 3, %v479
        %v481 = vrot.slane %v464, %v480
        %v482 = vlaneseq
        %v483 = vshrl.u32 %v482, 7
        %v484 = vsub.s32 4, %v483
        %v485 = vrot.slane %v464, %v484
        %v503 = vunpack.c.l.b16 %v452
        %v504 = vunpack.c.h.b16 %v452
        %v505 = vunpack.c.l.b16 %v453
        %v506 = vunpack.c.h.b16 %v453
        %v507 = vunpack.c.l.b16 %v454
        %v508 = vunpack.c.l.b16 %v455
        %v509 = vunpack.c.h.b16 %v455
        %v510 = vunpack.c.l.b16 %v456
        %v511 = vunpack.c.h.b16 %v456
        %v512 = vunpack.c.l.b16 %v457
        %v513 = vunpack.c.l.b16 %v458
        %v514 = vunpack.c.h.b16 %v458
        %v515 = vunpack.c.l.b16 %v459
        %v516 = vunpack.c.h.b16 %v459
        %v517 = vunpack.c.l.b16 %v460
        %v518 = vunpack.c.l.b16 %v461
        %v519 = vunpack.c.h.b16 %v461
        %v520 = vunpack.c.l.b16 %v462
        %v521 = vunpack.c.h.b16 %v462
        %v522 = vunpack.c.l.b16 %v463
        %v523 = vpack.c.b16 %v508, %v503
        %v524 = vpack.c.b16 %v509, %v504
        %v525 = vpack.c.b16 %v510, %v505
        %v526 = vpack.c.b16 %v511, %v506
        %v527 = vpack.c.b16 %v512, %v507
        %v528 = vpack.c.b16 %v518, %v513
        %v529 = vpack.c.b16 %v519, %v514
        %v530 = vpack.c.b16 %v520, %v515
        %v531 = vpack.c.b16 %v521, %v516
        %v532 = vpack.c.b16 %v522, %v517
        %vm543 = vcmask 261120
        %v545 = vsel %vm543, %v451, 0
        %547 = vmatprep.subr.bf16.mxu0 0
        %548 = vmatpush1.bf16.msra.mxu0 0
        %549 = vmatprep.subr.bf16.mxu0 0
        %550 = vmatpush1.bf16.msra.mxu0 0
        %551 = vmatprep.subr.bf16.mxu0 0
        %552 = vmatpush1.bf16.msra.mxu0 0
        %553 = vmatprep.subr.bf16.mxu0 0
        %554 = vmatpush1.bf16.msra.mxu0 0
        %555 = vmatprep.subr.bf16.mxu0 0
        %556 = vmatpush1.bf16.msra.mxu0 0
        %557 = vmatprep.subr.bf16.mxu0 0
        %558 = vmatpush1.bf16.msra.mxu0 0
        %559 = vmatprep.subr.bf16.mxu0 %v529
        %560 = vmatpush1.bf16.msra.mxu0 %v528
        %561 = vmatprep.subr.bf16.mxu0 %v524
        %562 = vmatpush1.bf16.msra.mxu0 %v523
        %563 = vmatprep.subr.bf16.mxu0 0
        %564 = vmatpush2.bf16.msra.mxu0 0
        %565 = vmatprep.subr.bf16.mxu0 0
        %566 = vmatpush2.bf16.msra.mxu0 0
        %567 = vmatprep.subr.bf16.mxu0 0
        %568 = vmatpush2.bf16.msra.mxu0 0
        %569 = vmatprep.subr.bf16.mxu0 0
        %570 = vmatpush2.bf16.msra.mxu0 0
        %571 = vmatprep.subr.bf16.mxu0 0
        %572 = vmatpush2.bf16.msra.mxu0 0
        %573 = vmatprep.subr.bf16.mxu0 0
        %574 = vmatpush2.bf16.msra.mxu0 0
        %575 = vmatprep.subr.bf16.mxu0 0
        %576 = vmatpush2.bf16.msra.mxu0 0
        %577 = vmatprep.subr.bf16.mxu0 0
        %578 = vmatpush2.bf16.msra.mxu0 0
        %579 = vmatprep.mubr.bf16.mxu0 0
        %580 = vmatmul.mubr.bf16.gmra.mxu0 %v545
        %v581 = vpop.f32.mrf.mxu0
        %v582 = vadd.f32 %v469, %v581
        %v583 = vpop.f32.mrf.mxu0
        %v584 = vadd.f32 %v473, %v583
        %v585 = vpop.f32.mrf.mxu0
        %v586 = vpop.f32.mrf.mxu0
        %587 = vdwg.mxu0
        %588 = vmatprep.subr.bf16.mxu0 0
        %589 = vmatpush1.bf16.msra.mxu0 0
        %590 = vmatprep.subr.bf16.mxu0 0
        %591 = vmatpush1.bf16.msra.mxu0 0
        %592 = vmatprep.subr.bf16.mxu0 0
        %593 = vmatpush1.bf16.msra.mxu0 0
        %594 = vmatprep.subr.bf16.mxu0 0
        %595 = vmatpush1.bf16.msra.mxu0 0
        %596 = vmatprep.subr.bf16.mxu0 0
        %597 = vmatpush1.bf16.msra.mxu0 0
        %598 = vmatprep.subr.bf16.mxu0 0
        %599 = vmatpush1.bf16.msra.mxu0 0
        %600 = vmatprep.subr.bf16.mxu0 %v531
        %601 = vmatpush1.bf16.msra.mxu0 %v530
        %602 = vmatprep.subr.bf16.mxu0 %v526
        %603 = vmatpush1.bf16.msra.mxu0 %v525
        %604 = vmatprep.subr.bf16.mxu0 0
        %605 = vmatpush2.bf16.msra.mxu0 0
        %606 = vmatprep.subr.bf16.mxu0 0
        %607 = vmatpush2.bf16.msra.mxu0 0
        %608 = vmatprep.subr.bf16.mxu0 0
        %609 = vmatpush2.bf16.msra.mxu0 0
        %610 = vmatprep.subr.bf16.mxu0 0
        %611 = vmatpush2.bf16.msra.mxu0 0
        %612 = vmatprep.subr.bf16.mxu0 0
        %613 = vmatpush2.bf16.msra.mxu0 0
        %614 = vmatprep.subr.bf16.mxu0 0
        %615 = vmatpush2.bf16.msra.mxu0 0
        %616 = vmatprep.subr.bf16.mxu0 0
        %617 = vmatpush2.bf16.msra.mxu0 0
        %618 = vmatprep.subr.bf16.mxu0 0
        %619 = vmatpush2.bf16.msra.mxu0 0
        %620 = vmatprep.mubr.bf16.mxu0 0
        %621 = vmatmul.mubr.bf16.gmra.mxu0 %v545
        %v622 = vpop.f32.mrf.mxu0
        %v623 = vadd.f32 %v477, %v622
        %v624 = vpop.f32.mrf.mxu0
        %v625 = vadd.f32 %v481, %v624
        %v626 = vpop.f32.mrf.mxu0
        %v627 = vpop.f32.mrf.mxu0
        %628 = vdwg.mxu0
        %629 = vmatprep.subr.bf16.mxu0 0
        %630 = vmatpush1.bf16.msra.mxu0 0
        %631 = vmatprep.subr.bf16.mxu0 0
        %632 = vmatpush1.bf16.msra.mxu0 0
        %633 = vmatprep.subr.bf16.mxu0 0
        %634 = vmatpush1.bf16.msra.mxu0 0
        %635 = vmatprep.subr.bf16.mxu0 0
        %636 = vmatpush1.bf16.msra.mxu0 0
        %637 = vmatprep.subr.bf16.mxu0 0
        %638 = vmatpush1.bf16.msra.mxu0 0
        %639 = vmatprep.subr.bf16.mxu0 0
        %640 = vmatpush1.bf16.msra.mxu0 0
        %641 = vmatprep.subr.bf16.mxu0 0
        %642 = vmatpush1.bf16.msra.mxu0 %v532
        %643 = vmatprep.subr.bf16.mxu0 0
        %644 = vmatpush1.bf16.msra.mxu0 %v527
        %645 = vmatprep.subr.bf16.mxu0 0
        %646 = vmatpush2.bf16.msra.mxu0 0
        %647 = vmatprep.subr.bf16.mxu0 0
        %648 = vmatpush2.bf16.msra.mxu0 0
        %649 = vmatprep.subr.bf16.mxu0 0
        %650 = vmatpush2.bf16.msra.mxu0 0
        %651 = vmatprep.subr.bf16.mxu0 0
        %652 = vmatpush2.bf16.msra.mxu0 0
        %653 = vmatprep.subr.bf16.mxu0 0
        %654 = vmatpush2.bf16.msra.mxu0 0
        %655 = vmatprep.subr.bf16.mxu0 0
        %656 = vmatpush2.bf16.msra.mxu0 0
        %657 = vmatprep.subr.bf16.mxu0 0
        %658 = vmatpush2.bf16.msra.mxu0 0
        %659 = vmatprep.subr.bf16.mxu0 0
        %660 = vmatpush2.bf16.msra.mxu0 0
        %661 = vmatprep.mubr.bf16.mxu0 0
        %662 = vmatmul.mubr.bf16.gmra.mxu0 %v545
        %v663 = vpop.f32.mrf.mxu0
        %v664 = vadd.f32 %v485, %v663
        %v665 = vpop.f32.mrf.mxu0
        %v666 = vpop.f32.mrf.mxu0
        %v667 = vpop.f32.mrf.mxu0
        %668 = vdwg.mxu0
        %v669 = vmul.f32 %v582, 0.5
        %v670 = vmul.f32 %v584, 0.5
        %v671 = vmul.f32 %v623, 0.5
        %v672 = vmul.f32 %v625, 0.5
        %v673 = vmul.f32 %v664, 0.5
        %v674 = vtanh.pop %v669
        %v675 = vtanh.pop %v670
        %v676 = vtanh.pop %v671
        %v677 = vtanh.pop %v672
        %v678 = vtanh.pop %v673
        %v679 = vmul.f32 %v674, 0.5
        %v680 = vmul.f32 %v675, 0.5
        %v681 = vmul.f32 %v676, 0.5
        %v682 = vmul.f32 %v677, 0.5
        %v683 = vmul.f32 %v678, 0.5
        %v684 = vadd.f32 %v679, 0.5
        %v685 = vadd.f32 %v680, 0.5
        %v686 = vadd.f32 %v681, 0.5
        %v687 = vadd.f32 %v682, 0.5
        %v688 = vadd.f32 %v683, 0.5
        %v689 = vmul.f32 %v582, %v684
        %v690 = vmul.f32 %v584, %v685
        %v691 = vmul.f32 %v623, %v686
        %v692 = vmul.f32 %v625, %v687
        %v693 = vmul.f32 %v664, %v688
        %v694 = vpack.c.bf16 %v689, %v689
        %v695 = vld [vmem:[%s3] sm:$0xf]
        %v696 = vld [vmem:[%s3 + $0x4] sm:$0xf]
        %v697 = vld [vmem:[%s3 + $0x8] sm:$0xf]
        %v698 = vld [vmem:[%s3 + $0xc] sm:$0xf]
        %v699 = vld [vmem:[%s3 + $0x10] sm:$0xf]
        %v700 = vld [vmem:[%s3 + $0x14] sm:$0xf]
        %v701 = vld [vmem:[%s3 + $0x18] sm:$0xf]
        %v702 = vld [vmem:[%s3 + $0x1c] sm:$0xf]
        %v703 = vld [vmem:[%s3 + $0x20] sm:$0xf]
        %v704 = vld [vmem:[%s3 + $0x24] sm:$0xf]
        %v705 = vld [vmem:[%s3 + $0x28] sm:$0xf]
        %v706 = vld [vmem:[%s3 + $0x2c] sm:$0xf]
        %v707 = vld [vmem:[%s3 + $0x30] sm:$0xf]
        %v708 = vld [vmem:[%s3 + $0x34] sm:$0xf]
        %v709 = vld [vmem:[%s3 + $0x38] sm:$0xf]
        %v710 = vld [vmem:[%s3 + $0x3c] sm:$0xf]
        %v711 = vld [vmem:[%s4] sm:$0x1]
        %v712 = vlaneseq
        %v713 = vshrl.u32 %v712, 7
        %v714 = vsub.s32 0, %v713
        %v715 = vrot.slane %v711, %v714
        %v732 = vunpack.c.l.b16 %v695
        %v733 = vunpack.c.l.b16 %v696
        %v734 = vunpack.c.l.b16 %v697
        %v735 = vunpack.c.l.b16 %v698
        %v736 = vunpack.c.l.b16 %v699
        %v737 = vunpack.c.l.b16 %v700
        %v738 = vunpack.c.l.b16 %v701
        %v739 = vunpack.c.l.b16 %v702
        %v740 = vunpack.c.l.b16 %v703
        %v741 = vunpack.c.l.b16 %v704
        %v742 = vunpack.c.l.b16 %v705
        %v743 = vunpack.c.l.b16 %v706
        %v744 = vunpack.c.l.b16 %v707
        %v745 = vunpack.c.l.b16 %v708
        %v746 = vunpack.c.l.b16 %v709
        %v747 = vunpack.c.l.b16 %v710
        %v748 = vpack.c.b16 %v733, %v732
        %v749 = vpack.c.b16 %v735, %v734
        %v750 = vpack.c.b16 %v737, %v736
        %v751 = vpack.c.b16 %v739, %v738
        %v752 = vpack.c.b16 %v741, %v740
        %v753 = vpack.c.b16 %v743, %v742
        %v754 = vpack.c.b16 %v745, %v744
        %v755 = vpack.c.b16 %v747, %v746
        %764 = vmatprep.subr.bf16.mxu0 0
        %765 = vmatpush1.bf16.msra.mxu0 %v755
        %766 = vmatprep.subr.bf16.mxu0 0
        %767 = vmatpush1.bf16.msra.mxu0 %v754
        %768 = vmatprep.subr.bf16.mxu0 0
        %769 = vmatpush1.bf16.msra.mxu0 %v753
        %770 = vmatprep.subr.bf16.mxu0 0
        %771 = vmatpush1.bf16.msra.mxu0 %v752
        %772 = vmatprep.subr.bf16.mxu0 0
        %773 = vmatpush1.bf16.msra.mxu0 %v751
        %774 = vmatprep.subr.bf16.mxu0 0
        %775 = vmatpush1.bf16.msra.mxu0 %v750
        %776 = vmatprep.subr.bf16.mxu0 0
        %777 = vmatpush1.bf16.msra.mxu0 %v749
        %778 = vmatprep.subr.bf16.mxu0 0
        %779 = vmatpush1.bf16.msra.mxu0 %v748
        %780 = vmatprep.subr.bf16.mxu0 0
        %781 = vmatpush2.bf16.msra.mxu0 0
        %782 = vmatprep.subr.bf16.mxu0 0
        %783 = vmatpush2.bf16.msra.mxu0 0
        %784 = vmatprep.subr.bf16.mxu0 0
        %785 = vmatpush2.bf16.msra.mxu0 0
        %786 = vmatprep.subr.bf16.mxu0 0
        %787 = vmatpush2.bf16.msra.mxu0 0
        %788 = vmatprep.subr.bf16.mxu0 0
        %789 = vmatpush2.bf16.msra.mxu0 0
        %790 = vmatprep.subr.bf16.mxu0 0
        %791 = vmatpush2.bf16.msra.mxu0 0
        %792 = vmatprep.subr.bf16.mxu0 0
        %793 = vmatpush2.bf16.msra.mxu0 0
        %794 = vmatprep.subr.bf16.mxu0 0
        %795 = vmatpush2.bf16.msra.mxu0 0
        %796 = vmatprep.mubr.bf16.mxu0 0
        %797 = vmatmul.mubr.bf16.gmra.mxu0 %v694
        %v798 = vpop.f32.mrf.mxu0
        %v799 = vadd.f32 %v715, %v798
        %v800 = vpop.f32.mrf.mxu0
        %v801 = vpop.f32.mrf.mxu0
        %v802 = vpop.f32.mrf.mxu0
        %803 = vdwg.mxu0
        %v804 = vmul.f32 %v799, 0.5
        %v805 = vtanh.pop %v804
        %v806 = vmul.f32 %v805, 0.5
        %v807 = vadd.f32 %v806, 0.5
        %v808 = vmul.f32 %v799, %v807
        %v809 = vpack.c.bf16 %v808, %v808
        %v810 = vld [vmem:[#allocation6] sm:$0xf]
        %v811 = vld [vmem:[#allocation6 + $0x4] sm:$0xf]
        %v812 = vld [vmem:[#allocation6 + $0x8] sm:$0xf]
        %v813 = vld [vmem:[#allocation6 + $0xc] sm:$0xf]
        %v814 = vld [vmem:[#allocation6 + $0x10] sm:$0xf]
        %v815 = vld [vmem:[#allocation6 + $0x14] sm:$0xf]
        %v816 = vld [vmem:[#allocation6 + $0x18] sm:$0xf]
        %v817 = vld [vmem:[#allocation6 + $0x1c] sm:$0xf]
        %v818 = vld [vmem:[#allocation6 + $0x20] sm:$0xf]
        %v819 = vld [vmem:[#allocation6 + $0x24] sm:$0xf]
        %v820 = vld [vmem:[#allocation6 + $0x28] sm:$0xf]
        %v821 = vld [vmem:[#allocation6 + $0x2c] sm:$0xf]
        %v822 = vld [vmem:[#allocation6 + $0x30] sm:$0xf]
        %v823 = vld [vmem:[#allocation6 + $0x34] sm:$0xf]
        %v824 = vld [vmem:[#allocation6 + $0x38] sm:$0xf]
        %v825 = vld [vmem:[#allocation6 + $0x3c] sm:$0xf]
        %v826 = vld [vmem:[#allocation8] sm:$0x1]
        %v827 = vlaneseq
        %v828 = vshrl.u32 %v827, 7
        %v829 = vsub.s32 0, %v828
        %v830 = vrot.slane %v826, %v829
        %v847 = vunpack.c.l.b16 %v810
        %v848 = vunpack.c.l.b16 %v811
        %v849 = vunpack.c.l.b16 %v812
        %v850 = vunpack.c.l.b16 %v813
        %v851 = vunpack.c.l.b16 %v814
        %v852 = vunpack.c.l.b16 %v815
        %v853 = vunpack.c.l.b16 %v816
        %v854 = vunpack.c.l.b16 %v817
        %v855 = vunpack.c.l.b16 %v818
        %v856 = vunpack.c.l.b16 %v819
        %v857 = vunpack.c.l.b16 %v820
        %v858 = vunpack.c.l.b16 %v821
        %v859 = vunpack.c.l.b16 %v822
        %v860 = vunpack.c.l.b16 %v823
        %v861 = vunpack.c.l.b16 %v824
        %v862 = vunpack.c.l.b16 %v825
        %v863 = vpack.c.b16 %v848, %v847
        %v864 = vpack.c.b16 %v850, %v849
        %v865 = vpack.c.b16 %v852, %v851
        %v866 = vpack.c.b16 %v854, %v853
        %v867 = vpack.c.b16 %v856, %v855
        %v868 = vpack.c.b16 %v858, %v857
        %v869 = vpack.c.b16 %v860, %v859
        %v870 = vpack.c.b16 %v862, %v861
        %879 = vmatprep.subr.bf16.mxu0 0
        %880 = vmatpush1.bf16.msra.mxu0 %v870
        %881 = vmatprep.subr.bf16.mxu0 0
        %882 = vmatpush1.bf16.msra.mxu0 %v869
        %883 = vmatprep.subr.bf16.mxu0 0
        %884 = vmatpush1.bf16.msra.mxu0 %v868
        %885 = vmatprep.subr.bf16.mxu0 0
        %886 = vmatpush1.bf16.msra.mxu0 %v867
        %887 = vmatprep.subr.bf16.mxu0 0
        %888 = vmatpush1.bf16.msra.mxu0 %v866
        %889 = vmatprep.subr.bf16.mxu0 0
        %890 = vmatpush1.bf16.msra.mxu0 %v865
        %891 = vmatprep.subr.bf16.mxu0 0
        %892 = vmatpush1.bf16.msra.mxu0 %v864
        %893 = vmatprep.subr.bf16.mxu0 0
        %894 = vmatpush1.bf16.msra.mxu0 %v863
        %895 = vmatprep.subr.bf16.mxu0 0
        %896 = vmatpush2.bf16.msra.mxu0 0
        %897 = vmatprep.subr.bf16.mxu0 0
        %898 = vmatpush2.bf16.msra.mxu0 0
        %899 = vmatprep.subr.bf16.mxu0 0
        %900 = vmatpush2.bf16.msra.mxu0 0
        %901 = vmatprep.subr.bf16.mxu0 0
        %902 = vmatpush2.bf16.msra.mxu0 0
        %903 = vmatprep.subr.bf16.mxu0 0
        %904 = vmatpush2.bf16.msra.mxu0 0
        %905 = vmatprep.subr.bf16.mxu0 0
        %906 = vmatpush2.bf16.msra.mxu0 0
        %907 = vmatprep.subr.bf16.mxu0 0
        %908 = vmatpush2.bf16.msra.mxu0 0
        %909 = vmatprep.subr.bf16.mxu0 0
        %910 = vmatpush2.bf16.msra.mxu0 0
        %911 = vmatprep.mubr.bf16.mxu0 0
        %912 = vmatmul.mubr.bf16.gmra.mxu0 %v809
        %v913 = vpop.f32.mrf.mxu0
        %v914 = vadd.f32 %v830, %v913
        %v915 = vpop.f32.mrf.mxu0
        %v916 = vpop.f32.mrf.mxu0
        %v917 = vpop.f32.mrf.mxu0
        %918 = vdwg.mxu0
        %v919 = vmul.f32 %v914, 0.5
        %v920 = vtanh.pop %v919
        %v921 = vmul.f32 %v920, 0.5
        %v922 = vadd.f32 %v921, 0.5
        %v923 = vmul.f32 %v914, %v922
        %v924 = vpack.c.bf16 %v923, %v923
        %925 = vst [vmem:[#allocation2] sm:$0xf] %v924
        %v926 = vpack.c.bf16 %v690, %v690
        %s927 = scalar_lea.vmem %s3, 64
        %v928 = vld [vmem:[%s927] sm:$0xf]
        %v929 = vld [vmem:[%s927 + $0x4] sm:$0xf]
        %v930 = vld [vmem:[%s927 + $0x8] sm:$0xf]
        %v931 = vld [vmem:[%s927 + $0xc] sm:$0xf]
        %v932 = vld [vmem:[%s927 + $0x10] sm:$0xf]
        %v933 = vld [vmem:[%s927 + $0x14] sm:$0xf]
        %v934 = vld [vmem:[%s927 + $0x18] sm:$0xf]
        %v935 = vld [vmem:[%s927 + $0x1c] sm:$0xf]
        %v936 = vld [vmem:[%s927 + $0x20] sm:$0xf]
        %v937 = vld [vmem:[%s927 + $0x24] sm:$0xf]
        %v938 = vld [vmem:[%s927 + $0x28] sm:$0xf]
        %v939 = vld [vmem:[%s927 + $0x2c] sm:$0xf]
        %v940 = vld [vmem:[%s927 + $0x30] sm:$0xf]
        %v941 = vld [vmem:[%s927 + $0x34] sm:$0xf]
        %v942 = vld [vmem:[%s927 + $0x38] sm:$0xf]
        %v943 = vld [vmem:[%s927 + $0x3c] sm:$0xf]
        %v944 = vld [vmem:[%s4 + $0x1] sm:$0x1]
        %v945 = vlaneseq
        %v946 = vshrl.u32 %v945, 7
        %v947 = vsub.s32 0, %v946
        %v948 = vrot.slane %v944, %v947
        %v965 = vunpack.c.l.b16 %v928
        %v966 = vunpack.c.l.b16 %v929
        %v967 = vunpack.c.l.b16 %v930
        %v968 = vunpack.c.l.b16 %v931
        %v969 = vunpack.c.l.b16 %v932
        %v970 = vunpack.c.l.b16 %v933
        %v971 = vunpack.c.l.b16 %v934
        %v972 = vunpack.c.l.b16 %v935
        %v973 = vunpack.c.l.b16 %v936
        %v974 = vunpack.c.l.b16 %v937
        %v975 = vunpack.c.l.b16 %v938
        %v976 = vunpack.c.l.b16 %v939
        %v977 = vunpack.c.l.b16 %v940
        %v978 = vunpack.c.l.b16 %v941
        %v979 = vunpack.c.l.b16 %v942
        %v980 = vunpack.c.l.b16 %v943
        %v981 = vpack.c.b16 %v966, %v965
        %v982 = vpack.c.b16 %v968, %v967
        %v983 = vpack.c.b16 %v970, %v969
        %v984 = vpack.c.b16 %v972, %v971
        %v985 = vpack.c.b16 %v974, %v973
        %v986 = vpack.c.b16 %v976, %v975
        %v987 = vpack.c.b16 %v978, %v977
        %v988 = vpack.c.b16 %v980, %v979
        %997 = vmatprep.subr.bf16.mxu0 0
        %998 = vmatpush1.bf16.msra.mxu0 %v988
        %999 = vmatprep.subr.bf16.mxu0 0
        %1000 = vmatpush1.bf16.msra.mxu0 %v987
        %1001 = vmatprep.subr.bf16.mxu0 0
        %1002 = vmatpush1.bf16.msra.mxu0 %v986
        %1003 = vmatprep.subr.bf16.mxu0 0
        %1004 = vmatpush1.bf16.msra.mxu0 %v985
        %1005 = vmatprep.subr.bf16.mxu0 0
        %1006 = vmatpush1.bf16.msra.mxu0 %v984
        %1007 = vmatprep.subr.bf16.mxu0 0
        %1008 = vmatpush1.bf16.msra.mxu0 %v983
        %1009 = vmatprep.subr.bf16.mxu0 0
        %1010 = vmatpush1.bf16.msra.mxu0 %v982
        %1011 = vmatprep.subr.bf16.mxu0 0
        %1012 = vmatpush1.bf16.msra.mxu0 %v981
        %1013 = vmatprep.subr.bf16.mxu0 0
        %1014 = vmatpush2.bf16.msra.mxu0 0
        %1015 = vmatprep.subr.bf16.mxu0 0
        %1016 = vmatpush2.bf16.msra.mxu0 0
        %1017 = vmatprep.subr.bf16.mxu0 0
        %1018 = vmatpush2.bf16.msra.mxu0 0
        %1019 = vmatprep.subr.bf16.mxu0 0
        %1020 = vmatpush2.bf16.msra.mxu0 0
        %1021 = vmatprep.subr.bf16.mxu0 0
        %1022 = vmatpush2.bf16.msra.mxu0 0
        %1023 = vmatprep.subr.bf16.mxu0 0
        %1024 = vmatpush2.bf16.msra.mxu0 0
        %1025 = vmatprep.subr.bf16.mxu0 0
        %1026 = vmatpush2.bf16.msra.mxu0 0
        %1027 = vmatprep.subr.bf16.mxu0 0
        %1028 = vmatpush2.bf16.msra.mxu0 0
        %1029 = vmatprep.mubr.bf16.mxu0 0
        %1030 = vmatmul.mubr.bf16.gmra.mxu0 %v926
        %v1031 = vpop.f32.mrf.mxu0
        %v1032 = vadd.f32 %v948, %v1031
        %v1033 = vpop.f32.mrf.mxu0
        %v1034 = vpop.f32.mrf.mxu0
        %v1035 = vpop.f32.mrf.mxu0
        %1036 = vdwg.mxu0
        %v1037 = vmul.f32 %v1032, 0.5
        %v1038 = vtanh.pop %v1037
        %v1039 = vmul.f32 %v1038, 0.5
        %v1040 = vadd.f32 %v1039, 0.5
        %v1041 = vmul.f32 %v1032, %v1040
        %v1042 = vpack.c.bf16 %v1041, %v1041
        %s1043 = scalar_lea.vmem [#allocation6], 64
        %v1044 = vld [vmem:[%s1043] sm:$0xf]
        %v1045 = vld [vmem:[%s1043 + $0x4] sm:$0xf]
        %v1046 = vld [vmem:[%s1043 + $0x8] sm:$0xf]
        %v1047 = vld [vmem:[%s1043 + $0xc] sm:$0xf]
        %v1048 = vld [vmem:[%s1043 + $0x10] sm:$0xf]
        %v1049 = vld [vmem:[%s1043 + $0x14] sm:$0xf]
        %v1050 = vld [vmem:[%s1043 + $0x18] sm:$0xf]
        %v1051 = vld [vmem:[%s1043 + $0x1c] sm:$0xf]
        %v1052 = vld [vmem:[%s1043 + $0x20] sm:$0xf]
        %v1053 = vld [vmem:[%s1043 + $0x24] sm:$0xf]
        %v1054 = vld [vmem:[%s1043 + $0x28] sm:$0xf]
        %v1055 = vld [vmem:[%s1043 + $0x2c] sm:$0xf]
        %v1056 = vld [vmem:[%s1043 + $0x30] sm:$0xf]
        %v1057 = vld [vmem:[%s1043 + $0x34] sm:$0xf]
        %v1058 = vld [vmem:[%s1043 + $0x38] sm:$0xf]
        %v1059 = vld [vmem:[%s1043 + $0x3c] sm:$0xf]
        %v1060 = vld [vmem:[#allocation8 + $0x1] sm:$0x1]
        %v1061 = vlaneseq
        %v1062 = vshrl.u32 %v1061, 7
        %v1063 = vsub.s32 0, %v1062
        %v1064 = vrot.slane %v1060, %v1063
        %v1081 = vunpack.c.l.b16 %v1044
        %v1082 = vunpack.c.l.b16 %v1045
        %v1083 = vunpack.c.l.b16 %v1046
        %v1084 = vunpack.c.l.b16 %v1047
        %v1085 = vunpack.c.l.b16 %v1048
        %v1086 = vunpack.c.l.b16 %v1049
        %v1087 = vunpack.c.l.b16 %v1050
        %v1088 = vunpack.c.l.b16 %v1051
        %v1089 = vunpack.c.l.b16 %v1052
        %v1090 = vunpack.c.l.b16 %v1053
        %v1091 = vunpack.c.l.b16 %v1054
        %v1092 = vunpack.c.l.b16 %v1055
        %v1093 = vunpack.c.l.b16 %v1056
        %v1094 = vunpack.c.l.b16 %v1057
        %v1095 = vunpack.c.l.b16 %v1058
        %v1096 = vunpack.c.l.b16 %v1059
        %v1097 = vpack.c.b16 %v1082, %v1081
        %v1098 = vpack.c.b16 %v1084, %v1083
        %v1099 = vpack.c.b16 %v1086, %v1085
        %v1100 = vpack.c.b16 %v1088, %v1087
        %v1101 = vpack.c.b16 %v1090, %v1089
        %v1102 = vpack.c.b16 %v1092, %v1091
        %v1103 = vpack.c.b16 %v1094, %v1093
        %v1104 = vpack.c.b16 %v1096, %v1095
        %1113 = vmatprep.subr.bf16.mxu0 0
        %1114 = vmatpush1.bf16.msra.mxu0 %v1104
        %1115 = vmatprep.subr.bf16.mxu0 0
        %1116 = vmatpush1.bf16.msra.mxu0 %v1103
        %1117 = vmatprep.subr.bf16.mxu0 0
        %1118 = vmatpush1.bf16.msra.mxu0 %v1102
        %1119 = vmatprep.subr.bf16.mxu0 0
        %1120 = vmatpush1.bf16.msra.mxu0 %v1101
        %1121 = vmatprep.subr.bf16.mxu0 0
        %1122 = vmatpush1.bf16.msra.mxu0 %v1100
        %1123 = vmatprep.subr.bf16.mxu0 0
        %1124 = vmatpush1.bf16.msra.mxu0 %v1099
        %1125 = vmatprep.subr.bf16.mxu0 0
        %1126 = vmatpush1.bf16.msra.mxu0 %v1098
        %1127 = vmatprep.subr.bf16.mxu0 0
        %1128 = vmatpush1.bf16.msra.mxu0 %v1097
        %1129 = vmatprep.subr.bf16.mxu0 0
        %1130 = vmatpush2.bf16.msra.mxu0 0
        %1131 = vmatprep.subr.bf16.mxu0 0
        %1132 = vmatpush2.bf16.msra.mxu0 0
        %1133 = vmatprep.subr.bf16.mxu0 0
        %1134 = vmatpush2.bf16.msra.mxu0 0
        %1135 = vmatprep.subr.bf16.mxu0 0
        %1136 = vmatpush2.bf16.msra.mxu0 0
        %1137 = vmatprep.subr.bf16.mxu0 0
        %1138 = vmatpush2.bf16.msra.mxu0 0
        %1139 = vmatprep.subr.bf16.mxu0 0
        %1140 = vmatpush2.bf16.msra.mxu0 0
        %1141 = vmatprep.subr.bf16.mxu0 0
        %1142 = vmatpush2.bf16.msra.mxu0 0
        %1143 = vmatprep.subr.bf16.mxu0 0
        %1144 = vmatpush2.bf16.msra.mxu0 0
        %1145 = vmatprep.mubr.bf16.mxu0 0
        %1146 = vmatmul.mubr.bf16.gmra.mxu0 %v1042
        %v1147 = vpop.f32.mrf.mxu0
        %v1148 = vadd.f32 %v1064, %v1147
        %v1149 = vpop.f32.mrf.mxu0
        %v1150 = vpop.f32.mrf.mxu0
        %v1151 = vpop.f32.mrf.mxu0
        %1152 = vdwg.mxu0
        %v1153 = vmul.f32 %v1148, 0.5
        %v1154 = vtanh.pop %v1153
        %v1155 = vmul.f32 %v1154, 0.5
        %v1156 = vadd.f32 %v1155, 0.5
        %v1157 = vmul.f32 %v1148, %v1156
        %v1158 = vpack.c.bf16 %v1157, %v1157
        %1159 = vst [vmem:[#allocation2 + $0x4] sm:$0xf] %v1158
        %v1160 = vpack.c.bf16 %v691, %v691
        %s1161 = scalar_lea.vmem %s3, 128
        %v1162 = vld [vmem:[%s1161] sm:$0xf]
        %v1163 = vld [vmem:[%s1161 + $0x4] sm:$0xf]
        %v1164 = vld [vmem:[%s1161 + $0x8] sm:$0xf]
        %v1165 = vld [vmem:[%s1161 + $0xc] sm:$0xf]
        %v1166 = vld [vmem:[%s1161 + $0x10] sm:$0xf]
        %v1167 = vld [vmem:[%s1161 + $0x14] sm:$0xf]
        %v1168 = vld [vmem:[%s1161 + $0x18] sm:$0xf]
        %v1169 = vld [vmem:[%s1161 + $0x1c] sm:$0xf]
        %v1170 = vld [vmem:[%s1161 + $0x20] sm:$0xf]
        %v1171 = vld [vmem:[%s1161 + $0x24] sm:$0xf]
        %v1172 = vld [vmem:[%s1161 + $0x28] sm:$0xf]
        %v1173 = vld [vmem:[%s1161 + $0x2c] sm:$0xf]
        %v1174 = vld [vmem:[%s1161 + $0x30] sm:$0xf]
        %v1175 = vld [vmem:[%s1161 + $0x34] sm:$0xf]
        %v1176 = vld [vmem:[%s1161 + $0x38] sm:$0xf]
        %v1177 = vld [vmem:[%s1161 + $0x3c] sm:$0xf]
        %v1178 = vld [vmem:[%s4 + $0x2] sm:$0x1]
        %v1179 = vlaneseq
        %v1180 = vshrl.u32 %v1179, 7
        %v1181 = vsub.s32 0, %v1180
        %v1182 = vrot.slane %v1178, %v1181
        %v1199 = vunpack.c.l.b16 %v1162
        %v1200 = vunpack.c.l.b16 %v1163
        %v1201 = vunpack.c.l.b16 %v1164
        %v1202 = vunpack.c.l.b16 %v1165
        %v1203 = vunpack.c.l.b16 %v1166
        %v1204 = vunpack.c.l.b16 %v1167
        %v1205 = vunpack.c.l.b16 %v1168
        %v1206 = vunpack.c.l.b16 %v1169
        %v1207 = vunpack.c.l.b16 %v1170
        %v1208 = vunpack.c.l.b16 %v1171
        %v1209 = vunpack.c.l.b16 %v1172
        %v1210 = vunpack.c.l.b16 %v1173
        %v1211 = vunpack.c.l.b16 %v1174
        %v1212 = vunpack.c.l.b16 %v1175
        %v1213 = vunpack.c.l.b16 %v1176
        %v1214 = vunpack.c.l.b16 %v1177
        %v1215 = vpack.c.b16 %v1200, %v1199
        %v1216 = vpack.c.b16 %v1202, %v1201
        %v1217 = vpack.c.b16 %v1204, %v1203
        %v1218 = vpack.c.b16 %v1206, %v1205
        %v1219 = vpack.c.b16 %v1208, %v1207
        %v1220 = vpack.c.b16 %v1210, %v1209
        %v1221 = vpack.c.b16 %v1212, %v1211
        %v1222 = vpack.c.b16 %v1214, %v1213
        %1231 = vmatprep.subr.bf16.mxu0 0
        %1232 = vmatpush1.bf16.msra.mxu0 %v1222
        %1233 = vmatprep.subr.bf16.mxu0 0
        %1234 = vmatpush1.bf16.msra.mxu0 %v1221
        %1235 = vmatprep.subr.bf16.mxu0 0
        %1236 = vmatpush1.bf16.msra.mxu0 %v1220
        %1237 = vmatprep.subr.bf16.mxu0 0
        %1238 = vmatpush1.bf16.msra.mxu0 %v1219
        %1239 = vmatprep.subr.bf16.mxu0 0
        %1240 = vmatpush1.bf16.msra.mxu0 %v1218
        %1241 = vmatprep.subr.bf16.mxu0 0
        %1242 = vmatpush1.bf16.msra.mxu0 %v1217
        %1243 = vmatprep.subr.bf16.mxu0 0
        %1244 = vmatpush1.bf16.msra.mxu0 %v1216
        %1245 = vmatprep.subr.bf16.mxu0 0
        %1246 = vmatpush1.bf16.msra.mxu0 %v1215
        %1247 = vmatprep.subr.bf16.mxu0 0
        %1248 = vmatpush2.bf16.msra.mxu0 0
        %1249 = vmatprep.subr.bf16.mxu0 0
        %1250 = vmatpush2.bf16.msra.mxu0 0
        %1251 = vmatprep.subr.bf16.mxu0 0
        %1252 = vmatpush2.bf16.msra.mxu0 0
        %1253 = vmatprep.subr.bf16.mxu0 0
        %1254 = vmatpush2.bf16.msra.mxu0 0
        %1255 = vmatprep.subr.bf16.mxu0 0
        %1256 = vmatpush2.bf16.msra.mxu0 0
        %1257 = vmatprep.subr.bf16.mxu0 0
        %1258 = vmatpush2.bf16.msra.mxu0 0
        %1259 = vmatprep.subr.bf16.mxu0 0
        %1260 = vmatpush2.bf16.msra.mxu0 0
        %1261 = vmatprep.subr.bf16.mxu0 0
        %1262 = vmatpush2.bf16.msra.mxu0 0
        %1263 = vmatprep.mubr.bf16.mxu0 0
        %1264 = vmatmul.mubr.bf16.gmra.mxu0 %v1160
        %v1265 = vpop.f32.mrf.mxu0
        %v1266 = vadd.f32 %v1182, %v1265
        %v1267 = vpop.f32.mrf.mxu0
        %v1268 = vpop.f32.mrf.mxu0
        %v1269 = vpop.f32.mrf.mxu0
        %1270 = vdwg.mxu0
        %v1271 = vmul.f32 %v1266, 0.5
        %v1272 = vtanh.pop %v1271
        %v1273 = vmul.f32 %v1272, 0.5
        %v1274 = vadd.f32 %v1273, 0.5
        %v1275 = vmul.f32 %v1266, %v1274
        %v1276 = vpack.c.bf16 %v1275, %v1275
        %s1277 = scalar_lea.vmem [#allocation6], 128
        %v1278 = vld [vmem:[%s1277] sm:$0xf]
        %v1279 = vld [vmem:[%s1277 + $0x4] sm:$0xf]
        %v1280 = vld [vmem:[%s1277 + $0x8] sm:$0xf]
        %v1281 = vld [vmem:[%s1277 + $0xc] sm:$0xf]
        %v1282 = vld [vmem:[%s1277 + $0x10] sm:$0xf]
        %v1283 = vld [vmem:[%s1277 + $0x14] sm:$0xf]
        %v1284 = vld [vmem:[%s1277 + $0x18] sm:$0xf]
        %v1285 = vld [vmem:[%s1277 + $0x1c] sm:$0xf]
        %v1286 = vld [vmem:[%s1277 + $0x20] sm:$0xf]
        %v1287 = vld [vmem:[%s1277 + $0x24] sm:$0xf]
        %v1288 = vld [vmem:[%s1277 + $0x28] sm:$0xf]
        %v1289 = vld [vmem:[%s1277 + $0x2c] sm:$0xf]
        %v1290 = vld [vmem:[%s1277 + $0x30] sm:$0xf]
        %v1291 = vld [vmem:[%s1277 + $0x34] sm:$0xf]
        %v1292 = vld [vmem:[%s1277 + $0x38] sm:$0xf]
        %v1293 = vld [vmem:[%s1277 + $0x3c] sm:$0xf]
        %v1294 = vld [vmem:[#allocation8 + $0x2] sm:$0x1]
        %v1295 = vlaneseq
        %v1296 = vshrl.u32 %v1295, 7
        %v1297 = vsub.s32 0, %v1296
        %v1298 = vrot.slane %v1294, %v1297
        %v1315 = vunpack.c.l.b16 %v1278
        %v1316 = vunpack.c.l.b16 %v1279
        %v1317 = vunpack.c.l.b16 %v1280
        %v1318 = vunpack.c.l.b16 %v1281
        %v1319 = vunpack.c.l.b16 %v1282
        %v1320 = vunpack.c.l.b16 %v1283
        %v1321 = vunpack.c.l.b16 %v1284
        %v1322 = vunpack.c.l.b16 %v1285
        %v1323 = vunpack.c.l.b16 %v1286
        %v1324 = vunpack.c.l.b16 %v1287
        %v1325 = vunpack.c.l.b16 %v1288
        %v1326 = vunpack.c.l.b16 %v1289
        %v1327 = vunpack.c.l.b16 %v1290
        %v1328 = vunpack.c.l.b16 %v1291
        %v1329 = vunpack.c.l.b16 %v1292
        %v1330 = vunpack.c.l.b16 %v1293
        %v1331 = vpack.c.b16 %v1316, %v1315
        %v1332 = vpack.c.b16 %v1318, %v1317
        %v1333 = vpack.c.b16 %v1320, %v1319
        %v1334 = vpack.c.b16 %v1322, %v1321
        %v1335 = vpack.c.b16 %v1324, %v1323
        %v1336 = vpack.c.b16 %v1326, %v1325
        %v1337 = vpack.c.b16 %v1328, %v1327
        %v1338 = vpack.c.b16 %v1330, %v1329
        %1347 = vmatprep.subr.bf16.mxu0 0
        %1348 = vmatpush1.bf16.msra.mxu0 %v1338
        %1349 = vmatprep.subr.bf16.mxu0 0
        %1350 = vmatpush1.bf16.msra.mxu0 %v1337
        %1351 = vmatprep.subr.bf16.mxu0 0
        %1352 = vmatpush1.bf16.msra.mxu0 %v1336
        %1353 = vmatprep.subr.bf16.mxu0 0
        %1354 = vmatpush1.bf16.msra.mxu0 %v1335
        %1355 = vmatprep.subr.bf16.mxu0 0
        %1356 = vmatpush1.bf16.msra.mxu0 %v1334
        %1357 = vmatprep.subr.bf16.mxu0 0
        %1358 = vmatpush1.bf16.msra.mxu0 %v1333
        %1359 = vmatprep.subr.bf16.mxu0 0
        %1360 = vmatpush1.bf16.msra.mxu0 %v1332
        %1361 = vmatprep.subr.bf16.mxu0 0
        %1362 = vmatpush1.bf16.msra.mxu0 %v1331
        %1363 = vmatprep.subr.bf16.mxu0 0
        %1364 = vmatpush2.bf16.msra.mxu0 0
        %1365 = vmatprep.subr.bf16.mxu0 0
        %1366 = vmatpush2.bf16.msra.mxu0 0
        %1367 = vmatprep.subr.bf16.mxu0 0
        %1368 = vmatpush2.bf16.msra.mxu0 0
        %1369 = vmatprep.subr.bf16.mxu0 0
        %1370 = vmatpush2.bf16.msra.mxu0 0
        %1371 = vmatprep.subr.bf16.mxu0 0
        %1372 = vmatpush2.bf16.msra.mxu0 0
        %1373 = vmatprep.subr.bf16.mxu0 0
        %1374 = vmatpush2.bf16.msra.mxu0 0
        %1375 = vmatprep.subr.bf16.mxu0 0
        %1376 = vmatpush2.bf16.msra.mxu0 0
        %1377 = vmatprep.subr.bf16.mxu0 0
        %1378 = vmatpush2.bf16.msra.mxu0 0
        %1379 = vmatprep.mubr.bf16.mxu0 0
        %1380 = vmatmul.mubr.bf16.gmra.mxu0 %v1276
        %v1381 = vpop.f32.mrf.mxu0
        %v1382 = vadd.f32 %v1298, %v1381
        %v1383 = vpop.f32.mrf.mxu0
        %v1384 = vpop.f32.mrf.mxu0
        %v1385 = vpop.f32.mrf.mxu0
        %1386 = vdwg.mxu0
        %v1387 = vmul.f32 %v1382, 0.5
        %v1388 = vtanh.pop %v1387
        %v1389 = vmul.f32 %v1388, 0.5
        %v1390 = vadd.f32 %v1389, 0.5
        %v1391 = vmul.f32 %v1382, %v1390
        %v1392 = vpack.c.bf16 %v1391, %v1391
        %1393 = vst [vmem:[#allocation2 + $0x8] sm:$0xf] %v1392
        %v1394 = vpack.c.bf16 %v692, %v692
        %s1395 = scalar_lea.vmem %s3, 192
        %v1396 = vld [vmem:[%s1395] sm:$0xf]
        %v1397 = vld [vmem:[%s1395 + $0x4] sm:$0xf]
        %v1398 = vld [vmem:[%s1395 + $0x8] sm:$0xf]
        %v1399 = vld [vmem:[%s1395 + $0xc] sm:$0xf]
        %v1400 = vld [vmem:[%s1395 + $0x10] sm:$0xf]
        %v1401 = vld [vmem:[%s1395 + $0x14] sm:$0xf]
        %v1402 = vld [vmem:[%s1395 + $0x18] sm:$0xf]
        %v1403 = vld [vmem:[%s1395 + $0x1c] sm:$0xf]
        %v1404 = vld [vmem:[%s1395 + $0x20] sm:$0xf]
        %v1405 = vld [vmem:[%s1395 + $0x24] sm:$0xf]
        %v1406 = vld [vmem:[%s1395 + $0x28] sm:$0xf]
        %v1407 = vld [vmem:[%s1395 + $0x2c] sm:$0xf]
        %v1408 = vld [vmem:[%s1395 + $0x30] sm:$0xf]
        %v1409 = vld [vmem:[%s1395 + $0x34] sm:$0xf]
        %v1410 = vld [vmem:[%s1395 + $0x38] sm:$0xf]
        %v1411 = vld [vmem:[%s1395 + $0x3c] sm:$0xf]
        %v1412 = vld [vmem:[%s4 + $0x3] sm:$0x1]
        %v1413 = vlaneseq
        %v1414 = vshrl.u32 %v1413, 7
        %v1415 = vsub.s32 0, %v1414
        %v1416 = vrot.slane %v1412, %v1415
        %v1433 = vunpack.c.l.b16 %v1396
        %v1434 = vunpack.c.l.b16 %v1397
        %v1435 = vunpack.c.l.b16 %v1398
        %v1436 = vunpack.c.l.b16 %v1399
        %v1437 = vunpack.c.l.b16 %v1400
        %v1438 = vunpack.c.l.b16 %v1401
        %v1439 = vunpack.c.l.b16 %v1402
        %v1440 = vunpack.c.l.b16 %v1403
        %v1441 = vunpack.c.l.b16 %v1404
        %v1442 = vunpack.c.l.b16 %v1405
        %v1443 = vunpack.c.l.b16 %v1406
        %v1444 = vunpack.c.l.b16 %v1407
        %v1445 = vunpack.c.l.b16 %v1408
        %v1446 = vunpack.c.l.b16 %v1409
        %v1447 = vunpack.c.l.b16 %v1410
        %v1448 = vunpack.c.l.b16 %v1411
        %v1449 = vpack.c.b16 %v1434, %v1433
        %v1450 = vpack.c.b16 %v1436, %v1435
        %v1451 = vpack.c.b16 %v1438, %v1437
        %v1452 = vpack.c.b16 %v1440, %v1439
        %v1453 = vpack.c.b16 %v1442, %v1441
        %v1454 = vpack.c.b16 %v1444, %v1443
        %v1455 = vpack.c.b16 %v1446, %v1445
        %v1456 = vpack.c.b16 %v1448, %v1447
        %1465 = vmatprep.subr.bf16.mxu0 0
        %1466 = vmatpush1.bf16.msra.mxu0 %v1456
        %1467 = vmatprep.subr.bf16.mxu0 0
        %1468 = vmatpush1.bf16.msra.mxu0 %v1455
        %1469 = vmatprep.subr.bf16.mxu0 0
        %1470 = vmatpush1.bf16.msra.mxu0 %v1454
        %1471 = vmatprep.subr.bf16.mxu0 0
        %1472 = vmatpush1.bf16.msra.mxu0 %v1453
        %1473 = vmatprep.subr.bf16.mxu0 0
        %1474 = vmatpush1.bf16.msra.mxu0 %v1452
        %1475 = vmatprep.subr.bf16.mxu0 0
        %1476 = vmatpush1.bf16.msra.mxu0 %v1451
        %1477 = vmatprep.subr.bf16.mxu0 0
        %1478 = vmatpush1.bf16.msra.mxu0 %v1450
        %1479 = vmatprep.subr.bf16.mxu0 0
        %1480 = vmatpush1.bf16.msra.mxu0 %v1449
        %1481 = vmatprep.subr.bf16.mxu0 0
        %1482 = vmatpush2.bf16.msra.mxu0 0
        %1483 = vmatprep.subr.bf16.mxu0 0
        %1484 = vmatpush2.bf16.msra.mxu0 0
        %1485 = vmatprep.subr.bf16.mxu0 0
        %1486 = vmatpush2.bf16.msra.mxu0 0
        %1487 = vmatprep.subr.bf16.mxu0 0
        %1488 = vmatpush2.bf16.msra.mxu0 0
        %1489 = vmatprep.subr.bf16.mxu0 0
        %1490 = vmatpush2.bf16.msra.mxu0 0
        %1491 = vmatprep.subr.bf16.mxu0 0
        %1492 = vmatpush2.bf16.msra.mxu0 0
        %1493 = vmatprep.subr.bf16.mxu0 0
        %1494 = vmatpush2.bf16.msra.mxu0 0
        %1495 = vmatprep.subr.bf16.mxu0 0
        %1496 = vmatpush2.bf16.msra.mxu0 0
        %1497 = vmatprep.mubr.bf16.mxu0 0
        %1498 = vmatmul.mubr.bf16.gmra.mxu0 %v1394
        %v1499 = vpop.f32.mrf.mxu0
        %v1500 = vadd.f32 %v1416, %v1499
        %v1501 = vpop.f32.mrf.mxu0
        %v1502 = vpop.f32.mrf.mxu0
        %v1503 = vpop.f32.mrf.mxu0
        %1504 = vdwg.mxu0
        %v1505 = vmul.f32 %v1500, 0.5
        %v1506 = vtanh.pop %v1505
        %v1507 = vmul.f32 %v1506, 0.5
        %v1508 = vadd.f32 %v1507, 0.5
        %v1509 = vmul.f32 %v1500, %v1508
        %v1510 = vpack.c.bf16 %v1509, %v1509
        %s1511 = scalar_lea.vmem [#allocation6], 192
        %v1512 = vld [vmem:[%s1511] sm:$0xf]
        %v1513 = vld [vmem:[%s1511 + $0x4] sm:$0xf]
        %v1514 = vld [vmem:[%s1511 + $0x8] sm:$0xf]
        %v1515 = vld [vmem:[%s1511 + $0xc] sm:$0xf]
        %v1516 = vld [vmem:[%s1511 + $0x10] sm:$0xf]
        %v1517 = vld [vmem:[%s1511 + $0x14] sm:$0xf]
        %v1518 = vld [vmem:[%s1511 + $0x18] sm:$0xf]
        %v1519 = vld [vmem:[%s1511 + $0x1c] sm:$0xf]
        %v1520 = vld [vmem:[%s1511 + $0x20] sm:$0xf]
        %v1521 = vld [vmem:[%s1511 + $0x24] sm:$0xf]
        %v1522 = vld [vmem:[%s1511 + $0x28] sm:$0xf]
        %v1523 = vld [vmem:[%s1511 + $0x2c] sm:$0xf]
        %v1524 = vld [vmem:[%s1511 + $0x30] sm:$0xf]
        %v1525 = vld [vmem:[%s1511 + $0x34] sm:$0xf]
        %v1526 = vld [vmem:[%s1511 + $0x38] sm:$0xf]
        %v1527 = vld [vmem:[%s1511 + $0x3c] sm:$0xf]
        %v1528 = vld [vmem:[#allocation8 + $0x3] sm:$0x1]
        %v1529 = vlaneseq
        %v1530 = vshrl.u32 %v1529, 7
        %v1531 = vsub.s32 0, %v1530
        %v1532 = vrot.slane %v1528, %v1531
        %v1549 = vunpack.c.l.b16 %v1512
        %v1550 = vunpack.c.l.b16 %v1513
        %v1551 = vunpack.c.l.b16 %v1514
        %v1552 = vunpack.c.l.b16 %v1515
        %v1553 = vunpack.c.l.b16 %v1516
        %v1554 = vunpack.c.l.b16 %v1517
        %v1555 = vunpack.c.l.b16 %v1518
        %v1556 = vunpack.c.l.b16 %v1519
        %v1557 = vunpack.c.l.b16 %v1520
        %v1558 = vunpack.c.l.b16 %v1521
        %v1559 = vunpack.c.l.b16 %v1522
        %v1560 = vunpack.c.l.b16 %v1523
        %v1561 = vunpack.c.l.b16 %v1524
        %v1562 = vunpack.c.l.b16 %v1525
        %v1563 = vunpack.c.l.b16 %v1526
        %v1564 = vunpack.c.l.b16 %v1527
        %v1565 = vpack.c.b16 %v1550, %v1549
        %v1566 = vpack.c.b16 %v1552, %v1551
        %v1567 = vpack.c.b16 %v1554, %v1553
        %v1568 = vpack.c.b16 %v1556, %v1555
        %v1569 = vpack.c.b16 %v1558, %v1557
        %v1570 = vpack.c.b16 %v1560, %v1559
        %v1571 = vpack.c.b16 %v1562, %v1561
        %v1572 = vpack.c.b16 %v1564, %v1563
        %1581 = vmatprep.subr.bf16.mxu0 0
        %1582 = vmatpush1.bf16.msra.mxu0 %v1572
        %1583 = vmatprep.subr.bf16.mxu0 0
        %1584 = vmatpush1.bf16.msra.mxu0 %v1571
        %1585 = vmatprep.subr.bf16.mxu0 0
        %1586 = vmatpush1.bf16.msra.mxu0 %v1570
        %1587 = vmatprep.subr.bf16.mxu0 0
        %1588 = vmatpush1.bf16.msra.mxu0 %v1569
        %1589 = vmatprep.subr.bf16.mxu0 0
        %1590 = vmatpush1.bf16.msra.mxu0 %v1568
        %1591 = vmatprep.subr.bf16.mxu0 0
        %1592 = vmatpush1.bf16.msra.mxu0 %v1567
        %1593 = vmatprep.subr.bf16.mxu0 0
        %1594 = vmatpush1.bf16.msra.mxu0 %v1566
        %1595 = vmatprep.subr.bf16.mxu0 0
        %1596 = vmatpush1.bf16.msra.mxu0 %v1565
        %1597 = vmatprep.subr.bf16.mxu0 0
        %1598 = vmatpush2.bf16.msra.mxu0 0
        %1599 = vmatprep.subr.bf16.mxu0 0
        %1600 = vmatpush2.bf16.msra.mxu0 0
        %1601 = vmatprep.subr.bf16.mxu0 0
        %1602 = vmatpush2.bf16.msra.mxu0 0
        %1603 = vmatprep.subr.bf16.mxu0 0
        %1604 = vmatpush2.bf16.msra.mxu0 0
        %1605 = vmatprep.subr.bf16.mxu0 0
        %1606 = vmatpush2.bf16.msra.mxu0 0
        %1607 = vmatprep.subr.bf16.mxu0 0
        %1608 = vmatpush2.bf16.msra.mxu0 0
        %1609 = vmatprep.subr.bf16.mxu0 0
        %1610 = vmatpush2.bf16.msra.mxu0 0
        %1611 = vmatprep.subr.bf16.mxu0 0
        %1612 = vmatpush2.bf16.msra.mxu0 0
        %1613 = vmatprep.mubr.bf16.mxu0 0
        %1614 = vmatmul.mubr.bf16.gmra.mxu0 %v1510
        %v1615 = vpop.f32.mrf.mxu0
        %v1616 = vadd.f32 %v1532, %v1615
        %v1617 = vpop.f32.mrf.mxu0
        %v1618 = vpop.f32.mrf.mxu0
        %v1619 = vpop.f32.mrf.mxu0
        %1620 = vdwg.mxu0
        %v1621 = vmul.f32 %v1616, 0.5
        %v1622 = vtanh.pop %v1621
        %v1623 = vmul.f32 %v1622, 0.5
        %v1624 = vadd.f32 %v1623, 0.5
        %v1625 = vmul.f32 %v1616, %v1624
        %v1626 = vpack.c.bf16 %v1625, %v1625
        %1627 = vst [vmem:[#allocation2 + $0xc] sm:$0xf] %v1626
        %v1628 = vpack.c.bf16 %v693, %v693
        %s1629 = scalar_lea.vmem %s3, 256
        %v1630 = vld [vmem:[%s1629] sm:$0xf]
        %v1631 = vld [vmem:[%s1629 + $0x4] sm:$0xf]
        %v1632 = vld [vmem:[%s1629 + $0x8] sm:$0xf]
        %v1633 = vld [vmem:[%s1629 + $0xc] sm:$0xf]
        %v1634 = vld [vmem:[%s1629 + $0x10] sm:$0xf]
        %v1635 = vld [vmem:[%s1629 + $0x14] sm:$0xf]
        %v1636 = vld [vmem:[%s1629 + $0x18] sm:$0xf]
        %v1637 = vld [vmem:[%s1629 + $0x1c] sm:$0xf]
        %v1638 = vld [vmem:[%s1629 + $0x20] sm:$0xf]
        %v1639 = vld [vmem:[%s1629 + $0x24] sm:$0xf]
        %v1640 = vld [vmem:[%s1629 + $0x28] sm:$0xf]
        %v1641 = vld [vmem:[%s1629 + $0x2c] sm:$0xf]
        %v1642 = vld [vmem:[%s1629 + $0x30] sm:$0xf]
        %v1643 = vld [vmem:[%s1629 + $0x34] sm:$0xf]
        %v1644 = vld [vmem:[%s1629 + $0x38] sm:$0xf]
        %v1645 = vld [vmem:[%s1629 + $0x3c] sm:$0xf]
        %v1646 = vld [vmem:[%s4 + $0x4] sm:$0x1]
        %v1647 = vlaneseq
        %v1648 = vshrl.u32 %v1647, 7
        %v1649 = vsub.s32 0, %v1648
        %v1650 = vrot.slane %v1646, %v1649
        %v1667 = vunpack.c.l.b16 %v1630
        %v1668 = vunpack.c.l.b16 %v1631
        %v1669 = vunpack.c.l.b16 %v1632
        %v1670 = vunpack.c.l.b16 %v1633
        %v1671 = vunpack.c.l.b16 %v1634
        %v1672 = vunpack.c.l.b16 %v1635
        %v1673 = vunpack.c.l.b16 %v1636
        %v1674 = vunpack.c.l.b16 %v1637
        %v1675 = vunpack.c.l.b16 %v1638
        %v1676 = vunpack.c.l.b16 %v1639
        %v1677 = vunpack.c.l.b16 %v1640
        %v1678 = vunpack.c.l.b16 %v1641
        %v1679 = vunpack.c.l.b16 %v1642
        %v1680 = vunpack.c.l.b16 %v1643
        %v1681 = vunpack.c.l.b16 %v1644
        %v1682 = vunpack.c.l.b16 %v1645
        %v1683 = vpack.c.b16 %v1668, %v1667
        %v1684 = vpack.c.b16 %v1670, %v1669
        %v1685 = vpack.c.b16 %v1672, %v1671
        %v1686 = vpack.c.b16 %v1674, %v1673
        %v1687 = vpack.c.b16 %v1676, %v1675
        %v1688 = vpack.c.b16 %v1678, %v1677
        %v1689 = vpack.c.b16 %v1680, %v1679
        %v1690 = vpack.c.b16 %v1682, %v1681
        %1699 = vmatprep.subr.bf16.mxu0 0
        %1700 = vmatpush1.bf16.msra.mxu0 %v1690
        %1701 = vmatprep.subr.bf16.mxu0 0
        %1702 = vmatpush1.bf16.msra.mxu0 %v1689
        %1703 = vmatprep.subr.bf16.mxu0 0
        %1704 = vmatpush1.bf16.msra.mxu0 %v1688
        %1705 = vmatprep.subr.bf16.mxu0 0
        %1706 = vmatpush1.bf16.msra.mxu0 %v1687
        %1707 = vmatprep.subr.bf16.mxu0 0
        %1708 = vmatpush1.bf16.msra.mxu0 %v1686
        %1709 = vmatprep.subr.bf16.mxu0 0
        %1710 = vmatpush1.bf16.msra.mxu0 %v1685
        %1711 = vmatprep.subr.bf16.mxu0 0
        %1712 = vmatpush1.bf16.msra.mxu0 %v1684
        %1713 = vmatprep.subr.bf16.mxu0 0
        %1714 = vmatpush1.bf16.msra.mxu0 %v1683
        %1715 = vmatprep.subr.bf16.mxu0 0
        %1716 = vmatpush2.bf16.msra.mxu0 0
        %1717 = vmatprep.subr.bf16.mxu0 0
        %1718 = vmatpush2.bf16.msra.mxu0 0
        %1719 = vmatprep.subr.bf16.mxu0 0
        %1720 = vmatpush2.bf16.msra.mxu0 0
        %1721 = vmatprep.subr.bf16.mxu0 0
        %1722 = vmatpush2.bf16.msra.mxu0 0
        %1723 = vmatprep.subr.bf16.mxu0 0
        %1724 = vmatpush2.bf16.msra.mxu0 0
        %1725 = vmatprep.subr.bf16.mxu0 0
        %1726 = vmatpush2.bf16.msra.mxu0 0
        %1727 = vmatprep.subr.bf16.mxu0 0
        %1728 = vmatpush2.bf16.msra.mxu0 0
        %1729 = vmatprep.subr.bf16.mxu0 0
        %1730 = vmatpush2.bf16.msra.mxu0 0
        %1731 = vmatprep.mubr.bf16.mxu0 0
        %1732 = vmatmul.mubr.bf16.gmra.mxu0 %v1628
        %v1733 = vpop.f32.mrf.mxu0
        %v1734 = vadd.f32 %v1650, %v1733
        %v1735 = vpop.f32.mrf.mxu0
        %v1736 = vpop.f32.mrf.mxu0
        %v1737 = vpop.f32.mrf.mxu0
        %1738 = vdwg.mxu0
        %v1739 = vmul.f32 %v1734, 0.5
        %v1740 = vtanh.pop %v1739
        %v1741 = vmul.f32 %v1740, 0.5
        %v1742 = vadd.f32 %v1741, 0.5
        %v1743 = vmul.f32 %v1734, %v1742
        %v1744 = vpack.c.bf16 %v1743, %v1743
        %s1745 = scalar_lea.vmem [#allocation6], 256
        %v1746 = vld [vmem:[%s1745] sm:$0xf]
        %v1747 = vld [vmem:[%s1745 + $0x4] sm:$0xf]
        %v1748 = vld [vmem:[%s1745 + $0x8] sm:$0xf]
        %v1749 = vld [vmem:[%s1745 + $0xc] sm:$0xf]
        %v1750 = vld [vmem:[%s1745 + $0x10] sm:$0xf]
        %v1751 = vld [vmem:[%s1745 + $0x14] sm:$0xf]
        %v1752 = vld [vmem:[%s1745 + $0x18] sm:$0xf]
        %v1753 = vld [vmem:[%s1745 + $0x1c] sm:$0xf]
        %v1754 = vld [vmem:[%s1745 + $0x20] sm:$0xf]
        %v1755 = vld [vmem:[%s1745 + $0x24] sm:$0xf]
        %v1756 = vld [vmem:[%s1745 + $0x28] sm:$0xf]
        %v1757 = vld [vmem:[%s1745 + $0x2c] sm:$0xf]
        %v1758 = vld [vmem:[%s1745 + $0x30] sm:$0xf]
        %v1759 = vld [vmem:[%s1745 + $0x34] sm:$0xf]
        %v1760 = vld [vmem:[%s1745 + $0x38] sm:$0xf]
        %v1761 = vld [vmem:[%s1745 + $0x3c] sm:$0xf]
        %v1762 = vld [vmem:[#allocation8 + $0x4] sm:$0x1]
        %v1763 = vlaneseq
        %v1764 = vshrl.u32 %v1763, 7
        %v1765 = vsub.s32 0, %v1764
        %v1766 = vrot.slane %v1762, %v1765
        %v1783 = vunpack.c.l.b16 %v1746
        %v1784 = vunpack.c.l.b16 %v1747
        %v1785 = vunpack.c.l.b16 %v1748
        %v1786 = vunpack.c.l.b16 %v1749
        %v1787 = vunpack.c.l.b16 %v1750
        %v1788 = vunpack.c.l.b16 %v1751
        %v1789 = vunpack.c.l.b16 %v1752
        %v1790 = vunpack.c.l.b16 %v1753
        %v1791 = vunpack.c.l.b16 %v1754
        %v1792 = vunpack.c.l.b16 %v1755
        %v1793 = vunpack.c.l.b16 %v1756
        %v1794 = vunpack.c.l.b16 %v1757
        %v1795 = vunpack.c.l.b16 %v1758
        %v1796 = vunpack.c.l.b16 %v1759
        %v1797 = vunpack.c.l.b16 %v1760
        %v1798 = vunpack.c.l.b16 %v1761
        %v1799 = vpack.c.b16 %v1784, %v1783
        %v1800 = vpack.c.b16 %v1786, %v1785
        %v1801 = vpack.c.b16 %v1788, %v1787
        %v1802 = vpack.c.b16 %v1790, %v1789
        %v1803 = vpack.c.b16 %v1792, %v1791
        %v1804 = vpack.c.b16 %v1794, %v1793
        %v1805 = vpack.c.b16 %v1796, %v1795
        %v1806 = vpack.c.b16 %v1798, %v1797
        %1815 = vmatprep.subr.bf16.mxu0 0
        %1816 = vmatpush1.bf16.msra.mxu0 %v1806
        %1817 = vmatprep.subr.bf16.mxu0 0
        %1818 = vmatpush1.bf16.msra.mxu0 %v1805
        %1819 = vmatprep.subr.bf16.mxu0 0
        %1820 = vmatpush1.bf16.msra.mxu0 %v1804
        %1821 = vmatprep.subr.bf16.mxu0 0
        %1822 = vmatpush1.bf16.msra.mxu0 %v1803
        %1823 = vmatprep.subr.bf16.mxu0 0
        %1824 = vmatpush1.bf16.msra.mxu0 %v1802
        %1825 = vmatprep.subr.bf16.mxu0 0
        %1826 = vmatpush1.bf16.msra.mxu0 %v1801
        %1827 = vmatprep.subr.bf16.mxu0 0
        %1828 = vmatpush1.bf16.msra.mxu0 %v1800
        %1829 = vmatprep.subr.bf16.mxu0 0
        %1830 = vmatpush1.bf16.msra.mxu0 %v1799
        %1831 = vmatprep.subr.bf16.mxu0 0
        %1832 = vmatpush2.bf16.msra.mxu0 0
        %1833 = vmatprep.subr.bf16.mxu0 0
        %1834 = vmatpush2.bf16.msra.mxu0 0
        %1835 = vmatprep.subr.bf16.mxu0 0
        %1836 = vmatpush2.bf16.msra.mxu0 0
        %1837 = vmatprep.subr.bf16.mxu0 0
        %1838 = vmatpush2.bf16.msra.mxu0 0
        %1839 = vmatprep.subr.bf16.mxu0 0
        %1840 = vmatpush2.bf16.msra.mxu0 0
        %1841 = vmatprep.subr.bf16.mxu0 0
        %1842 = vmatpush2.bf16.msra.mxu0 0
        %1843 = vmatprep.subr.bf16.mxu0 0
        %1844 = vmatpush2.bf16.msra.mxu0 0
        %1845 = vmatprep.subr.bf16.mxu0 0
        %1846 = vmatpush2.bf16.msra.mxu0 0
        %1847 = vmatprep.mubr.bf16.mxu0 0
        %1848 = vmatmul.mubr.bf16.gmra.mxu0 %v1744
        %v1849 = vpop.f32.mrf.mxu0
        %v1850 = vadd.f32 %v1766, %v1849
        %v1851 = vpop.f32.mrf.mxu0
        %v1852 = vpop.f32.mrf.mxu0
        %v1853 = vpop.f32.mrf.mxu0
        %1854 = vdwg.mxu0
        %v1855 = vmul.f32 %v1850, 0.5
        %v1856 = vtanh.pop %v1855
        %v1857 = vmul.f32 %v1856, 0.5
        %v1858 = vadd.f32 %v1857, 0.5
        %v1859 = vmul.f32 %v1850, %v1858
        %v1860 = vpack.c.bf16 %v1859, %v1859
        %1861 = vst [vmem:[#allocation2 + $0x10] sm:$0xf] %v1860
        %v1862 = vld [vmem:[#allocation2] sm:$0xff]
        %v1863 = vld [vmem:[#allocation2 + $0x8] sm:$0xff]
        %v1864 = vld [vmem:[#allocation2 + $0x10] sm:$0xf]
        %v1865 = vld [vmem:[%s7] sm:$0xf]
        %v1866 = vld [vmem:[%s7 + $0x4] sm:$0xf]
        %v1867 = vld [vmem:[%s7 + $0x8] sm:$0xf]
        %v1868 = vld [vmem:[%s7 + $0xc] sm:$0xf]
        %v1869 = vld [vmem:[%s7 + $0x10] sm:$0xf]
        %v1870 = vld [vmem:[%s7 + $0x14] sm:$0xf]
        %v1871 = vld [vmem:[%s7 + $0x18] sm:$0xf]
        %v1872 = vld [vmem:[%s7 + $0x1c] sm:$0xf]
        %v1873 = vld [vmem:[%s7 + $0x20] sm:$0xf]
        %v1874 = vld [vmem:[%s7 + $0x24] sm:$0xf]
        %v1875 = vld [vmem:[%s7 + $0x28] sm:$0xf]
        %v1876 = vld [vmem:[%s7 + $0x2c] sm:$0xf]
        %v1877 = vld [vmem:[%s7 + $0x30] sm:$0xf]
        %v1878 = vld [vmem:[%s7 + $0x34] sm:$0xf]
        %v1879 = vld [vmem:[%s7 + $0x38] sm:$0xf]
        %v1880 = vld [vmem:[%s7 + $0x3c] sm:$0xf]
        %v1881 = vld [vmem:[%s7 + $0x40] sm:$0xf]
        %v1882 = vld [vmem:[%s7 + $0x44] sm:$0xf]
        %v1883 = vld [vmem:[%s7 + $0x48] sm:$0xf]
        %v1884 = vld [vmem:[%s7 + $0x4c] sm:$0xf]
        %v1885 = vld [vmem:[%s7 + $0x50] sm:$0xf]
        %v1886 = vld [vmem:[%s7 + $0x54] sm:$0xf]
        %v1887 = vld [vmem:[%s7 + $0x58] sm:$0xf]
        %v1888 = vld [vmem:[%s7 + $0x5c] sm:$0xf]
        %v1889 = vld [vmem:[%s7 + $0x60] sm:$0xf]
        %v1890 = vld [vmem:[%s7 + $0x64] sm:$0xf]
        %v1891 = vld [vmem:[%s7 + $0x68] sm:$0xf]
        %v1892 = vld [vmem:[%s7 + $0x6c] sm:$0xf]
        %v1893 = vld [vmem:[%s7 + $0x70] sm:$0xf]
        %v1894 = vld [vmem:[%s7 + $0x74] sm:$0xf]
        %v1895 = vld [vmem:[%s7 + $0x78] sm:$0xf]
        %v1896 = vld [vmem:[%s7 + $0x7c] sm:$0xf]
        %v1897 = vld [vmem:[%s7 + $0x80] sm:$0xf]
        %v1898 = vld [vmem:[%s7 + $0x84] sm:$0xf]
        %v1899 = vld [vmem:[%s7 + $0x88] sm:$0xf]
        %v1900 = vld [vmem:[%s7 + $0x8c] sm:$0xf]
        %v1901 = vld [vmem:[%s7 + $0x90] sm:$0xf]
        %v1902 = vld [vmem:[%s7 + $0x94] sm:$0xf]
        %v1903 = vld [vmem:[%s7 + $0x98] sm:$0xf]
        %v1904 = vld [vmem:[%s7 + $0x9c] sm:$0xf]
        %v1905 = vld [vmem:[%s7 + $0xa0] sm:$0xf]
        %v1906 = vld [vmem:[%s7 + $0xa4] sm:$0xf]
        %v1907 = vld [vmem:[%s7 + $0xa8] sm:$0xf]
        %v1908 = vld [vmem:[%s7 + $0xac] sm:$0xf]
        %v1909 = vld [vmem:[%s7 + $0xb0] sm:$0xf]
        %v1910 = vld [vmem:[%s7 + $0xb4] sm:$0xf]
        %v1911 = vld [vmem:[%s7 + $0xb8] sm:$0xf]
        %v1912 = vld [vmem:[%s7 + $0xbc] sm:$0xf]
        %v1913 = vld [vmem:[%s7 + $0xc0] sm:$0xf]
        %v1914 = vld [vmem:[%s7 + $0xc4] sm:$0xf]
        %v1915 = vld [vmem:[%s7 + $0xc8] sm:$0xf]
        %v1916 = vld [vmem:[%s7 + $0xcc] sm:$0xf]
        %v1917 = vld [vmem:[%s7 + $0xd0] sm:$0xf]
        %v1918 = vld [vmem:[%s7 + $0xd4] sm:$0xf]
        %v1919 = vld [vmem:[%s7 + $0xd8] sm:$0xf]
        %v1920 = vld [vmem:[%s7 + $0xdc] sm:$0xf]
        %v1921 = vld [vmem:[%s7 + $0xe0] sm:$0xf]
        %v1922 = vld [vmem:[%s7 + $0xe4] sm:$0xf]
        %v1923 = vld [vmem:[%s7 + $0xe8] sm:$0xf]
        %v1924 = vld [vmem:[%s7 + $0xec] sm:$0xf]
        %v1925 = vld [vmem:[%s7 + $0xf0] sm:$0xf]
        %v1926 = vld [vmem:[%s7 + $0xf4] sm:$0xf]
        %v1927 = vld [vmem:[%s7 + $0xf8] sm:$0xf]
        %v1928 = vld [vmem:[%s7 + $0xfc] sm:$0xf]
        %v1929 = vld [vmem:[%s7 + $0x100] sm:$0xf]
        %v1930 = vld [vmem:[%s7 + $0x104] sm:$0xf]
        %v1931 = vld [vmem:[%s7 + $0x108] sm:$0xf]
        %v1932 = vld [vmem:[%s7 + $0x10c] sm:$0xf]
        %v1933 = vld [vmem:[%s7 + $0x110] sm:$0xf]
        %v1934 = vld [vmem:[%s7 + $0x114] sm:$0xf]
        %v1935 = vld [vmem:[%s7 + $0x118] sm:$0xf]
        %v1936 = vld [vmem:[%s7 + $0x11c] sm:$0xf]
        %v1937 = vld [vmem:[%s7 + $0x120] sm:$0xf]
        %v1938 = vld [vmem:[%s7 + $0x124] sm:$0xf]
        %v1939 = vld [vmem:[%s7 + $0x128] sm:$0xf]
        %v1940 = vld [vmem:[%s7 + $0x12c] sm:$0xf]
        %v1941 = vld [vmem:[%s7 + $0x130] sm:$0xf]
        %v1942 = vld [vmem:[%s7 + $0x134] sm:$0xf]
        %v1943 = vld [vmem:[%s7 + $0x138] sm:$0xf]
        %v1944 = vld [vmem:[%s7 + $0x13c] sm:$0xf]
        %v1945 = vld [vmem:[%s8] sm:$0x1]
        %v1947 = vlaneseq
        %v1948 = vshrl.u32 %v1947, 7
        %v1949 = vsub.s32 0, %v1948
        %v1950 = vrot.slane %v1945, %v1949
        %v1955 = vunpack.c.l.b16 %v1862
        %v1956 = vunpack.c.h.b16 %v1862
        %v1957 = vunpack.c.l.b16 %v1863
        %v1958 = vunpack.c.h.b16 %v1863
        %v1959 = vunpack.c.l.b16 %v1864
        %v1960 = vpack.c.b16 %v1955, %v1955
        %v1961 = vpack.c.b16 %v1956, %v1956
        %v1962 = vpack.c.b16 %v1957, %v1957
        %v1963 = vpack.c.b16 %v1958, %v1958
        %v1964 = vpack.c.b16 %v1959, %v1959
        %v2050 = vunpack.c.l.b16 %v1865
        %v2051 = vunpack.c.l.b16 %v1866
        %v2052 = vunpack.c.l.b16 %v1867
        %v2053 = vunpack.c.l.b16 %v1868
        %v2054 = vunpack.c.l.b16 %v1869
        %v2055 = vunpack.c.l.b16 %v1870
        %v2056 = vunpack.c.l.b16 %v1871
        %v2057 = vunpack.c.l.b16 %v1872
        %v2058 = vunpack.c.l.b16 %v1873
        %v2059 = vunpack.c.l.b16 %v1874
        %v2060 = vunpack.c.l.b16 %v1875
        %v2061 = vunpack.c.l.b16 %v1876
        %v2062 = vunpack.c.l.b16 %v1877
        %v2063 = vunpack.c.l.b16 %v1878
        %v2064 = vunpack.c.l.b16 %v1879
        %v2065 = vunpack.c.l.b16 %v1880
        %v2066 = vunpack.c.l.b16 %v1881
        %v2067 = vunpack.c.l.b16 %v1882
        %v2068 = vunpack.c.l.b16 %v1883
        %v2069 = vunpack.c.l.b16 %v1884
        %v2070 = vunpack.c.l.b16 %v1885
        %v2071 = vunpack.c.l.b16 %v1886
        %v2072 = vunpack.c.l.b16 %v1887
        %v2073 = vunpack.c.l.b16 %v1888
        %v2074 = vunpack.c.l.b16 %v1889
        %v2075 = vunpack.c.l.b16 %v1890
        %v2076 = vunpack.c.l.b16 %v1891
        %v2077 = vunpack.c.l.b16 %v1892
        %v2078 = vunpack.c.l.b16 %v1893
        %v2079 = vunpack.c.l.b16 %v1894
        %v2080 = vunpack.c.l.b16 %v1895
        %v2081 = vunpack.c.l.b16 %v1896
        %v2082 = vunpack.c.l.b16 %v1897
        %v2083 = vunpack.c.l.b16 %v1898
        %v2084 = vunpack.c.l.b16 %v1899
        %v2085 = vunpack.c.l.b16 %v1900
        %v2086 = vunpack.c.l.b16 %v1901
        %v2087 = vunpack.c.l.b16 %v1902
        %v2088 = vunpack.c.l.b16 %v1903
        %v2089 = vunpack.c.l.b16 %v1904
        %v2090 = vunpack.c.l.b16 %v1905
        %v2091 = vunpack.c.l.b16 %v1906
        %v2092 = vunpack.c.l.b16 %v1907
        %v2093 = vunpack.c.l.b16 %v1908
        %v2094 = vunpack.c.l.b16 %v1909
        %v2095 = vunpack.c.l.b16 %v1910
        %v2096 = vunpack.c.l.b16 %v1911
        %v2097 = vunpack.c.l.b16 %v1912
        %v2098 = vunpack.c.l.b16 %v1913
        %v2099 = vunpack.c.l.b16 %v1914
        %v2100 = vunpack.c.l.b16 %v1915
        %v2101 = vunpack.c.l.b16 %v1916
        %v2102 = vunpack.c.l.b16 %v1917
        %v2103 = vunpack.c.l.b16 %v1918
        %v2104 = vunpack.c.l.b16 %v1919
        %v2105 = vunpack.c.l.b16 %v1920
        %v2106 = vunpack.c.l.b16 %v1921
        %v2107 = vunpack.c.l.b16 %v1922
        %v2108 = vunpack.c.l.b16 %v1923
        %v2109 = vunpack.c.l.b16 %v1924
        %v2110 = vunpack.c.l.b16 %v1925
        %v2111 = vunpack.c.l.b16 %v1926
        %v2112 = vunpack.c.l.b16 %v1927
        %v2113 = vunpack.c.l.b16 %v1928
        %v2114 = vunpack.c.l.b16 %v1929
        %v2115 = vunpack.c.l.b16 %v1930
        %v2116 = vunpack.c.l.b16 %v1931
        %v2117 = vunpack.c.l.b16 %v1932
        %v2118 = vunpack.c.l.b16 %v1933
        %v2119 = vunpack.c.l.b16 %v1934
        %v2120 = vunpack.c.l.b16 %v1935
        %v2121 = vunpack.c.l.b16 %v1936
        %v2122 = vunpack.c.l.b16 %v1937
        %v2123 = vunpack.c.l.b16 %v1938
        %v2124 = vunpack.c.l.b16 %v1939
        %v2125 = vunpack.c.l.b16 %v1940
        %v2126 = vunpack.c.l.b16 %v1941
        %v2127 = vunpack.c.l.b16 %v1942
        %v2128 = vunpack.c.l.b16 %v1943
        %v2129 = vunpack.c.l.b16 %v1944
        %v2130 = vpack.c.b16 %v2051, %v2050
        %v2131 = vpack.c.b16 %v2053, %v2052
        %v2132 = vpack.c.b16 %v2055, %v2054
        %v2133 = vpack.c.b16 %v2057, %v2056
        %v2134 = vpack.c.b16 %v2059, %v2058
        %v2135 = vpack.c.b16 %v2061, %v2060
        %v2136 = vpack.c.b16 %v2063, %v2062
        %v2137 = vpack.c.b16 %v2065, %v2064
        %v2138 = vpack.c.b16 %v2067, %v2066
        %v2139 = vpack.c.b16 %v2069, %v2068
        %v2140 = vpack.c.b16 %v2071, %v2070
        %v2141 = vpack.c.b16 %v2073, %v2072
        %v2142 = vpack.c.b16 %v2075, %v2074
        %v2143 = vpack.c.b16 %v2077, %v2076
        %v2144 = vpack.c.b16 %v2079, %v2078
        %v2145 = vpack.c.b16 %v2081, %v2080
        %v2146 = vpack.c.b16 %v2083, %v2082
        %v2147 = vpack.c.b16 %v2085, %v2084
        %v2148 = vpack.c.b16 %v2087, %v2086
        %v2149 = vpack.c.b16 %v2089, %v2088
        %v2150 = vpack.c.b16 %v2091, %v2090
        %v2151 = vpack.c.b16 %v2093, %v2092
        %v2152 = vpack.c.b16 %v2095, %v2094
        %v2153 = vpack.c.b16 %v2097, %v2096
        %v2154 = vpack.c.b16 %v2099, %v2098
        %v2155 = vpack.c.b16 %v2101, %v2100
        %v2156 = vpack.c.b16 %v2103, %v2102
        %v2157 = vpack.c.b16 %v2105, %v2104
        %v2158 = vpack.c.b16 %v2107, %v2106
        %v2159 = vpack.c.b16 %v2109, %v2108
        %v2160 = vpack.c.b16 %v2111, %v2110
        %v2161 = vpack.c.b16 %v2113, %v2112
        %v2162 = vpack.c.b16 %v2115, %v2114
        %v2163 = vpack.c.b16 %v2117, %v2116
        %v2164 = vpack.c.b16 %v2119, %v2118
        %v2165 = vpack.c.b16 %v2121, %v2120
        %v2166 = vpack.c.b16 %v2123, %v2122
        %v2167 = vpack.c.b16 %v2125, %v2124
        %v2168 = vpack.c.b16 %v2127, %v2126
        %v2169 = vpack.c.b16 %v2129, %v2128
        %2210 = vmatprep.subr.bf16.mxu0 0
        %2211 = vmatpush1.bf16.msra.mxu0 %v2137
        %2212 = vmatprep.subr.bf16.mxu0 0
        %2213 = vmatpush1.bf16.msra.mxu0 %v2136
        %2214 = vmatprep.subr.bf16.mxu0 0
        %2215 = vmatpush1.bf16.msra.mxu0 %v2135
        %2216 = vmatprep.subr.bf16.mxu0 0
        %2217 = vmatpush1.bf16.msra.mxu0 %v2134
        %2218 = vmatprep.subr.bf16.mxu0 0
        %2219 = vmatpush1.bf16.msra.mxu0 %v2133
        %2220 = vmatprep.subr.bf16.mxu0 0
        %2221 = vmatpush1.bf16.msra.mxu0 %v2132
        %2222 = vmatprep.subr.bf16.mxu0 0
        %2223 = vmatpush1.bf16.msra.mxu0 %v2131
        %2224 = vmatprep.subr.bf16.mxu0 0
        %2225 = vmatpush1.bf16.msra.mxu0 %v2130
        %2226 = vmatprep.subr.bf16.mxu0 0
        %2227 = vmatpush2.bf16.msra.mxu0 %v2145
        %2228 = vmatprep.subr.bf16.mxu0 0
        %2229 = vmatpush2.bf16.msra.mxu0 %v2144
        %2230 = vmatprep.subr.bf16.mxu0 0
        %2231 = vmatpush2.bf16.msra.mxu0 %v2143
        %2232 = vmatprep.subr.bf16.mxu0 0
        %2233 = vmatpush2.bf16.msra.mxu0 %v2142
        %2234 = vmatprep.subr.bf16.mxu0 0
        %2235 = vmatpush2.bf16.msra.mxu0 %v2141
        %2236 = vmatprep.subr.bf16.mxu0 0
        %2237 = vmatpush2.bf16.msra.mxu0 %v2140
        %2238 = vmatprep.subr.bf16.mxu0 0
        %2239 = vmatpush2.bf16.msra.mxu0 %v2139
        %2240 = vmatprep.subr.bf16.mxu0 0
        %2241 = vmatpush2.bf16.msra.mxu0 %v2138
        %2242 = vmatprep.mubr.bf16.mxu0 %v1961
        %2243 = vmatmul.mubr.bf16.gmra.mxu0 %v1960
        %v2244 = vpop.f32.mrf.mxu0
        %v2245 = vadd.f32 %v1950, %v2244
        %v2246 = vpop.f32.mrf.mxu0
        %v2247 = vpop.f32.mrf.mxu0
        %v2248 = vpop.f32.mrf.mxu0
        %2249 = vdwg.mxu0
        %2250 = vmatprep.subr.bf16.mxu0 0
        %2251 = vmatpush1.bf16.msra.mxu0 %v2153
        %2252 = vmatprep.subr.bf16.mxu0 0
        %2253 = vmatpush1.bf16.msra.mxu0 %v2152
        %2254 = vmatprep.subr.bf16.mxu0 0
        %2255 = vmatpush1.bf16.msra.mxu0 %v2151
        %2256 = vmatprep.subr.bf16.mxu0 0
        %2257 = vmatpush1.bf16.msra.mxu0 %v2150
        %2258 = vmatprep.subr.bf16.mxu0 0
        %2259 = vmatpush1.bf16.msra.mxu0 %v2149
        %2260 = vmatprep.subr.bf16.mxu0 0
        %2261 = vmatpush1.bf16.msra.mxu0 %v2148
        %2262 = vmatprep.subr.bf16.mxu0 0
        %2263 = vmatpush1.bf16.msra.mxu0 %v2147
        %2264 = vmatprep.subr.bf16.mxu0 0
        %2265 = vmatpush1.bf16.msra.mxu0 %v2146
        %2266 = vmatprep.subr.bf16.mxu0 0
        %2267 = vmatpush2.bf16.msra.mxu0 %v2161
        %2268 = vmatprep.subr.bf16.mxu0 0
        %2269 = vmatpush2.bf16.msra.mxu0 %v2160
        %2270 = vmatprep.subr.bf16.mxu0 0
        %2271 = vmatpush2.bf16.msra.mxu0 %v2159
        %2272 = vmatprep.subr.bf16.mxu0 0
        %2273 = vmatpush2.bf16.msra.mxu0 %v2158
        %2274 = vmatprep.subr.bf16.mxu0 0
        %2275 = vmatpush2.bf16.msra.mxu0 %v2157
        %2276 = vmatprep.subr.bf16.mxu0 0
        %2277 = vmatpush2.bf16.msra.mxu0 %v2156
        %2278 = vmatprep.subr.bf16.mxu0 0
        %2279 = vmatpush2.bf16.msra.mxu0 %v2155
        %2280 = vmatprep.subr.bf16.mxu0 0
        %2281 = vmatpush2.bf16.msra.mxu0 %v2154
        %2282 = vmatprep.mubr.bf16.mxu0 %v1963
        %2283 = vmatmul.mubr.bf16.gmra.mxu0 %v1962
        %v2284 = vpop.f32.mrf.mxu0
        %v2285 = vadd.f32 %v2245, %v2284
        %v2286 = vpop.f32.mrf.mxu0
        %v2287 = vpop.f32.mrf.mxu0
        %v2288 = vpop.f32.mrf.mxu0
        %2289 = vdwg.mxu0
        %2290 = vmatprep.subr.bf16.mxu0 0
        %2291 = vmatpush1.bf16.msra.mxu0 %v2169
        %2292 = vmatprep.subr.bf16.mxu0 0
        %2293 = vmatpush1.bf16.msra.mxu0 %v2168
        %2294 = vmatprep.subr.bf16.mxu0 0
        %2295 = vmatpush1.bf16.msra.mxu0 %v2167
        %2296 = vmatprep.subr.bf16.mxu0 0
        %2297 = vmatpush1.bf16.msra.mxu0 %v2166
        %2298 = vmatprep.subr.bf16.mxu0 0
        %2299 = vmatpush1.bf16.msra.mxu0 %v2165
        %2300 = vmatprep.subr.bf16.mxu0 0
        %2301 = vmatpush1.bf16.msra.mxu0 %v2164
        %2302 = vmatprep.subr.bf16.mxu0 0
        %2303 = vmatpush1.bf16.msra.mxu0 %v2163
        %2304 = vmatprep.subr.bf16.mxu0 0
        %2305 = vmatpush1.bf16.msra.mxu0 %v2162
        %2306 = vmatprep.subr.bf16.mxu0 0
        %2307 = vmatpush2.bf16.msra.mxu0 0
        %2308 = vmatprep.subr.bf16.mxu0 0
        %2309 = vmatpush2.bf16.msra.mxu0 0
        %2310 = vmatprep.subr.bf16.mxu0 0
        %2311 = vmatpush2.bf16.msra.mxu0 0
        %2312 = vmatprep.subr.bf16.mxu0 0
        %2313 = vmatpush2.bf16.msra.mxu0 0
        %2314 = vmatprep.subr.bf16.mxu0 0
        %2315 = vmatpush2.bf16.msra.mxu0 0
        %2316 = vmatprep.subr.bf16.mxu0 0
        %2317 = vmatpush2.bf16.msra.mxu0 0
        %2318 = vmatprep.subr.bf16.mxu0 0
        %2319 = vmatpush2.bf16.msra.mxu0 0
        %2320 = vmatprep.subr.bf16.mxu0 0
        %2321 = vmatpush2.bf16.msra.mxu0 0
        %2322 = vmatprep.mubr.bf16.mxu0 0
        %2323 = vmatmul.mubr.bf16.gmra.mxu0 %v1964
        %v2324 = vpop.f32.mrf.mxu0
        %v2325 = vadd.f32 %v2285, %v2324
        %v2326 = vpop.f32.mrf.mxu0
        %v2327 = vpop.f32.mrf.mxu0
        %v2328 = vpop.f32.mrf.mxu0
        %2329 = vdwg.mxu0
        %vm2330 = vcmask 39936
        %v2331 = vsel %vm2330, %v2325, -inf
        %2332 = vmax.xlane.f32.xlu0 %v2331
        %v2333 = vpop.xlane.xlu0 %2332
        %v2334 = vsub.f32 %v2325, %v2333
        %v2335 = vmul.f32 %v2334, 1.442695
        %v2336 = vpow.pop %v2335
        %v2337 = vsel %vm2330, %v2336, 0.0
        %2338 = vadd.xlane.f32.xlu0 %v2337
        %v2339 = vpop.xlane.xlu0 %2338
        %v2340 = vrcp.pop %v2339
        %v2341 = vmul.f32 %v2336, %v2340
        %vm2342 = vcmask 105536
        %v2343 = vsel %vm2342, %v2325, -inf
        %2344 = vmax.xlane.f32.xlu0 %v2343
        %v2345 = vpop.xlane.xlu0 %2344
        %v2346 = vsub.f32 %v2325, %v2345
        %v2347 = vmul.f32 %v2346, 1.442695
        %v2348 = vpow.pop %v2347
        %2350 = vrot.lane.b32.xlu0 %v2348, 120
        %v2351 = vpop.permute.xlu0 %2350
        %v2353 = vsel %vm2330, %v2351, 0.0
        %2354 = vadd.xlane.f32.xlu0 %v2353
        %v2355 = vpop.xlane.xlu0 %2354
        %v2356 = vrcp.pop %v2355
        %v2357 = vmul.f32 %v2348, %v2356
        %vm2358 = vcmask 154752
        %v2359 = vsel %vm2358, %v2325, -inf
        %2360 = vmax.xlane.f32.xlu0 %v2359
        %v2361 = vpop.xlane.xlu0 %2360
        %v2362 = vsub.f32 %v2325, %v2361
        %v2363 = vmul.f32 %v2362, 1.442695
        %v2364 = vpow.pop %v2363
        %2366 = vrot.lane.b32.xlu0 %v2364, 112
        %v2367 = vpop.permute.xlu0 %2366
        %vm2369 = vcmask 23552
        %v2370 = vsel %vm2369, %v2367, 0.0
        %2371 = vadd.xlane.f32.xlu0 %v2370
        %v2372 = vpop.xlane.xlu0 %2371
        %v2373 = vrcp.pop %v2372
        %v2374 = vmul.f32 %v2364, %v2373
        %v2375 = vld [vmem:[%s9] sm:$0x1]
        %v2377 = vlaneseq
        %v2378 = vshrl.u32 %v2377, 7
        %v2379 = vsub.s32 0, %v2378
        %v2380 = vrot.slane %v2375, %v2379
        %v2382 = vmul.f32 %v2341, %v2380
        %v2383 = vsel %vm2330, %v2382, 0.0
        %2384 = vadd.xlane.f32.xlu0 %v2383
        %v2385 = vpop.xlane.xlu0 %2384
        %v2386 = vld [vmem:[%s10] sm:$0x1]
        %v2388 = vlaneseq
        %v2389 = vshrl.u32 %v2388, 7
        %v2390 = vsub.s32 0, %v2389
        %v2391 = vrot.slane %v2386, %v2390
        %2392 = vrot.lane.b32.xlu0 %v2391, 8
        %v2393 = vpop.permute.xlu0 %2392
        %v2395 = vmul.f32 %v2357, %v2393
        %2397 = vrot.lane.b32.xlu0 %v2395, 120
        %v2398 = vpop.permute.xlu0 %2397
        %v2400 = vsel %vm2330, %v2398, 0.0
        %2401 = vadd.xlane.f32.xlu0 %v2400
        %v2402 = vpop.xlane.xlu0 %2401
        %v2403 = vld [vmem:[%s11] sm:$0x1]
        %v2405 = vlaneseq
        %v2406 = vshrl.u32 %v2405, 7
        %v2407 = vsub.s32 0, %v2406
        %v2408 = vrot.slane %v2403, %v2407
        %2409 = vrot.lane.b32.xlu0 %v2408, 16
        %v2410 = vpop.permute.xlu0 %2409
        %v2412 = vmul.f32 %v2374, %v2410
        %2414 = vrot.lane.b32.xlu0 %v2412, 112
        %v2415 = vpop.permute.xlu0 %2414
        %v2417 = vsel %vm2369, %v2415, 0.0
        %2418 = vadd.xlane.f32.xlu0 %v2417
        %v2419 = vpop.xlane.xlu0 %2418
        %v2420 = vand.u32 2147483647, %v2325
        %vm2421 = vcmp.le.f32.partialorder %v2420, 0.7853982
        %vm2422 = vcmp.lt.s32.totalorder %v2325, 0
        %v2423 = vand.u32 %v2325, 2139095040
        %v2424 = vshrl.u32 %v2423, 23
        %v2425 = vsub.s32 %v2424, 127
        %v2426 = vand.u32 2147483647, %v2325
        %v2427 = vand.u32 %v2426, 8388607
        %v2428 = vor.u32 %v2427, 8388608
        %v2429 = vsub.s32 0, %v2428
        %v2430 = vadd.s32 %v2425, 1
        %vm2431 = vcmp.gt.s32.totalorder %v2430, 0
        %v2432 = vsel %vm2431, %v2430, 0
        %v2433 = vshrl.u32 %v2432, 5
        %v2434 = vand.u32 %v2432, 31
        %v2435 = vsub.s32 32, %v2434
        %v2436 = vshrl.u32 683565275, %v2435
        %v2437 = vshll.u32 683565275, %v2434
        %v2438 = vshrl.u32 2475754826, %v2435
        %v2439 = vor.u32 %v2437, %v2438
        %v2440 = vshll.u32 2475754826, %v2434
        %v2441 = vshrl.u32 2131351028, %v2435
        %v2442 = vor.u32 %v2440, %v2441
        %v2443 = vshll.u32 2131351028, %v2434
        %v2444 = vshrl.u32 2102212464, %v2435
        %v2445 = vor.u32 %v2443, %v2444
        %v2446 = vshll.u32 2102212464, %v2434
        %v2447 = vshrl.u32 920167782, %v2435
        %v2448 = vor.u32 %v2446, %v2447
        %v2449 = vshll.u32 920167782, %v2434
        %v2450 = vshrl.u32 1326507024, %v2435
        %v2451 = vor.u32 %v2449, %v2450
        %vm2452 = vcmp.lt.s32.totalorder %v2433, 1
        %vm2453 = vcmp.lt.s32.totalorder %v2433, 2
        %vm2454 = vcmp.lt.s32.totalorder %v2433, 3
        %vm2455 = vcmp.lt.s32.totalorder %v2433, 4
        %v2456 = vsel %vm2452, %v2436, %v2439
        %v2457 = vsel %vm2455, %v2445, 2102212464
        %v2458 = vsel %vm2454, %v2442, %v2457
        %v2459 = vsel %vm2453, %v2456, %v2458
        %v2460 = vsel %vm2452, %v2439, %v2442
        %v2461 = vsel %vm2455, %v2448, 920167782
        %v2462 = vsel %vm2454, %v2445, %v2461
        %v2463 = vsel %vm2453, %v2460, %v2462
        %v2464 = vsel %vm2452, %v2442, %v2445
        %v2465 = vsel %vm2455, %v2451, 1326507024
        %v2466 = vsel %vm2454, %v2448, %v2465
        %v2467 = vsel %vm2453, %v2464, %v2466
        %v2468 = vshll.u32 %v2428, 8
        %v2469 = vmul.u32.u64.compose %v2468, %v2467
        %v2470 = vextract.low.u32 %v2469
        %v2471 = vextract.high.u32 %v2469
        %v2472 = vmul.u32.u64.compose %v2468, %v2463
        %v2473 = vextract.low.u32 %v2472
        %v2474 = vextract.high.u32 %v2472
        %v2475 = vmul.u32 %v2468, %v2459
        %v2476 = vadd.s32 %v2471, %v2473
        %vm2477 = vc.u32 %v2471, %v2473
        %v2478 = vadd.s32 %v2474, 1
        %v2479 = vsel %vm2477, %v2478, %v2474
        %v2480 = vadd.s32 %v2475, %v2479
        %v2481 = vadd.s32 %v2480, 536870912
        %v2482 = vshrl.u32 %v2481, 30
        %v2483 = vshll.u32 %v2482, 30
        %v2484 = vsub.s32 %v2480, %v2483
        %vm2485 = vcmp.lt.s32.totalorder %v2484, 0
        %v2486 = vsub.s32 0, %v2484
        %v2487 = vsel %vm2485, %v2486, %v2484
        %v2488 = vclz %v2487
        %v2489 = vsub.s32 %v2488, 2
        %vm2490 = vcmp.gt.s32.totalorder 0, %v2489
        %v2491 = vsel %vm2490, 0, %v2489
        %v2492 = vsub.s32 32, %v2491
        %v2493 = vshll.u32 %v2484, %v2491
        %v2494 = vshrl.u32 %v2476, %v2492
        %v2495 = vor.u32 %v2493, %v2494
        %v2496 = vsub.s32 4294967266, %v2491
        %v2497 = vadd.s32 %v2496, 127
        %v2498 = vshll.u32 %v2497, 23
        %v2499 = vor.u32 4788187, %v2498
        %v2500 = vand.u32 2147483647, %v2499
        %v2502 = vcvt.s32.f32 %v2495
        %v2503 = vmul.f32 %v2502, %v2500
        %v2504 = vxor.u32 %v2503, 2147483648
        %v2505 = vsel %vm2422, %v2504, %v2503
        %v2506 = vsub.s32 4, %v2482
        %v2507 = vsel %vm2422, %v2506, %v2482
        %v2508 = vsel %vm2421, %v2325, %v2505
        %v2509 = vsel %vm2421, 0, %v2507
        %v2510 = vcosq.f32.pop %v2508
        %v2511 = vsinq.f32.pop %v2508
        %vm2512 = vweird.f32 %v2325
        %v2513 = vadd.s32 %v2509, 3
        %v2514 = vand.u32 %v2513, 3
        %vm2515 = vcmp.lt.s32.totalorder %v2514, 2
        %vm2516 = vcmp.eq.s32.totalorder %v2514, 0
        %v2517 = vxor.u32 %v2511, 2147483648
        %v2518 = vsel %vm2516, %v2510, %v2517
        %vm2519 = vcmp.eq.s32.totalorder %v2514, 2
        %v2520 = vxor.u32 %v2510, 2147483648
        %v2521 = vsel %vm2519, %v2520, %v2511
        %v2522 = vsel %vm2515, %v2518, %v2521
        %v2523 = vsel %vm2512, nan, %v2522
        %v2524 = vand.u32 2147483647, %v2325
        %vm2525 = vcmp.le.f32.partialorder %v2524, 0.7853982
        %vm2526 = vcmp.lt.s32.totalorder %v2325, 0
        %v2527 = vand.u32 %v2325, 2139095040
        %v2528 = vshrl.u32 %v2527, 23
        %v2529 = vsub.s32 %v2528, 127
        %v2530 = vand.u32 2147483647, %v2325
        %v2531 = vand.u32 %v2530, 8388607
        %v2532 = vor.u32 %v2531, 8388608
        %v2533 = vsub.s32 0, %v2532
        %v2534 = vadd.s32 %v2529, 1
        %vm2535 = vcmp.gt.s32.totalorder %v2534, 0
        %v2536 = vsel %vm2535, %v2534, 0
        %v2537 = vshrl.u32 %v2536, 5
        %v2538 = vand.u32 %v2536, 31
        %v2539 = vsub.s32 32, %v2538
        %v2540 = vshrl.u32 683565275, %v2539
        %v2541 = vshll.u32 683565275, %v2538
        %v2542 = vshrl.u32 2475754826, %v2539
        %v2543 = vor.u32 %v2541, %v2542
        %v2544 = vshll.u32 2475754826, %v2538
        %v2545 = vshrl.u32 2131351028, %v2539
        %v2546 = vor.u32 %v2544, %v2545
        %v2547 = vshll.u32 2131351028, %v2538
        %v2548 = vshrl.u32 2102212464, %v2539
        %v2549 = vor.u32 %v2547, %v2548
        %v2550 = vshll.u32 2102212464, %v2538
        %v2551 = vshrl.u32 920167782, %v2539
        %v2552 = vor.u32 %v2550, %v2551
        %v2553 = vshll.u32 920167782, %v2538
        %v2554 = vshrl.u32 1326507024, %v2539
        %v2555 = vor.u32 %v2553, %v2554
        %vm2556 = vcmp.lt.s32.totalorder %v2537, 1
        %vm2557 = vcmp.lt.s32.totalorder %v2537, 2
        %vm2558 = vcmp.lt.s32.totalorder %v2537, 3
        %vm2559 = vcmp.lt.s32.totalorder %v2537, 4
        %v2560 = vsel %vm2556, %v2540, %v2543
        %v2561 = vsel %vm2559, %v2549, 2102212464
        %v2562 = vsel %vm2558, %v2546, %v2561
        %v2563 = vsel %vm2557, %v2560, %v2562
        %v2564 = vsel %vm2556, %v2543, %v2546
        %v2565 = vsel %vm2559, %v2552, 920167782
        %v2566 = vsel %vm2558, %v2549, %v2565
        %v2567 = vsel %vm2557, %v2564, %v2566
        %v2568 = vsel %vm2556, %v2546, %v2549
        %v2569 = vsel %vm2559, %v2555, 1326507024
        %v2570 = vsel %vm2558, %v2552, %v2569
        %v2571 = vsel %vm2557, %v2568, %v2570
        %v2572 = vshll.u32 %v2532, 8
        %v2573 = vmul.u32.u64.compose %v2572, %v2571
        %v2574 = vextract.low.u32 %v2573
        %v2575 = vextract.high.u32 %v2573
        %v2576 = vmul.u32.u64.compose %v2572, %v2567
        %v2577 = vextract.low.u32 %v2576
        %v2578 = vextract.high.u32 %v2576
        %v2579 = vmul.u32 %v2572, %v2563
        %v2580 = vadd.s32 %v2575, %v2577
        %vm2581 = vc.u32 %v2575, %v2577
        %v2582 = vadd.s32 %v2578, 1
        %v2583 = vsel %vm2581, %v2582, %v2578
        %v2584 = vadd.s32 %v2579, %v2583
        %v2585 = vadd.s32 %v2584, 536870912
        %v2586 = vshrl.u32 %v2585, 30
        %v2587 = vshll.u32 %v2586, 30
        %v2588 = vsub.s32 %v2584, %v2587
        %vm2589 = vcmp.lt.s32.totalorder %v2588, 0
        %v2590 = vsub.s32 0, %v2588
        %v2591 = vsel %vm2589, %v2590, %v2588
        %v2592 = vclz %v2591
        %v2593 = vsub.s32 %v2592, 2
        %vm2594 = vcmp.gt.s32.totalorder 0, %v2593
        %v2595 = vsel %vm2594, 0, %v2593
        %v2596 = vsub.s32 32, %v2595
        %v2597 = vshll.u32 %v2588, %v2595
        %v2598 = vshrl.u32 %v2580, %v2596
        %v2599 = vor.u32 %v2597, %v2598
        %v2600 = vsub.s32 4294967266, %v2595
        %v2601 = vadd.s32 %v2600, 127
        %v2602 = vshll.u32 %v2601, 23
        %v2603 = vor.u32 4788187, %v2602
        %v2604 = vand.u32 2147483647, %v2603
        %v2606 = vcvt.s32.f32 %v2599
        %v2607 = vmul.f32 %v2606, %v2604
        %v2608 = vxor.u32 %v2607, 2147483648
        %v2609 = vsel %vm2526, %v2608, %v2607
        %v2610 = vsub.s32 4, %v2586
        %v2611 = vsel %vm2526, %v2610, %v2586
        %v2612 = vsel %vm2525, %v2325, %v2609
        %v2613 = vsel %vm2525, 0, %v2611
        %v2614 = vcosq.f32.pop %v2612
        %v2615 = vsinq.f32.pop %v2612
        %vm2616 = vweird.f32 %v2325
        %v2617 = vand.u32 %v2613, 3
        %vm2618 = vcmp.lt.s32.totalorder %v2617, 2
        %vm2619 = vcmp.eq.s32.totalorder %v2617, 0
        %v2620 = vxor.u32 %v2615, 2147483648
        %v2621 = vsel %vm2619, %v2614, %v2620
        %vm2622 = vcmp.eq.s32.totalorder %v2617, 2
        %v2623 = vxor.u32 %v2614, 2147483648
        %v2624 = vsel %vm2622, %v2623, %v2615
        %v2625 = vsel %vm2618, %v2621, %v2624
        %v2626 = vsel %vm2616, nan, %v2625
        %v2627 = vmul.f32 %v2385, %v2626
        %v2628 = vsub.f32 %v2523, %v2627
        %v2629 = vmul.f32 %v2628, %v2419
        %2631 = vrot.lane.b32.xlu0 %v2325, 120
        %v2632 = vpop.permute.xlu0 %2631
        %v2634 = vmul.f32 %v2629, %v2632
        %v2635 = vmul.f32 %v2634, %v2402
        %2636 = vst.msk [vmem:[%s444] sm:$0xff] %vm543, 0.0
        %2638 = vrot.lane.b32.xlu0 %v2635, 104
        %v2639 = vpop.permute.xlu0 %2638
        %vm2641 = vcmask 7168
        %2642 = vst.msk [vmem:[%s444] sm:$0xff] %vm2641, %v2639
        %2643 = vrot.lane.b32.xlu0 %v2325, 105
        %v2644 = vpop.permute.xlu0 %2643
        %vm2646 = vcmask 15368
        %2647 = vst.msk [vmem:[%s444] sm:$0xff] %vm2646, %v2644
        %2648 = vrot.lane.b32.xlu0 %v2325, 98
        %v2649 = vpop.permute.xlu0 %2648
        %vm2651 = vcmask 23568
        %2652 = vst.msk [vmem:[%s444] sm:$0xff] %vm2651, %v2649
        %2654 = vrot.lane.b32.xlu0 %v2341, 3
        %v2655 = vpop.permute.xlu0 %2654
        %vm2657 = vcmask 64536
        %2658 = vst.msk [vmem:[%s444] sm:$0xff] %vm2657, %v2655
        %2659 = vst.msk [vmem:[%s444] sm:$0xff] %vm2342, %v2357
        %2661 = vrot.lane.b32.xlu0 %v2374, 125
        %v2662 = vpop.permute.xlu0 %2661
        %vm2664 = vcmask 130152
        %2665 = vst.msk [vmem:[%s444] sm:$0xff] %vm2664, %v2662
        %vm2666 = vcmask 138368
        %2667 = vst.msk [vmem:[%s444] sm:$0xff] %vm2666, %v2385
        %vm2668 = vcmask 146568
        %2669 = vst.msk [vmem:[%s444] sm:$0xff] %vm2668, %v2402
        %vm2670 = vcmask 154768
        %2671 = vst.msk [vmem:[%s444] sm:$0xff] %vm2670, %v2419
        %s2672 = sand.u32 %s293, 1
        %s2673 = scalar_lea.sflag [#allocation5], %s2672
        %s2674 = sand.u32 %s293, 1
        %s2675 = smul.addr %s2674, 8
        %s2676 = scalar_lea.vmem [#allocation9], %s2675
        // Predicated region
        $region81: #{tpu_custom_call.1} parent=67 // pred_check
          %p2677 = pneg %p303
        $region82: #{tpu_custom_call.1} parent=67 // pred_check_branch
          %2679 = sbr.rel (%p2677) target = $region84
        $region83: #{tpu_custom_call.1} parent=67 // pred_region
          %s2681 = ssub.s32 128, 128
          %2682 = vsyncadd %s2673, %s2681
          %s2683 = smul.addr %s28, 128
          %s2684 = scalar_lea.hbm %s12, %s2683
          %s2686 = sshll.u32 %s2676, 4
          %s2687 = int_to_ptr.vmem [resolvable:$true] %s2686
          %2689 = dma.vmem_to_hbm [thread:$0]  %s2687, 128, %s2684, %s2673
        $region84: #{tpu_custom_call.1} parent=67 // pred_fallthru
          _
      $region68: #{tpu_custom_call.1} parent=5 // pred_fallthru
        _
      %p2690 = scmp.le.s32.totalorder 2, %s23
      // Predicated region
      $region85: #{tpu_custom_call.1} parent=5 // pred_check
        %p2691 = pneg %p2690
      $region86: #{tpu_custom_call.1} parent=5 // pred_check_branch
        %2693 = sbr.rel (%p2691) target = $region88
      $region87: #{tpu_custom_call.1} parent=5 // pred_region
        %s2694 = ssub.s32 %s23, 2
        // Predicated region
        $region89: #{tpu_custom_call.1} parent=87 // pred_check
          %p2695 = pneg %p309
        $region90: #{tpu_custom_call.1} parent=87 // pred_check_branch
          %2697 = sbr.rel (%p2695) target = $region92
        $region91: #{tpu_custom_call.1} parent=87 // pred_region
          %s2698 = sand.u32 %s294, 1
          %s2699 = scalar_lea.sflag [#allocation5], %s2698
          %s2700 = sand.u32 %s294, 1
          %s2701 = smul.addr %s2700, 8
          %s2702 = scalar_lea.vmem [#allocation9], %s2701
          %2703 = dma.done %s2699, 128
        $region92: #{tpu_custom_call.1} parent=87 // pred_fallthru
          _
      $region88: #{tpu_custom_call.1} parent=5 // pred_fallthru
        _
    $region6: #{tpu_custom_call.1} parent=1 // loop_footer
      %s27 = sadd.s32 1, %s23
    $region7: #{tpu_custom_call.1} parent=1 // loop_footer_branch
      %22 = sbr.rel target = $region3
    $region8: #{tpu_custom_call.1} parent=1 // loop_exit
      _
    %2704 = vsyncpa [#allocation4], 1
    %s2705 = scalar_lea.sflag [#allocation4], 1
    %2706 = vsyncpa %s2705, 1
    %2707 = vsyncpa [#allocation7], 1
    %2708 = vsyncpa [#allocation5], 1
    %s2709 = scalar_lea.sflag [#allocation5], 1
    %2710 = vsyncpa %s2709, 1

</llo_original>
